<compile_context>
chip_gen: v7x
topology: tpu7x:2x2x1
jax: 0.10.0
libtpu: 0.0.40
codegen_flags: <defaults>
</compile_context>

<pallas_src>
import functools

import numpy as np

import jax
import jax.numpy as jnp
from jax import lax
from jax.experimental import pallas as pl
from jax.experimental.pallas import tpu as pltpu


# ------------------------------ fused kernel -------------------------------

def _dueling_fused_kernel(x_ref, w1_ref, b1_ref, sel_ref, w2_ref, b2_ref,
                          wh_ref, bh_ref, whd_ref, bhd_ref, o_ref,
                          *, oh1, ow1, num_actions):
    f32 = jnp.float32

    # ---- conv1 (8x8, stride 4) as 4 shifted sub-block matmuls (in-kernel) ----
    # x_ref block: (1, H/4, W/4, 4*4*C); sub-block (a,b) selects the 4x4 input
    # blocks whose flattened (r, s, ic) taps hit kernel rows 4a..4a+3 / cols
    # 4b..4b+3.  Row order of c1 is (i, j) = i*ow1 + j (conv1 output position).
    c1 = jnp.zeros((oh1 * ow1, 16), dtype=f32)
    for a in (0, 1):
        for b in (0, 1):
            lhs = x_ref[0, pl.ds(a, oh1), pl.ds(b, ow1), :]     # (oh1, ow1, 16C)
            lhs = lhs.reshape(oh1 * ow1, lhs.shape[-1])         # aligned merge
            c1 = c1 + jnp.dot(lhs, w1_ref[2 * a + b],
                              preferred_element_type=f32)
    c1 = c1 + b1_ref[...]                                       # (oh1*ow1, 16)

    # ---- 2x2 max-pool #1 + conv2 patch-row gather via 4 selection matmuls ----
    # sel[k] (64, oh1*ow1) picks, for every (conv2 tap t, conv2 position p),
    # the conv1 row contributed by pooling-window corner k; max over k == pool.
    g0 = jnp.dot(sel_ref[0], c1, preferred_element_type=f32)
    g1 = jnp.dot(sel_ref[1], c1, preferred_element_type=f32)
    g2 = jnp.dot(sel_ref[2], c1, preferred_element_type=f32)
    g3 = jnp.dot(sel_ref[3], c1, preferred_element_type=f32)
    p2 = jnp.maximum(jnp.maximum(g0, g1), jnp.maximum(g2, g3))  # (64, 16)

    # ---- conv2 (4x4, stride 2): 16 per-tap matmuls over the 4 positions ----
    acc2 = jnp.zeros((4, 32), dtype=f32)
    for t in range(16):
        acc2 = acc2 + jnp.dot(p2[4 * t:4 * t + 4, :], w2_ref[t],
                              preferred_element_type=f32)
    acc2 = acc2 + b2_ref[...]                                   # (4, 32)

    # ---- 2x2 max-pool #2 -> 1x1 spatial == flattened feature row ----
    feat = jnp.maximum(jnp.maximum(acc2[0:1, :], acc2[1:2, :]),
                       jnp.maximum(acc2[2:3, :], acc2[3:4, :]))  # (1, 32)

    # ---- hidden Linear + ReLU ----
    h = jnp.dot(feat, wh_ref[...], preferred_element_type=f32) + bh_ref[...]
    h = jnp.maximum(h, 0.0)                                     # (1, 256)

    # ---- dueling head: adv and val fused into one (256, A+1) matmul ----
    z = jnp.dot(h, whd_ref[...], preferred_element_type=f32) + bhd_ref[...]
    adv = z[:, :num_actions]                                    # (1, A)
    val = z[:, num_actions:num_actions + 1]                     # (1, 1)
    adv_mean = jnp.sum(adv, axis=1, keepdims=True) * (1.0 / num_actions)
    o_ref[0] = val + adv - adv_mean                             # (1, A)


# --------------------------- one-time weight prep ---------------------------

def prepack_params(params, inputs_shape, num_actions):
    """Repack PyTorch-layout weights once into the layouts the kernel wants."""
    C, H, W = inputs_shape
    oh1 = (H - 8) // 4 + 1
    ow1 = (W - 8) // 4 + 1
    ph1, pw1 = oh1 // 2, ow1 // 2
    oh2 = (ph1 - 4) // 2 + 1
    ow2 = (pw1 - 4) // 2 + 1
    # structural assumptions baked into the fused kernel
    assert H % 4 == 0 and W % 4 == 0
    assert oh1 % 2 == 0 and ow1 % 8 == 0          # sublane-aligned in-kernel merge
    assert ph1 >= 6 and pw1 >= 6
    assert oh2 >= 2 and ow2 >= 2 and oh2 // 2 == 1 and ow2 // 2 == 1  # pool2 -> 1x1

    # conv1 weights (16, C, 8, 8) -> 4 sub-block matrices (4, 4*4*C, 16),
    # column order (r, s, ic) matching the pre-blocked input's last dim.
    w1 = jnp.transpose(params["conv1_w"], (2, 3, 1, 0))          # (kh, kw, ic, oc)
    w1 = w1.reshape(2, 4, 2, 4, C, 16)                           # (a, r, b, s, ic, oc)
    w1 = jnp.transpose(w1, (0, 2, 1, 3, 4, 5)).reshape(4, 16 * C, 16)
    b1 = params["conv1_b"].reshape(1, 16)

    # conv2 weights (32, 16, 4, 4) -> per-tap (16, 16, 32), tap t = 4*di + dj.
    w2 = jnp.transpose(params["conv2_w"], (2, 3, 1, 0)).reshape(16, 16, 32)
    b2 = params["conv2_b"].reshape(1, 32)

    # hidden / dueling head (value weights folded into the advantage matmul)
    wh = params["hidden_w"].T                                    # (feat, 256)
    bh = params["hidden_b"].reshape(1, 256)
    w_head = jnp.concatenate([params["adv_w"].T, params["val_w"].T], axis=1)
    b_head = jnp.concatenate([params["adv_b"], params["val_b"]]
                             ).reshape(1, num_actions + 1)

    # pool1 + conv2-patch-gather selection matrices: (4, 64, oh1*ow1).
    #   row rho = 4*t + p ; t = 4*di + dj (conv2 tap), p = 2*oi + oj (position)
    #   col r1  = ow1*ii + jj ; ii = 2*(2*oi+di)+dy , jj = 2*(2*oj+dj)+dx
    sel = np.zeros((4, 64, oh1 * ow1), dtype=np.float32)
    for dy in range(2):
        for dx in range(2):
            k = 2 * dy + dx
            for di in range(4):
                for dj in range(4):
                    t = 4 * di + dj
                    for oi in range(2):
                        for oj in range(2):
                            p = 2 * oi + oj
                            ii = 2 * (2 * oi + di) + dy
                            jj = 2 * (2 * oj + dj) + dx
                            sel[k, 4 * t + p, ow1 * ii + jj] = 1.0

    return dict(w1=w1, b1=b1, sel=jnp.asarray(sel), w2=w2, b2=b2,
                wh=wh, bh=bh, w_head=w_head, b_head=b_head)


# ------------------------------ forward wrapper -----------------------------

def _prep_input(x_nchw):
    """NCHW -> blocked (B, H/4, W/4, 4*4*C); pure layout plumbing, no inflation."""
    B, C, H, W = x_nchw.shape
    x = jnp.transpose(x_nchw, (0, 2, 3, 1))                      # NHWC
    x = x.reshape(B, H // 4, 4, W // 4, 4, C)                    # (B, I, r, J, s, c)
    x = jnp.transpose(x, (0, 1, 3, 2, 4, 5)).reshape(B, H // 4, W // 4, 16 * C)
    return x


def dueling_net_forward(prepacked, x_nchw):
    B, C, H, W = x_nchw.shape
    A = prepacked["w_head"].shape[1] - 1
    oh1 = (H - 8) // 4 + 1
    ow1 = (W - 8) // 4 + 1

    xblk = _prep_input(x_nchw)                                   # (B, H/4, W/4, 16C)
    Hb, Wb, KC = xblk.shape[1:]
    p = prepacked

    kernel = functools.partial(_dueling_fused_kernel,
                               oh1=oh1, ow1=ow1, num_actions=A)
    out = pl.pallas_call(
        kernel,
        out_shape=jax.ShapeDtypeStruct((B, 1, A), jnp.float32),
        grid=(B,),
        in_specs=[
            pl.BlockSpec((1, Hb, Wb, KC), lambda i: (i, 0, 0, 0)),
            pl.BlockSpec(p["w1"].shape, lambda i: (0, 0, 0)),
            pl.BlockSpec(p["b1"].shape, lambda i: (0, 0)),
            pl.BlockSpec(p["sel"].shape, lambda i: (0, 0, 0)),
            pl.BlockSpec(p["w2"].shape, lambda i: (0, 0, 0)),
            pl.BlockSpec(p["b2"].shape, lambda i: (0, 0)),
            pl.BlockSpec(p["wh"].shape, lambda i: (0, 0)),
            pl.BlockSpec(p["bh"].shape, lambda i: (0, 0)),
            pl.BlockSpec(p["w_head"].shape, lambda i: (0, 0)),
            pl.BlockSpec(p["b_head"].shape, lambda i: (0, 0)),
        ],
        out_specs=pl.BlockSpec((1, 1, A), lambda i: (i, 0, 0)),
        compiler_params=pltpu.CompilerParams(
            dimension_semantics=("parallel",),
            vmem_limit_bytes=32 * 1024 * 1024),
    )(xblk, p["w1"], p["b1"], p["sel"], p["w2"], p["b2"],
      p["wh"], p["bh"], p["w_head"], p["b_head"])
    return out.reshape(B, A)


# --------------------------- params & pure-JAX ref ---------------------------

def _conv_out(h, k, s):
    return (h - k) // s + 1


def features_size(inputs_shape):
    _, H, W = inputs_shape
    h, w = _conv_out(H, 8, 4), _conv_out(W, 8, 4)
    h, w = h // 2, w // 2
    h, w = _conv_out(h, 4, 2), _conv_out(w, 4, 2)
    h, w = h // 2, w // 2
    return 32 * h * w


def init_params(key, inputs_shape, num_actions):
    feat = features_size(inputs_shape)
    C = inputs_shape[0]
    ks = jax.random.split(key, 10)

    def rnd(k, shape, scale=0.05):
        return scale * jax.random.normal(k, shape, dtype=jnp.float32)

    return dict(
        conv1_w=rnd(ks[0], (16, C, 8, 8)),
        conv1_b=rnd(ks[1], (16,)),
        conv2_w=rnd(ks[2], (32, 16, 4, 4)),
        conv2_b=rnd(ks[3], (32,)),
        hidden_w=rnd(ks[4], (256, feat)),        # PyTorch Linear layout (out, in)
        hidden_b=rnd(ks[5], (256,)),
        adv_w=rnd(ks[6], (num_actions, 256)),
        adv_b=rnd(ks[7], (num_actions,)),
        val_w=rnd(ks[8], (1, 256)),
        val_b=rnd(ks[9], (1,)),
    )


def reference_forward(params, x_nchw):
    dn = ("NCHW", "OIHW", "NCHW")
    y = lax.conv_general_dilated(x_nchw, params["conv1_w"], (4, 4), "VALID",
                                 dimension_numbers=dn,
                                 precision=lax.Precision.HIGHEST)
    y = y + params["conv1_b"][None, :, None, None]
    y = lax.reduce_window(y, -jnp.inf, lax.max, (1, 1, 2, 2), (1, 1, 2, 2), "VALID")
    y = lax.conv_general_dilated(y, params["conv2_w"], (2, 2), "VALID",
                                 dimension_numbers=dn,
                                 precision=lax.Precision.HIGHEST)
    y = y + params["conv2_b"][None, :, None, None]
    y = lax.reduce_window(y, -jnp.inf, lax.max, (1, 1, 2, 2), (1, 1, 2, 2), "VALID")
    feat = y.reshape(y.shape[0], -1)
    h = jnp.maximum(feat @ params["hidden_w"].T + params["hidden_b"], 0.0)
    adv = h @ params["adv_w"].T + params["adv_b"]
    val = h @ params["val_w"].T + params["val_b"]
    return val + adv - adv.mean(axis=1, keepdims=True)


# ---------------------------------- main ------------------------------------

if __name__ == "__main__":
    # H = W = 68 keeps the conv/pool stack valid and gives an aligned conv1
    # output (16x16) and a 1x1 map after the second pool (feature size 32).
    inputs_shape = (4, 68, 68)
    num_actions = 6
    batch = 2

    key = jax.random.PRNGKey(0)
    k_params, k_x = jax.random.split(key)
    params = init_params(k_params, inputs_shape, num_actions)
    x = jax.random.normal(k_x, (batch,) + inputs_shape, dtype=jnp.float32)

    prepacked = prepack_params(params, inputs_shape, num_actions)  # one-time prepack
    fwd = jax.jit(dueling_net_forward)

    out = jax.block_until_ready(fwd(prepacked, x))
    ref = jax.block_until_ready(reference_forward(params, x))

    assert out.shape == (batch, num_actions), out.shape
    assert jnp.all(jnp.isfinite(out))
    assert jnp.allclose(out, ref, atol=1e-2, rtol=1e-2), (
        f"max abs diff {jnp.max(jnp.abs(out - ref))}")

    print("KERNEL_OK")
</pallas_src>

<mosaic_0001>
module attributes {stable_mosaic.version = 11 : i64} {
  func.func @_dueling_fused_kernel(%arg0: i32, %arg1: memref<1x17x17x64xf32, #tpu.memory_space<vmem>>, %arg2: memref<4x64x16xf32, #tpu.memory_space<vmem>>, %arg3: memref<1x16xf32, #tpu.memory_space<vmem>>, %arg4: memref<4x64x256xf32, #tpu.memory_space<vmem>>, %arg5: memref<16x16x32xf32, #tpu.memory_space<vmem>>, %arg6: memref<1x32xf32, #tpu.memory_space<vmem>>, %arg7: memref<32x256xf32, #tpu.memory_space<vmem>>, %arg8: memref<1x256xf32, #tpu.memory_space<vmem>>, %arg9: memref<256x7xf32, #tpu.memory_space<vmem>>, %arg10: memref<1x7xf32, #tpu.memory_space<vmem>>, %arg11: memref<1x1x6xf32, #tpu.memory_space<vmem>>) attributes {dimension_semantics = [#tpu.dimension_semantics<parallel>], iteration_bounds = array<i64: 2>, scalar_prefetch = 0 : i64, scratch_operands = 0 : i64, tpu.core_type = #tpu.core_type<tc>, window_params = [{transform_indices = @transform_0, window_bounds = array<i64: 1, 17, 17, 64>}, {pipeline_mode = #tpu.pipeline_mode<synchronous>, transform_indices = @transform_1, window_bounds = array<i64: 4, 64, 16>}, {pipeline_mode = #tpu.pipeline_mode<synchronous>, transform_indices = @transform_2, window_bounds = array<i64: 1, 16>}, {pipeline_mode = #tpu.pipeline_mode<synchronous>, transform_indices = @transform_3, window_bounds = array<i64: 4, 64, 256>}, {pipeline_mode = #tpu.pipeline_mode<synchronous>, transform_indices = @transform_4, window_bounds = array<i64: 16, 16, 32>}, {pipeline_mode = #tpu.pipeline_mode<synchronous>, transform_indices = @transform_5, window_bounds = array<i64: 1, 32>}, {pipeline_mode = #tpu.pipeline_mode<synchronous>, transform_indices = @transform_6, window_bounds = array<i64: 32, 256>}, {pipeline_mode = #tpu.pipeline_mode<synchronous>, transform_indices = @transform_7, window_bounds = array<i64: 1, 256>}, {pipeline_mode = #tpu.pipeline_mode<synchronous>, transform_indices = @transform_8, window_bounds = array<i64: 256, 7>}, {pipeline_mode = #tpu.pipeline_mode<synchronous>, transform_indices = @transform_9, window_bounds = array<i64: 1, 7>}, {transform_indices = @transform_10, window_bounds = array<i64: 1, 1, 6>}]} {
    %cst = arith.constant 0.000000e+00 : f32
    %0 = vector.broadcast %cst : f32 to vector<256x16xf32>
    %c0 = arith.constant 0 : index
    %c0_0 = arith.constant 0 : index
    %c0_1 = arith.constant 0 : index
    %c0_2 = arith.constant 0 : index
    %1 = vector.load %arg1[%c0, %c0_0, %c0_1, %c0_2] : memref<1x17x17x64xf32, #tpu.memory_space<vmem>>, vector<1x16x16x64xf32>
    %2 = vector.shape_cast %1 : vector<1x16x16x64xf32> to vector<16x16x64xf32>
    %3 = vector.shape_cast %2 : vector<16x16x64xf32> to vector<256x64xf32>
    %c0_3 = arith.constant 0 : index
    %c0_4 = arith.constant 0 : index
    %c0_5 = arith.constant 0 : index
    %4 = vector.load %arg2[%c0_3, %c0_4, %c0_5] : memref<4x64x16xf32, #tpu.memory_space<vmem>>, vector<1x64x16xf32>
    %5 = vector.shape_cast %4 : vector<1x64x16xf32> to vector<64x16xf32>
    %cst_6 = arith.constant dense<0.000000e+00> : vector<256x16xf32>
    %6 = tpu.matmul %3, %5, %cst_6 {dimension_numbers = #tpu.dot_dimension_numbers<[1], [0], [0], [1], [0, 0, 1, 1], [], []>} : vector<256x64xf32>, vector<64x16xf32>, vector<256x16xf32> -> vector<256x16xf32>
    %7 = arith.addf %0, %6 : vector<256x16xf32>
    %c0_7 = arith.constant 0 : index
    %c0_8 = arith.constant 0 : index
    %c1 = arith.constant 1 : index
    %c0_9 = arith.constant 0 : index
    %8 = vector.load %arg1[%c0_7, %c0_8, %c1, %c0_9] : memref<1x17x17x64xf32, #tpu.memory_space<vmem>>, vector<1x16x16x64xf32>
    %9 = vector.shape_cast %8 : vector<1x16x16x64xf32> to vector<16x16x64xf32>
    %10 = vector.shape_cast %9 : vector<16x16x64xf32> to vector<256x64xf32>
    %c1_10 = arith.constant 1 : index
    %c0_11 = arith.constant 0 : index
    %c0_12 = arith.constant 0 : index
    %11 = vector.load %arg2[%c1_10, %c0_11, %c0_12] : memref<4x64x16xf32, #tpu.memory_space<vmem>>, vector<1x64x16xf32>
    %12 = vector.shape_cast %11 : vector<1x64x16xf32> to vector<64x16xf32>
    %cst_13 = arith.constant dense<0.000000e+00> : vector<256x16xf32>
    %13 = tpu.matmul %10, %12, %cst_13 {dimension_numbers = #tpu.dot_dimension_numbers<[1], [0], [0], [1], [0, 0, 1, 1], [], []>} : vector<256x64xf32>, vector<64x16xf32>, vector<256x16xf32> -> vector<256x16xf32>
    %14 = arith.addf %7, %13 : vector<256x16xf32>
    %c0_14 = arith.constant 0 : index
    %c1_15 = arith.constant 1 : index
    %c0_16 = arith.constant 0 : index
    %c0_17 = arith.constant 0 : index
    %15 = vector.load %arg1[%c0_14, %c1_15, %c0_16, %c0_17] : memref<1x17x17x64xf32, #tpu.memory_space<vmem>>, vector<1x16x16x64xf32>
    %16 = vector.shape_cast %15 : vector<1x16x16x64xf32> to vector<16x16x64xf32>
    %17 = vector.shape_cast %16 : vector<16x16x64xf32> to vector<256x64xf32>
    %c2 = arith.constant 2 : index
    %c0_18 = arith.constant 0 : index
    %c0_19 = arith.constant 0 : index
    %18 = vector.load %arg2[%c2, %c0_18, %c0_19] : memref<4x64x16xf32, #tpu.memory_space<vmem>>, vector<1x64x16xf32>
    %19 = vector.shape_cast %18 : vector<1x64x16xf32> to vector<64x16xf32>
    %cst_20 = arith.constant dense<0.000000e+00> : vector<256x16xf32>
    %20 = tpu.matmul %17, %19, %cst_20 {dimension_numbers = #tpu.dot_dimension_numbers<[1], [0], [0], [1], [0, 0, 1, 1], [], []>} : vector<256x64xf32>, vector<64x16xf32>, vector<256x16xf32> -> vector<256x16xf32>
    %21 = arith.addf %14, %20 : vector<256x16xf32>
    %c0_21 = arith.constant 0 : index
    %c1_22 = arith.constant 1 : index
    %c1_23 = arith.constant 1 : index
    %c0_24 = arith.constant 0 : index
    %22 = vector.load %arg1[%c0_21, %c1_22, %c1_23, %c0_24] : memref<1x17x17x64xf32, #tpu.memory_space<vmem>>, vector<1x16x16x64xf32>
    %23 = vector.shape_cast %22 : vector<1x16x16x64xf32> to vector<16x16x64xf32>
    %24 = vector.shape_cast %23 : vector<16x16x64xf32> to vector<256x64xf32>
    %c3 = arith.constant 3 : index
    %c0_25 = arith.constant 0 : index
    %c0_26 = arith.constant 0 : index
    %25 = vector.load %arg2[%c3, %c0_25, %c0_26] : memref<4x64x16xf32, #tpu.memory_space<vmem>>, vector<1x64x16xf32>
    %26 = vector.shape_cast %25 : vector<1x64x16xf32> to vector<64x16xf32>
    %cst_27 = arith.constant dense<0.000000e+00> : vector<256x16xf32>
    %27 = tpu.matmul %24, %26, %cst_27 {dimension_numbers = #tpu.dot_dimension_numbers<[1], [0], [0], [1], [0, 0, 1, 1], [], []>} : vector<256x64xf32>, vector<64x16xf32>, vector<256x16xf32> -> vector<256x16xf32>
    %28 = arith.addf %21, %27 : vector<256x16xf32>
    %c0_28 = arith.constant 0 : index
    %c0_29 = arith.constant 0 : index
    %29 = vector.load %arg3[%c0_28, %c0_29] : memref<1x16xf32, #tpu.memory_space<vmem>>, vector<1x16xf32>
    %30 = vector.broadcast %29 : vector<1x16xf32> to vector<256x16xf32>
    %31 = arith.addf %28, %30 : vector<256x16xf32>
    %c0_30 = arith.constant 0 : index
    %c0_31 = arith.constant 0 : index
    %c0_32 = arith.constant 0 : index
    %32 = vector.load %arg4[%c0_30, %c0_31, %c0_32] : memref<4x64x256xf32, #tpu.memory_space<vmem>>, vector<1x64x256xf32>
    %33 = vector.shape_cast %32 : vector<1x64x256xf32> to vector<64x256xf32>
    %cst_33 = arith.constant dense<0.000000e+00> : vector<64x16xf32>
    %34 = tpu.matmul %33, %31, %cst_33 {dimension_numbers = #tpu.dot_dimension_numbers<[1], [0], [0], [1], [0, 0, 1, 1], [], []>} : vector<64x256xf32>, vector<256x16xf32>, vector<64x16xf32> -> vector<64x16xf32>
    %c1_34 = arith.constant 1 : index
    %c0_35 = arith.constant 0 : index
    %c0_36 = arith.constant 0 : index
    %35 = vector.load %arg4[%c1_34, %c0_35, %c0_36] : memref<4x64x256xf32, #tpu.memory_space<vmem>>, vector<1x64x256xf32>
    %36 = vector.shape_cast %35 : vector<1x64x256xf32> to vector<64x256xf32>
    %cst_37 = arith.constant dense<0.000000e+00> : vector<64x16xf32>
    %37 = tpu.matmul %36, %31, %cst_37 {dimension_numbers = #tpu.dot_dimension_numbers<[1], [0], [0], [1], [0, 0, 1, 1], [], []>} : vector<64x256xf32>, vector<256x16xf32>, vector<64x16xf32> -> vector<64x16xf32>
    %c2_38 = arith.constant 2 : index
    %c0_39 = arith.constant 0 : index
    %c0_40 = arith.constant 0 : index
    %38 = vector.load %arg4[%c2_38, %c0_39, %c0_40] : memref<4x64x256xf32, #tpu.memory_space<vmem>>, vector<1x64x256xf32>
    %39 = vector.shape_cast %38 : vector<1x64x256xf32> to vector<64x256xf32>
    %cst_41 = arith.constant dense<0.000000e+00> : vector<64x16xf32>
    %40 = tpu.matmul %39, %31, %cst_41 {dimension_numbers = #tpu.dot_dimension_numbers<[1], [0], [0], [1], [0, 0, 1, 1], [], []>} : vector<64x256xf32>, vector<256x16xf32>, vector<64x16xf32> -> vector<64x16xf32>
    %c3_42 = arith.constant 3 : index
    %c0_43 = arith.constant 0 : index
    %c0_44 = arith.constant 0 : index
    %41 = vector.load %arg4[%c3_42, %c0_43, %c0_44] : memref<4x64x256xf32, #tpu.memory_space<vmem>>, vector<1x64x256xf32>
    %42 = vector.shape_cast %41 : vector<1x64x256xf32> to vector<64x256xf32>
    %cst_45 = arith.constant dense<0.000000e+00> : vector<64x16xf32>
    %43 = tpu.matmul %42, %31, %cst_45 {dimension_numbers = #tpu.dot_dimension_numbers<[1], [0], [0], [1], [0, 0, 1, 1], [], []>} : vector<64x256xf32>, vector<256x16xf32>, vector<64x16xf32> -> vector<64x16xf32>
    %44 = arith.maximumf %34, %37 : vector<64x16xf32>
    %45 = arith.maximumf %40, %43 : vector<64x16xf32>
    %46 = arith.maximumf %44, %45 : vector<64x16xf32>
    %cst_46 = arith.constant 0.000000e+00 : f32
    %47 = vector.broadcast %cst_46 : f32 to vector<4x32xf32>
    %48 = vector.extract_strided_slice %46 {offsets = [0, 0], sizes = [4, 16], strides = [1, 1]} : vector<64x16xf32> to vector<4x16xf32>
    %c0_47 = arith.constant 0 : index
    %c0_48 = arith.constant 0 : index
    %c0_49 = arith.constant 0 : index
    %49 = vector.load %arg5[%c0_47, %c0_48, %c0_49] : memref<16x16x32xf32, #tpu.memory_space<vmem>>, vector<1x16x32xf32>
    %50 = vector.shape_cast %49 : vector<1x16x32xf32> to vector<16x32xf32>
    %cst_50 = arith.constant dense<0.000000e+00> : vector<4x32xf32>
    %51 = tpu.matmul %48, %50, %cst_50 {dimension_numbers = #tpu.dot_dimension_numbers<[1], [0], [0], [1], [0, 0, 1, 1], [], []>} : vector<4x16xf32>, vector<16x32xf32>, vector<4x32xf32> -> vector<4x32xf32>
    %52 = arith.addf %47, %51 : vector<4x32xf32>
    %53 = vector.extract_strided_slice %46 {offsets = [4, 0], sizes = [4, 16], strides = [1, 1]} : vector<64x16xf32> to vector<4x16xf32>
    %c1_51 = arith.constant 1 : index
    %c0_52 = arith.constant 0 : index
    %c0_53 = arith.constant 0 : index
    %54 = vector.load %arg5[%c1_51, %c0_52, %c0_53] : memref<16x16x32xf32, #tpu.memory_space<vmem>>, vector<1x16x32xf32>
    %55 = vector.shape_cast %54 : vector<1x16x32xf32> to vector<16x32xf32>
    %cst_54 = arith.constant dense<0.000000e+00> : vector<4x32xf32>
    %56 = tpu.matmul %53, %55, %cst_54 {dimension_numbers = #tpu.dot_dimension_numbers<[1], [0], [0], [1], [0, 0, 1, 1], [], []>} : vector<4x16xf32>, vector<16x32xf32>, vector<4x32xf32> -> vector<4x32xf32>
    %57 = arith.addf %52, %56 : vector<4x32xf32>
    %58 = vector.extract_strided_slice %46 {offsets = [8, 0], sizes = [4, 16], strides = [1, 1]} : vector<64x16xf32> to vector<4x16xf32>
    %c2_55 = arith.constant 2 : index
    %c0_56 = arith.constant 0 : index
    %c0_57 = arith.constant 0 : index
    %59 = vector.load %arg5[%c2_55, %c0_56, %c0_57] : memref<16x16x32xf32, #tpu.memory_space<vmem>>, vector<1x16x32xf32>
    %60 = vector.shape_cast %59 : vector<1x16x32xf32> to vector<16x32xf32>
    %cst_58 = arith.constant dense<0.000000e+00> : vector<4x32xf32>
    %61 = tpu.matmul %58, %60, %cst_58 {dimension_numbers = #tpu.dot_dimension_numbers<[1], [0], [0], [1], [0, 0, 1, 1], [], []>} : vector<4x16xf32>, vector<16x32xf32>, vector<4x32xf32> -> vector<4x32xf32>
    %62 = arith.addf %57, %61 : vector<4x32xf32>
    %63 = vector.extract_strided_slice %46 {offsets = [12, 0], sizes = [4, 16], strides = [1, 1]} : vector<64x16xf32> to vector<4x16xf32>
    %c3_59 = arith.constant 3 : index
    %c0_60 = arith.constant 0 : index
    %c0_61 = arith.constant 0 : index
    %64 = vector.load %arg5[%c3_59, %c0_60, %c0_61] : memref<16x16x32xf32, #tpu.memory_space<vmem>>, vector<1x16x32xf32>
    %65 = vector.shape_cast %64 : vector<1x16x32xf32> to vector<16x32xf32>
    %cst_62 = arith.constant dense<0.000000e+00> : vector<4x32xf32>
    %66 = tpu.matmul %63, %65, %cst_62 {dimension_numbers = #tpu.dot_dimension_numbers<[1], [0], [0], [1], [0, 0, 1, 1], [], []>} : vector<4x16xf32>, vector<16x32xf32>, vector<4x32xf32> -> vector<4x32xf32>
    %67 = arith.addf %62, %66 : vector<4x32xf32>
    %68 = vector.extract_strided_slice %46 {offsets = [16, 0], sizes = [4, 16], strides = [1, 1]} : vector<64x16xf32> to vector<4x16xf32>
    %c4 = arith.constant 4 : index
    %c0_63 = arith.constant 0 : index
    %c0_64 = arith.constant 0 : index
    %69 = vector.load %arg5[%c4, %c0_63, %c0_64] : memref<16x16x32xf32, #tpu.memory_space<vmem>>, vector<1x16x32xf32>
    %70 = vector.shape_cast %69 : vector<1x16x32xf32> to vector<16x32xf32>
    %cst_65 = arith.constant dense<0.000000e+00> : vector<4x32xf32>
    %71 = tpu.matmul %68, %70, %cst_65 {dimension_numbers = #tpu.dot_dimension_numbers<[1], [0], [0], [1], [0, 0, 1, 1], [], []>} : vector<4x16xf32>, vector<16x32xf32>, vector<4x32xf32> -> vector<4x32xf32>
    %72 = arith.addf %67, %71 : vector<4x32xf32>
    %73 = vector.extract_strided_slice %46 {offsets = [20, 0], sizes = [4, 16], strides = [1, 1]} : vector<64x16xf32> to vector<4x16xf32>
    %c5 = arith.constant 5 : index
    %c0_66 = arith.constant 0 : index
    %c0_67 = arith.constant 0 : index
    %74 = vector.load %arg5[%c5, %c0_66, %c0_67] : memref<16x16x32xf32, #tpu.memory_space<vmem>>, vector<1x16x32xf32>
    %75 = vector.shape_cast %74 : vector<1x16x32xf32> to vector<16x32xf32>
    %cst_68 = arith.constant dense<0.000000e+00> : vector<4x32xf32>
    %76 = tpu.matmul %73, %75, %cst_68 {dimension_numbers = #tpu.dot_dimension_numbers<[1], [0], [0], [1], [0, 0, 1, 1], [], []>} : vector<4x16xf32>, vector<16x32xf32>, vector<4x32xf32> -> vector<4x32xf32>
    %77 = arith.addf %72, %76 : vector<4x32xf32>
    %78 = vector.extract_strided_slice %46 {offsets = [24, 0], sizes = [4, 16], strides = [1, 1]} : vector<64x16xf32> to vector<4x16xf32>
    %c6 = arith.constant 6 : index
    %c0_69 = arith.constant 0 : index
    %c0_70 = arith.constant 0 : index
    %79 = vector.load %arg5[%c6, %c0_69, %c0_70] : memref<16x16x32xf32, #tpu.memory_space<vmem>>, vector<1x16x32xf32>
    %80 = vector.shape_cast %79 : vector<1x16x32xf32> to vector<16x32xf32>
    %cst_71 = arith.constant dense<0.000000e+00> : vector<4x32xf32>
    %81 = tpu.matmul %78, %80, %cst_71 {dimension_numbers = #tpu.dot_dimension_numbers<[1], [0], [0], [1], [0, 0, 1, 1], [], []>} : vector<4x16xf32>, vector<16x32xf32>, vector<4x32xf32> -> vector<4x32xf32>
    %82 = arith.addf %77, %81 : vector<4x32xf32>
    %83 = vector.extract_strided_slice %46 {offsets = [28, 0], sizes = [4, 16], strides = [1, 1]} : vector<64x16xf32> to vector<4x16xf32>
    %c7 = arith.constant 7 : index
    %c0_72 = arith.constant 0 : index
    %c0_73 = arith.constant 0 : index
    %84 = vector.load %arg5[%c7, %c0_72, %c0_73] : memref<16x16x32xf32, #tpu.memory_space<vmem>>, vector<1x16x32xf32>
    %85 = vector.shape_cast %84 : vector<1x16x32xf32> to vector<16x32xf32>
    %cst_74 = arith.constant dense<0.000000e+00> : vector<4x32xf32>
    %86 = tpu.matmul %83, %85, %cst_74 {dimension_numbers = #tpu.dot_dimension_numbers<[1], [0], [0], [1], [0, 0, 1, 1], [], []>} : vector<4x16xf32>, vector<16x32xf32>, vector<4x32xf32> -> vector<4x32xf32>
    %87 = arith.addf %82, %86 : vector<4x32xf32>
    %88 = vector.extract_strided_slice %46 {offsets = [32, 0], sizes = [4, 16], strides = [1, 1]} : vector<64x16xf32> to vector<4x16xf32>
    %c8 = arith.constant 8 : index
    %c0_75 = arith.constant 0 : index
    %c0_76 = arith.constant 0 : index
    %89 = vector.load %arg5[%c8, %c0_75, %c0_76] : memref<16x16x32xf32, #tpu.memory_space<vmem>>, vector<1x16x32xf32>
    %90 = vector.shape_cast %89 : vector<1x16x32xf32> to vector<16x32xf32>
    %cst_77 = arith.constant dense<0.000000e+00> : vector<4x32xf32>
    %91 = tpu.matmul %88, %90, %cst_77 {dimension_numbers = #tpu.dot_dimension_numbers<[1], [0], [0], [1], [0, 0, 1, 1], [], []>} : vector<4x16xf32>, vector<16x32xf32>, vector<4x32xf32> -> vector<4x32xf32>
    %92 = arith.addf %87, %91 : vector<4x32xf32>
    %93 = vector.extract_strided_slice %46 {offsets = [36, 0], sizes = [4, 16], strides = [1, 1]} : vector<64x16xf32> to vector<4x16xf32>
    %c9 = arith.constant 9 : index
    %c0_78 = arith.constant 0 : index
    %c0_79 = arith.constant 0 : index
    %94 = vector.load %arg5[%c9, %c0_78, %c0_79] : memref<16x16x32xf32, #tpu.memory_space<vmem>>, vector<1x16x32xf32>
    %95 = vector.shape_cast %94 : vector<1x16x32xf32> to vector<16x32xf32>
    %cst_80 = arith.constant dense<0.000000e+00> : vector<4x32xf32>
    %96 = tpu.matmul %93, %95, %cst_80 {dimension_numbers = #tpu.dot_dimension_numbers<[1], [0], [0], [1], [0, 0, 1, 1], [], []>} : vector<4x16xf32>, vector<16x32xf32>, vector<4x32xf32> -> vector<4x32xf32>
    %97 = arith.addf %92, %96 : vector<4x32xf32>
    %98 = vector.extract_strided_slice %46 {offsets = [40, 0], sizes = [4, 16], strides = [1, 1]} : vector<64x16xf32> to vector<4x16xf32>
    %c10 = arith.constant 10 : index
    %c0_81 = arith.constant 0 : index
    %c0_82 = arith.constant 0 : index
    %99 = vector.load %arg5[%c10, %c0_81, %c0_82] : memref<16x16x32xf32, #tpu.memory_space<vmem>>, vector<1x16x32xf32>
    %100 = vector.shape_cast %99 : vector<1x16x32xf32> to vector<16x32xf32>
    %cst_83 = arith.constant dense<0.000000e+00> : vector<4x32xf32>
    %101 = tpu.matmul %98, %100, %cst_83 {dimension_numbers = #tpu.dot_dimension_numbers<[1], [0], [0], [1], [0, 0, 1, 1], [], []>} : vector<4x16xf32>, vector<16x32xf32>, vector<4x32xf32> -> vector<4x32xf32>
    %102 = arith.addf %97, %101 : vector<4x32xf32>
    %103 = vector.extract_strided_slice %46 {offsets = [44, 0], sizes = [4, 16], strides = [1, 1]} : vector<64x16xf32> to vector<4x16xf32>
    %c11 = arith.constant 11 : index
    %c0_84 = arith.constant 0 : index
    %c0_85 = arith.constant 0 : index
    %104 = vector.load %arg5[%c11, %c0_84, %c0_85] : memref<16x16x32xf32, #tpu.memory_space<vmem>>, vector<1x16x32xf32>
    %105 = vector.shape_cast %104 : vector<1x16x32xf32> to vector<16x32xf32>
    %cst_86 = arith.constant dense<0.000000e+00> : vector<4x32xf32>
    %106 = tpu.matmul %103, %105, %cst_86 {dimension_numbers = #tpu.dot_dimension_numbers<[1], [0], [0], [1], [0, 0, 1, 1], [], []>} : vector<4x16xf32>, vector<16x32xf32>, vector<4x32xf32> -> vector<4x32xf32>
    %107 = arith.addf %102, %106 : vector<4x32xf32>
    %108 = vector.extract_strided_slice %46 {offsets = [48, 0], sizes = [4, 16], strides = [1, 1]} : vector<64x16xf32> to vector<4x16xf32>
    %c12 = arith.constant 12 : index
    %c0_87 = arith.constant 0 : index
    %c0_88 = arith.constant 0 : index
    %109 = vector.load %arg5[%c12, %c0_87, %c0_88] : memref<16x16x32xf32, #tpu.memory_space<vmem>>, vector<1x16x32xf32>
    %110 = vector.shape_cast %109 : vector<1x16x32xf32> to vector<16x32xf32>
    %cst_89 = arith.constant dense<0.000000e+00> : vector<4x32xf32>
    %111 = tpu.matmul %108, %110, %cst_89 {dimension_numbers = #tpu.dot_dimension_numbers<[1], [0], [0], [1], [0, 0, 1, 1], [], []>} : vector<4x16xf32>, vector<16x32xf32>, vector<4x32xf32> -> vector<4x32xf32>
    %112 = arith.addf %107, %111 : vector<4x32xf32>
    %113 = vector.extract_strided_slice %46 {offsets = [52, 0], sizes = [4, 16], strides = [1, 1]} : vector<64x16xf32> to vector<4x16xf32>
    %c13 = arith.constant 13 : index
    %c0_90 = arith.constant 0 : index
    %c0_91 = arith.constant 0 : index
    %114 = vector.load %arg5[%c13, %c0_90, %c0_91] : memref<16x16x32xf32, #tpu.memory_space<vmem>>, vector<1x16x32xf32>
    %115 = vector.shape_cast %114 : vector<1x16x32xf32> to vector<16x32xf32>
    %cst_92 = arith.constant dense<0.000000e+00> : vector<4x32xf32>
    %116 = tpu.matmul %113, %115, %cst_92 {dimension_numbers = #tpu.dot_dimension_numbers<[1], [0], [0], [1], [0, 0, 1, 1], [], []>} : vector<4x16xf32>, vector<16x32xf32>, vector<4x32xf32> -> vector<4x32xf32>
    %117 = arith.addf %112, %116 : vector<4x32xf32>
    %118 = vector.extract_strided_slice %46 {offsets = [56, 0], sizes = [4, 16], strides = [1, 1]} : vector<64x16xf32> to vector<4x16xf32>
    %c14 = arith.constant 14 : index
    %c0_93 = arith.constant 0 : index
    %c0_94 = arith.constant 0 : index
    %119 = vector.load %arg5[%c14, %c0_93, %c0_94] : memref<16x16x32xf32, #tpu.memory_space<vmem>>, vector<1x16x32xf32>
    %120 = vector.shape_cast %119 : vector<1x16x32xf32> to vector<16x32xf32>
    %cst_95 = arith.constant dense<0.000000e+00> : vector<4x32xf32>
    %121 = tpu.matmul %118, %120, %cst_95 {dimension_numbers = #tpu.dot_dimension_numbers<[1], [0], [0], [1], [0, 0, 1, 1], [], []>} : vector<4x16xf32>, vector<16x32xf32>, vector<4x32xf32> -> vector<4x32xf32>
    %122 = arith.addf %117, %121 : vector<4x32xf32>
    %123 = vector.extract_strided_slice %46 {offsets = [60, 0], sizes = [4, 16], strides = [1, 1]} : vector<64x16xf32> to vector<4x16xf32>
    %c15 = arith.constant 15 : index
    %c0_96 = arith.constant 0 : index
    %c0_97 = arith.constant 0 : index
    %124 = vector.load %arg5[%c15, %c0_96, %c0_97] : memref<16x16x32xf32, #tpu.memory_space<vmem>>, vector<1x16x32xf32>
    %125 = vector.shape_cast %124 : vector<1x16x32xf32> to vector<16x32xf32>
    %cst_98 = arith.constant dense<0.000000e+00> : vector<4x32xf32>
    %126 = tpu.matmul %123, %125, %cst_98 {dimension_numbers = #tpu.dot_dimension_numbers<[1], [0], [0], [1], [0, 0, 1, 1], [], []>} : vector<4x16xf32>, vector<16x32xf32>, vector<4x32xf32> -> vector<4x32xf32>
    %127 = arith.addf %122, %126 : vector<4x32xf32>
    %c0_99 = arith.constant 0 : index
    %c0_100 = arith.constant 0 : index
    %128 = vector.load %arg6[%c0_99, %c0_100] : memref<1x32xf32, #tpu.memory_space<vmem>>, vector<1x32xf32>
    %129 = vector.broadcast %128 : vector<1x32xf32> to vector<4x32xf32>
    %130 = arith.addf %127, %129 : vector<4x32xf32>
    %131 = vector.extract_strided_slice %130 {offsets = [0, 0], sizes = [1, 32], strides = [1, 1]} : vector<4x32xf32> to vector<1x32xf32>
    %132 = vector.extract_strided_slice %130 {offsets = [1, 0], sizes = [1, 32], strides = [1, 1]} : vector<4x32xf32> to vector<1x32xf32>
    %133 = arith.maximumf %131, %132 : vector<1x32xf32>
    %134 = vector.extract_strided_slice %130 {offsets = [2, 0], sizes = [1, 32], strides = [1, 1]} : vector<4x32xf32> to vector<1x32xf32>
    %135 = vector.extract_strided_slice %130 {offsets = [3, 0], sizes = [1, 32], strides = [1, 1]} : vector<4x32xf32> to vector<1x32xf32>
    %136 = arith.maximumf %134, %135 : vector<1x32xf32>
    %137 = arith.maximumf %133, %136 : vector<1x32xf32>
    %c0_101 = arith.constant 0 : index
    %c0_102 = arith.constant 0 : index
    %138 = vector.load %arg7[%c0_101, %c0_102] : memref<32x256xf32, #tpu.memory_space<vmem>>, vector<32x256xf32>
    %cst_103 = arith.constant dense<0.000000e+00> : vector<1x256xf32>
    %139 = tpu.matmul %137, %138, %cst_103 {dimension_numbers = #tpu.dot_dimension_numbers<[1], [0], [0], [1], [0, 0, 1, 1], [], []>} : vector<1x32xf32>, vector<32x256xf32>, vector<1x256xf32> -> vector<1x256xf32>
    %c0_104 = arith.constant 0 : index
    %c0_105 = arith.constant 0 : index
    %140 = vector.load %arg8[%c0_104, %c0_105] : memref<1x256xf32, #tpu.memory_space<vmem>>, vector<1x256xf32>
    %141 = arith.addf %139, %140 : vector<1x256xf32>
    %cst_106 = arith.constant 0.000000e+00 : f32
    %142 = vector.broadcast %cst_106 : f32 to vector<1x256xf32>
    %143 = arith.maximumf %141, %142 : vector<1x256xf32>
    %c0_107 = arith.constant 0 : index
    %c0_108 = arith.constant 0 : index
    %144 = vector.load %arg9[%c0_107, %c0_108] : memref<256x7xf32, #tpu.memory_space<vmem>>, vector<256x7xf32>
    %cst_109 = arith.constant dense<0.000000e+00> : vector<1x7xf32>
    %145 = tpu.matmul %143, %144, %cst_109 {dimension_numbers = #tpu.dot_dimension_numbers<[1], [0], [0], [1], [0, 0, 1, 1], [], []>} : vector<1x256xf32>, vector<256x7xf32>, vector<1x7xf32> -> vector<1x7xf32>
    %c0_110 = arith.constant 0 : index
    %c0_111 = arith.constant 0 : index
    %146 = vector.load %arg10[%c0_110, %c0_111] : memref<1x7xf32, #tpu.memory_space<vmem>>, vector<1x7xf32>
    %147 = arith.addf %145, %146 : vector<1x7xf32>
    %148 = vector.extract_strided_slice %147 {offsets = [0, 0], sizes = [1, 6], strides = [1, 1]} : vector<1x7xf32> to vector<1x6xf32>
    %149 = vector.extract_strided_slice %147 {offsets = [0, 6], sizes = [1, 1], strides = [1, 1]} : vector<1x7xf32> to vector<1x1xf32>
    %cst_112 = arith.constant dense<0.000000e+00> : vector<1xf32>
    %150 = vector.multi_reduction <add>, %148, %cst_112 [1] : vector<1x6xf32> to vector<1xf32>
    %151 = vector.shape_cast %150 : vector<1xf32> to vector<1x1xf32>
    %cst_113 = arith.constant 0.166666672 : f32
    %152 = vector.broadcast %cst_113 : f32 to vector<1x1xf32>
    %153 = arith.mulf %151, %152 : vector<1x1xf32>
    %154 = vector.broadcast %149 : vector<1x1xf32> to vector<1x6xf32>
    %155 = arith.addf %154, %148 : vector<1x6xf32>
    %156 = vector.broadcast %153 : vector<1x1xf32> to vector<1x6xf32>
    %157 = arith.subf %155, %156 : vector<1x6xf32>
    %c0_114 = arith.constant 0 : index
    %c0_115 = arith.constant 0 : index
    %c0_116 = arith.constant 0 : index
    %158 = vector.load %arg11[%c0_114, %c0_115, %c0_116] : memref<1x1x6xf32, #tpu.memory_space<vmem>>, vector<1x1x6xf32>
    %159 = vector.shape_cast %158 : vector<1x1x6xf32> to vector<1x6xf32>
    %160 = vector.shape_cast %157 : vector<1x6xf32> to vector<1x1x6xf32>
    tpu.vector_store %arg11[%c0_114, %c0_115, %c0_116], %160 {strides = array<i32>} : memref<1x1x6xf32, #tpu.memory_space<vmem>>, vector<1x1x6xf32>,
    return
  }
  func.func @transform_0(%arg0: i32) -> (i32, i32, i32, i32) {
    %c0_i32 = arith.constant 0 : i32
    %c0_i32_0 = arith.constant 0 : i32
    %c0_i32_1 = arith.constant 0 : i32
    %c0_i32_2 = arith.constant 0 : i32
    return %arg0, %c0_i32, %c0_i32_0, %c0_i32_1 : i32, i32, i32, i32
  }
  func.func @transform_1(%arg0: i32) -> (i32, i32, i32) {
    %c0_i32 = arith.constant 0 : i32
    %c0_i32_0 = arith.constant 0 : i32
    %c0_i32_1 = arith.constant 0 : i32
    %c0_i32_2 = arith.constant 0 : i32
    return %c0_i32, %c0_i32_0, %c0_i32_1 : i32, i32, i32
  }
  func.func @transform_2(%arg0: i32) -> (i32, i32) {
    %c0_i32 = arith.constant 0 : i32
    %c0_i32_0 = arith.constant 0 : i32
    %c0_i32_1 = arith.constant 0 : i32
    return %c0_i32, %c0_i32_0 : i32, i32
  }
  func.func @transform_3(%arg0: i32) -> (i32, i32, i32) {
    %c0_i32 = arith.constant 0 : i32
    %c0_i32_0 = arith.constant 0 : i32
    %c0_i32_1 = arith.constant 0 : i32
    %c0_i32_2 = arith.constant 0 : i32
    return %c0_i32, %c0_i32_0, %c0_i32_1 : i32, i32, i32
  }
  func.func @transform_4(%arg0: i32) -> (i32, i32, i32) {
    %c0_i32 = arith.constant 0 : i32
    %c0_i32_0 = arith.constant 0 : i32
    %c0_i32_1 = arith.constant 0 : i32
    %c0_i32_2 = arith.constant 0 : i32
    return %c0_i32, %c0_i32_0, %c0_i32_1 : i32, i32, i32
  }
  func.func @transform_5(%arg0: i32) -> (i32, i32) {
    %c0_i32 = arith.constant 0 : i32
    %c0_i32_0 = arith.constant 0 : i32
    %c0_i32_1 = arith.constant 0 : i32
    return %c0_i32, %c0_i32_0 : i32, i32
  }
  func.func @transform_6(%arg0: i32) -> (i32, i32) {
    %c0_i32 = arith.constant 0 : i32
    %c0_i32_0 = arith.constant 0 : i32
    %c0_i32_1 = arith.constant 0 : i32
    return %c0_i32, %c0_i32_0 : i32, i32
  }
  func.func @transform_7(%arg0: i32) -> (i32, i32) {
    %c0_i32 = arith.constant 0 : i32
    %c0_i32_0 = arith.constant 0 : i32
    %c0_i32_1 = arith.constant 0 : i32
    return %c0_i32, %c0_i32_0 : i32, i32
  }
  func.func @transform_8(%arg0: i32) -> (i32, i32) {
    %c0_i32 = arith.constant 0 : i32
    %c0_i32_0 = arith.constant 0 : i32
    %c0_i32_1 = arith.constant 0 : i32
    return %c0_i32, %c0_i32_0 : i32, i32
  }
  func.func @transform_9(%arg0: i32) -> (i32, i32) {
    %c0_i32 = arith.constant 0 : i32
    %c0_i32_0 = arith.constant 0 : i32
    %c0_i32_1 = arith.constant 0 : i32
    return %c0_i32, %c0_i32_0 : i32, i32
  }
  func.func @transform_10(%arg0: i32) -> (i32, i32, i32) {
    %c0_i32 = arith.constant 0 : i32
    %c0_i32_0 = arith.constant 0 : i32
    %c0_i32_1 = arith.constant 0 : i32
    return %arg0, %c0_i32, %c0_i32_0 : i32, i32, i32
  }
}

</mosaic_0001>

<llo_original>
// kernel: dueling_net_forward.1
$region0: #{dueling_net_forward.1}
  #allocation0 [shape = 'u32[]', space=smem, size = 0x4, offset = 0x4, fixed_abs, tag = 'smem constant byte address 0x4 - core index']
  #allocation1 [shape = 'u32[144,128]{1,0:T(1,128)}', space=vmem, size = 0x12000, scoped, tag = 'internal scratch']
  %s0 = inlined_call_operand.vmem [shape: f32[2,17,17,64], index: 0, kind: input, shape index: {}]
  %s1 = inlined_call_operand.vmem [shape: f32[4,64,16], index: 1, kind: input, shape index: {}]
  %s2 = inlined_call_operand.vmem [shape: f32[1,16], index: 2, kind: input, shape index: {}]
  %s3 = inlined_call_operand.vmem [shape: f32[4,64,256], index: 3, kind: input, shape index: {}]
  %s4 = inlined_call_operand.vmem [shape: f32[16,16,32], index: 4, kind: input, shape index: {}]
  %s5 = inlined_call_operand.vmem [shape: f32[1,32], index: 5, kind: input, shape index: {}]
  %s6 = inlined_call_operand.vmem [shape: f32[32,256], index: 6, kind: input, shape index: {}]
  %s7 = inlined_call_operand.vmem [shape: f32[1,256], index: 7, kind: input, shape index: {}]
  %s8 = inlined_call_operand.vmem [shape: f32[256,7], index: 8, kind: input, shape index: {}]
  %s9 = inlined_call_operand.vmem [shape: f32[1,7], index: 9, kind: input, shape index: {}]
  %s10 = inlined_call_operand.hbm [shape: f32[2,1,6], index: 10, kind: output, shape index: {}]
  %s11 = sld [smem:[#allocation0]]
  $region73: #{dueling_net_forward.1} parent=0
    _
  %s13 = ssub.s32 1, %s11
  %s14 = scalar_select 0, %s13, %s11
  $region1: #{dueling_net_forward.1} parent=0
    #allocation2 [shape = 'u8[1024]{0}', space=vmem, size = 0x400, scoped, tag = 'output window, operand 0']
    #allocation3 [shape = 's32[2]{0}', space=sflag, size = 0x8, scoped, tag = 'scoped memory for dueling_net_forward.1']
    %15 = vsyncpa [#allocation3], 0
    %s16 = scalar_lea.sflag [#allocation3], 1
    %17 = vsyncpa %s16, 0
    loop: start=0, step=1, limit=4
    $region2: #{dueling_net_forward.1} parent=1 // loop_pre_header
      _
    $region3: #{dueling_net_forward.1} parent=1 // loop_header
      %s19 = sphi 0, %s23
      %p20 = scmp.ge.s32.totalorder %s19, 4
      %s29 = sphi 0, %s31
      %s32 = sphi 0, %s29
      %s33 = sphi 0, %s32
      %s49 = sphi 0, %s33
      %s53 = sphi 0, %s53
      %s55 = sphi 0, %s53
      %s56 = sphi 0, %s55
      %s70 = sphi 0, %s56
      %s74 = sphi 0, %s74
      %s76 = sphi 0, %s74
      %s77 = sphi 0, %s76
      %s91 = sphi 0, %s77
      %s95 = sphi 0, %s95
      %s97 = sphi 0, %s95
      %s98 = sphi 0, %s97
      %s112 = sphi 0, %s98
      %s116 = sphi 0, %s116
      %s118 = sphi 0, %s116
      %s119 = sphi 0, %s118
      %s133 = sphi 0, %s119
      %s137 = sphi 0, %s137
      %s139 = sphi 0, %s137
      %s140 = sphi 0, %s139
      %s154 = sphi 0, %s140
      %s158 = sphi 0, %s158
      %s160 = sphi 0, %s158
      %s161 = sphi 0, %s160
      %s175 = sphi 0, %s161
      %s179 = sphi 0, %s179
      %s181 = sphi 0, %s179
      %s182 = sphi 0, %s181
      %s196 = sphi 0, %s182
      %s200 = sphi 0, %s200
      %s202 = sphi 0, %s200
      %s203 = sphi 0, %s202
      %s217 = sphi 0, %s203
      %s221 = sphi 0, %s221
      %s223 = sphi 0, %s221
      %s224 = sphi 0, %s223
      %s238 = sphi 0, %s224
      %s244 = sphi 0, %s246
      %s247 = sphi 0, %s244
      %s248 = sphi 0, %s247
      %s264 = sphi 0, %s248
    $region4: #{dueling_net_forward.1} parent=1 // loop_header_branch
      %22 = sbr.rel (%p20) target = $region8
    $region5: #{dueling_net_forward.1} parent=1 // loop_body
      %s24 = ssub.s32 %s19, 1
      %s25 = ssub.s32 %s19, 2
      %s26 = sadd.s32 %s19, 1
      %s27 = ssub.s32 %s19, %s26
      %p28 = scmp.eq.s32.totalorder %s27, 0
      %s30 = sadd.s32 %s29, 1
      %s31 = scalar_select %p28, %s29, %s30
      %p34 = pneg %p28
      %p35 = scmp.eq.s32.totalorder %s19, 1
      %p36 = por %p34, %p35
      %p37 = scmp.ne.s32.totalorder %s29, %s32
      %p38 = scmp.eq.s32.totalorder %s19, 0
      %p39 = por %p37, %p38
      %p40 = scmp.ne.s32.totalorder %s29, %s32
      %p41 = scmp.eq.s32.totalorder %s24, 1
      %p42 = por %p40, %p41
      %p43 = scmp.ne.s32.totalorder %s32, %s33
      %p44 = scmp.eq.s32.totalorder %s24, 0
      %p45 = por %p43, %p44
      %p46 = scmp.ne.s32.totalorder %s32, %s33
      %p47 = scmp.eq.s32.totalorder %s25, 1
      %p48 = por %p46, %p47
      %p50 = scmp.ne.s32.totalorder %s33, %s49
      %p51 = scmp.eq.s32.totalorder %s25, 0
      %p52 = por %p50, %p51
      %s54 = sadd.s32 %s53, 1
      %p57 = scmp.eq.s32.totalorder %s19, 1
      %p58 = scmp.ne.s32.totalorder %s53, %s55
      %p59 = scmp.eq.s32.totalorder %s19, 0
      %p60 = por %p58, %p59
      %p61 = scmp.ne.s32.totalorder %s53, %s55
      %p62 = scmp.eq.s32.totalorder %s24, 1
      %p63 = por %p61, %p62
      %p64 = scmp.ne.s32.totalorder %s55, %s56
      %p65 = scmp.eq.s32.totalorder %s24, 0
      %p66 = por %p64, %p65
      %p67 = scmp.ne.s32.totalorder %s55, %s56
      %p68 = scmp.eq.s32.totalorder %s25, 1
      %p69 = por %p67, %p68
      %p71 = scmp.ne.s32.totalorder %s56, %s70
      %p72 = scmp.eq.s32.totalorder %s25, 0
      %p73 = por %p71, %p72
      %s75 = sadd.s32 %s74, 1
      %p78 = scmp.eq.s32.totalorder %s19, 1
      %p79 = scmp.ne.s32.totalorder %s74, %s76
      %p80 = scmp.eq.s32.totalorder %s19, 0
      %p81 = por %p79, %p80
      %p82 = scmp.ne.s32.totalorder %s74, %s76
      %p83 = scmp.eq.s32.totalorder %s24, 1
      %p84 = por %p82, %p83
      %p85 = scmp.ne.s32.totalorder %s76, %s77
      %p86 = scmp.eq.s32.totalorder %s24, 0
      %p87 = por %p85, %p86
      %p88 = scmp.ne.s32.totalorder %s76, %s77
      %p89 = scmp.eq.s32.totalorder %s25, 1
      %p90 = por %p88, %p89
      %p92 = scmp.ne.s32.totalorder %s77, %s91
      %p93 = scmp.eq.s32.totalorder %s25, 0
      %p94 = por %p92, %p93
      %s96 = sadd.s32 %s95, 1
      %p99 = scmp.eq.s32.totalorder %s19, 1
      %p100 = scmp.ne.s32.totalorder %s95, %s97
      %p101 = scmp.eq.s32.totalorder %s19, 0
      %p102 = por %p100, %p101
      %p103 = scmp.ne.s32.totalorder %s95, %s97
      %p104 = scmp.eq.s32.totalorder %s24, 1
      %p105 = por %p103, %p104
      %p106 = scmp.ne.s32.totalorder %s97, %s98
      %p107 = scmp.eq.s32.totalorder %s24, 0
      %p108 = por %p106, %p107
      %p109 = scmp.ne.s32.totalorder %s97, %s98
      %p110 = scmp.eq.s32.totalorder %s25, 1
      %p111 = por %p109, %p110
      %p113 = scmp.ne.s32.totalorder %s98, %s112
      %p114 = scmp.eq.s32.totalorder %s25, 0
      %p115 = por %p113, %p114
      %s117 = sadd.s32 %s116, 1
      %p120 = scmp.eq.s32.totalorder %s19, 1
      %p121 = scmp.ne.s32.totalorder %s116, %s118
      %p122 = scmp.eq.s32.totalorder %s19, 0
      %p123 = por %p121, %p122
      %p124 = scmp.ne.s32.totalorder %s116, %s118
      %p125 = scmp.eq.s32.totalorder %s24, 1
      %p126 = por %p124, %p125
      %p127 = scmp.ne.s32.totalorder %s118, %s119
      %p128 = scmp.eq.s32.totalorder %s24, 0
      %p129 = por %p127, %p128
      %p130 = scmp.ne.s32.totalorder %s118, %s119
      %p131 = scmp.eq.s32.totalorder %s25, 1
      %p132 = por %p130, %p131
      %p134 = scmp.ne.s32.totalorder %s119, %s133
      %p135 = scmp.eq.s32.totalorder %s25, 0
      %p136 = por %p134, %p135
      %s138 = sadd.s32 %s137, 1
      %p141 = scmp.eq.s32.totalorder %s19, 1
      %p142 = scmp.ne.s32.totalorder %s137, %s139
      %p143 = scmp.eq.s32.totalorder %s19, 0
      %p144 = por %p142, %p143
      %p145 = scmp.ne.s32.totalorder %s137, %s139
      %p146 = scmp.eq.s32.totalorder %s24, 1
      %p147 = por %p145, %p146
      %p148 = scmp.ne.s32.totalorder %s139, %s140
      %p149 = scmp.eq.s32.totalorder %s24, 0
      %p150 = por %p148, %p149
      %p151 = scmp.ne.s32.totalorder %s139, %s140
      %p152 = scmp.eq.s32.totalorder %s25, 1
      %p153 = por %p151, %p152
      %p155 = scmp.ne.s32.totalorder %s140, %s154
      %p156 = scmp.eq.s32.totalorder %s25, 0
      %p157 = por %p155, %p156
      %s159 = sadd.s32 %s158, 1
      %p162 = scmp.eq.s32.totalorder %s19, 1
      %p163 = scmp.ne.s32.totalorder %s158, %s160
      %p164 = scmp.eq.s32.totalorder %s19, 0
      %p165 = por %p163, %p164
      %p166 = scmp.ne.s32.totalorder %s158, %s160
      %p167 = scmp.eq.s32.totalorder %s24, 1
      %p168 = por %p166, %p167
      %p169 = scmp.ne.s32.totalorder %s160, %s161
      %p170 = scmp.eq.s32.totalorder %s24, 0
      %p171 = por %p169, %p170
      %p172 = scmp.ne.s32.totalorder %s160, %s161
      %p173 = scmp.eq.s32.totalorder %s25, 1
      %p174 = por %p172, %p173
      %p176 = scmp.ne.s32.totalorder %s161, %s175
      %p177 = scmp.eq.s32.totalorder %s25, 0
      %p178 = por %p176, %p177
      %s180 = sadd.s32 %s179, 1
      %p183 = scmp.eq.s32.totalorder %s19, 1
      %p184 = scmp.ne.s32.totalorder %s179, %s181
      %p185 = scmp.eq.s32.totalorder %s19, 0
      %p186 = por %p184, %p185
      %p187 = scmp.ne.s32.totalorder %s179, %s181
      %p188 = scmp.eq.s32.totalorder %s24, 1
      %p189 = por %p187, %p188
      %p190 = scmp.ne.s32.totalorder %s181, %s182
      %p191 = scmp.eq.s32.totalorder %s24, 0
      %p192 = por %p190, %p191
      %p193 = scmp.ne.s32.totalorder %s181, %s182
      %p194 = scmp.eq.s32.totalorder %s25, 1
      %p195 = por %p193, %p194
      %p197 = scmp.ne.s32.totalorder %s182, %s196
      %p198 = scmp.eq.s32.totalorder %s25, 0
      %p199 = por %p197, %p198
      %s201 = sadd.s32 %s200, 1
      %p204 = scmp.eq.s32.totalorder %s19, 1
      %p205 = scmp.ne.s32.totalorder %s200, %s202
      %p206 = scmp.eq.s32.totalorder %s19, 0
      %p207 = por %p205, %p206
      %p208 = scmp.ne.s32.totalorder %s200, %s202
      %p209 = scmp.eq.s32.totalorder %s24, 1
      %p210 = por %p208, %p209
      %p211 = scmp.ne.s32.totalorder %s202, %s203
      %p212 = scmp.eq.s32.totalorder %s24, 0
      %p213 = por %p211, %p212
      %p214 = scmp.ne.s32.totalorder %s202, %s203
      %p215 = scmp.eq.s32.totalorder %s25, 1
      %p216 = por %p214, %p215
      %p218 = scmp.ne.s32.totalorder %s203, %s217
      %p219 = scmp.eq.s32.totalorder %s25, 0
      %p220 = por %p218, %p219
      %s222 = sadd.s32 %s221, 1
      %p225 = scmp.eq.s32.totalorder %s19, 1
      %p226 = scmp.ne.s32.totalorder %s221, %s223
      %p227 = scmp.eq.s32.totalorder %s19, 0
      %p228 = por %p226, %p227
      %p229 = scmp.ne.s32.totalorder %s221, %s223
      %p230 = scmp.eq.s32.totalorder %s24, 1
      %p231 = por %p229, %p230
      %p232 = scmp.ne.s32.totalorder %s223, %s224
      %p233 = scmp.eq.s32.totalorder %s24, 0
      %p234 = por %p232, %p233
      %p235 = scmp.ne.s32.totalorder %s223, %s224
      %p236 = scmp.eq.s32.totalorder %s25, 1
      %p237 = por %p235, %p236
      %p239 = scmp.ne.s32.totalorder %s224, %s238
      %p240 = scmp.eq.s32.totalorder %s25, 0
      %p241 = por %p239, %p240
      %s242 = ssub.s32 %s19, %s26
      %p243 = scmp.eq.s32.totalorder %s242, 0
      %s245 = sadd.s32 %s244, 1
      %s246 = scalar_select %p243, %s244, %s245
      %p249 = pneg %p243
      %p250 = scmp.eq.s32.totalorder %s19, 1
      %p251 = por %p249, %p250
      %p252 = scmp.ne.s32.totalorder %s244, %s247
      %p253 = scmp.eq.s32.totalorder %s19, 0
      %p254 = por %p252, %p253
      %p255 = scmp.ne.s32.totalorder %s244, %s247
      %p256 = scmp.eq.s32.totalorder %s24, 1
      %p257 = por %p255, %p256
      %p258 = scmp.ne.s32.totalorder %s247, %s248
      %p259 = scmp.eq.s32.totalorder %s24, 0
      %p260 = por %p258, %p259
      %p261 = scmp.ne.s32.totalorder %s247, %s248
      %p262 = scmp.eq.s32.totalorder %s25, 1
      %p263 = por %p261, %p262
      %p265 = scmp.ne.s32.totalorder %s248, %s264
      %p266 = scmp.eq.s32.totalorder %s25, 0
      %p267 = por %p265, %p266
      %p268 = scmp.le.s32.totalorder 1, %s19
      %p269 = scmp.lt.s32.totalorder %s19, 3
      %p270 = pnand %p268, %p269
      %p271 = pneg %p270
      // Predicated region
      $region9: #{dueling_net_forward.1} parent=5 // pred_check
        _
      $region10: #{dueling_net_forward.1} parent=5 // pred_check_branch
        %273 = sbr.rel (%p270) target = $region12
      $region11: #{dueling_net_forward.1} parent=5 // pred_region
        %s274 = ssub.s32 %s19, 1
        // Predicated region
        $region13: #{dueling_net_forward.1} parent=11 // pred_check
          %p275 = pneg %p66
        $region14: #{dueling_net_forward.1} parent=11 // pred_check_branch
          %277 = sbr.rel (%p275) target = $region16
        $region15: #{dueling_net_forward.1} parent=11 // pred_region
          _
        $region16: #{dueling_net_forward.1} parent=11 // pred_fallthru
          _
        // Predicated region
        $region17: #{dueling_net_forward.1} parent=11 // pred_check
          %p278 = pneg %p87
        $region18: #{dueling_net_forward.1} parent=11 // pred_check_branch
          %280 = sbr.rel (%p278) target = $region20
        $region19: #{dueling_net_forward.1} parent=11 // pred_region
          _
        $region20: #{dueling_net_forward.1} parent=11 // pred_fallthru
          _
        // Predicated region
        $region21: #{dueling_net_forward.1} parent=11 // pred_check
          %p281 = pneg %p108
        $region22: #{dueling_net_forward.1} parent=11 // pred_check_branch
          %283 = sbr.rel (%p281) target = $region24
        $region23: #{dueling_net_forward.1} parent=11 // pred_region
          _
        $region24: #{dueling_net_forward.1} parent=11 // pred_fallthru
          _
        // Predicated region
        $region25: #{dueling_net_forward.1} parent=11 // pred_check
          %p284 = pneg %p129
        $region26: #{dueling_net_forward.1} parent=11 // pred_check_branch
          %286 = sbr.rel (%p284) target = $region28
        $region27: #{dueling_net_forward.1} parent=11 // pred_region
          _
        $region28: #{dueling_net_forward.1} parent=11 // pred_fallthru
          _
        // Predicated region
        $region29: #{dueling_net_forward.1} parent=11 // pred_check
          %p287 = pneg %p150
        $region30: #{dueling_net_forward.1} parent=11 // pred_check_branch
          %289 = sbr.rel (%p287) target = $region32
        $region31: #{dueling_net_forward.1} parent=11 // pred_region
          _
        $region32: #{dueling_net_forward.1} parent=11 // pred_fallthru
          _
        // Predicated region
        $region33: #{dueling_net_forward.1} parent=11 // pred_check
          %p290 = pneg %p171
        $region34: #{dueling_net_forward.1} parent=11 // pred_check_branch
          %292 = sbr.rel (%p290) target = $region36
        $region35: #{dueling_net_forward.1} parent=11 // pred_region
          _
        $region36: #{dueling_net_forward.1} parent=11 // pred_fallthru
          _
        // Predicated region
        $region37: #{dueling_net_forward.1} parent=11 // pred_check
          %p293 = pneg %p192
        $region38: #{dueling_net_forward.1} parent=11 // pred_check_branch
          %295 = sbr.rel (%p293) target = $region40
        $region39: #{dueling_net_forward.1} parent=11 // pred_region
          _
        $region40: #{dueling_net_forward.1} parent=11 // pred_fallthru
          _
        // Predicated region
        $region41: #{dueling_net_forward.1} parent=11 // pred_check
          %p296 = pneg %p213
        $region42: #{dueling_net_forward.1} parent=11 // pred_check_branch
          %298 = sbr.rel (%p296) target = $region44
        $region43: #{dueling_net_forward.1} parent=11 // pred_region
          _
        $region44: #{dueling_net_forward.1} parent=11 // pred_fallthru
          _
        // Predicated region
        $region45: #{dueling_net_forward.1} parent=11 // pred_check
          %p299 = pneg %p234
        $region46: #{dueling_net_forward.1} parent=11 // pred_check_branch
          %301 = sbr.rel (%p299) target = $region48
        $region47: #{dueling_net_forward.1} parent=11 // pred_region
          _
        $region48: #{dueling_net_forward.1} parent=11 // pred_fallthru
          _
      $region12: #{dueling_net_forward.1} parent=5 // pred_fallthru
        _
      %p302 = scmp.lt.s32.totalorder %s19, 2
      // Predicated region
      $region49: #{dueling_net_forward.1} parent=5 // pred_check
        %p303 = pneg %p302
      $region50: #{dueling_net_forward.1} parent=5 // pred_check_branch
        %305 = sbr.rel (%p303) target = $region52
      $region51: #{dueling_net_forward.1} parent=5 // pred_region
        // Predicated region
        $region53: #{dueling_net_forward.1} parent=51 // pred_check
          %p306 = pneg %p39
        $region54: #{dueling_net_forward.1} parent=51 // pred_check_branch
          %308 = sbr.rel (%p306) target = $region56
        $region55: #{dueling_net_forward.1} parent=51 // pred_region
          %p309 = scmp.lt.s32.totalorder %s19, 1
          %s310 = scalar_select %p309, %s19, 1
          %s311 = smul.addr %s310, 51
          %s312 = smul.addr %s311, 8
          %s313 = scalar_lea.vmem %s0, %s312
        $region56: #{dueling_net_forward.1} parent=51 // pred_fallthru
          _
      $region52: #{dueling_net_forward.1} parent=5 // pred_fallthru
        _
      %p314 = scmp.le.s32.totalorder 1, %s19
      %p315 = scmp.lt.s32.totalorder %s19, 3
      %p316 = pnand %p314, %p315
      %p317 = pneg %p316
      // Predicated region
      $region57: #{dueling_net_forward.1} parent=5 // pred_check
        _
      $region58: #{dueling_net_forward.1} parent=5 // pred_check_branch
        %319 = sbr.rel (%p316) target = $region60
      $region59: #{dueling_net_forward.1} parent=5 // pred_region
        %s320 = ssub.s32 %s19, 1
        %p321 = scmp.lt.s32.totalorder %s24, 1
        %s322 = scalar_select %p321, %s24, 1
        %s323 = smul.addr %s322, 51
        %s324 = smul.addr %s323, 8
        %s325 = scalar_lea.vmem %s0, %s324
        %p326 = pneg %p45
        %p327 = pneg %p42
        %p328 = pneg %p66
        %p329 = pneg %p63
        %p330 = pneg %p87
        %p331 = pneg %p84
        %p332 = pneg %p108
        %p333 = pneg %p105
        %p334 = pneg %p129
        %p335 = pneg %p126
        %p336 = pneg %p150
        %p337 = pneg %p147
        %p338 = pneg %p171
        %p339 = pneg %p168
        %p340 = pneg %p192
        %p341 = pneg %p189
        %p342 = pneg %p213
        %p343 = pneg %p210
        %p344 = pneg %p234
        %p345 = pneg %p231
        %p346 = pneg %p260
        %p347 = pneg %p257
        %s348 = sand.u32 %s247, 1
        %s349 = scalar_lea.sflag [#allocation3], %s348
        %s350 = sand.u32 %s247, 1
        %s351 = scalar_lea.vmem [#allocation2], %s350
        %p352 = scmp.lt.s32.totalorder %s24, 1
        %s353 = scalar_select %p352, %s24, 1
        %s354 = smul.addr %s353, 51
        %s355 = smul.addr %s354, 8
        %s356 = scalar_lea.vmem %s0, %s355
        %v357 = vld [vmem:[%s356] sm:$0xff]
        %v358 = vld [vmem:[%s356 + $0x8] sm:$0xff]
        %v359 = vld [vmem:[%s356 + $0x18] sm:$0xff]
        %v360 = vld [vmem:[%s356 + $0x20] sm:$0xff]
        %v361 = vld [vmem:[%s356 + $0x30] sm:$0xff]
        %v362 = vld [vmem:[%s356 + $0x38] sm:$0xff]
        %v363 = vld [vmem:[%s356 + $0x48] sm:$0xff]
        %v364 = vld [vmem:[%s356 + $0x50] sm:$0xff]
        %v365 = vld [vmem:[%s356 + $0x60] sm:$0xff]
        %v366 = vld [vmem:[%s356 + $0x68] sm:$0xff]
        %v367 = vld [vmem:[%s356 + $0x78] sm:$0xff]
        %v368 = vld [vmem:[%s356 + $0x80] sm:$0xff]
        %v369 = vld [vmem:[%s356 + $0x90] sm:$0xff]
        %v370 = vld [vmem:[%s356 + $0x98] sm:$0xff]
        %v371 = vld [vmem:[%s356 + $0xa8] sm:$0xff]
        %v372 = vld [vmem:[%s356 + $0xb0] sm:$0xff]
        %v373 = vld [vmem:[%s356 + $0xc0] sm:$0xff]
        %v374 = vld [vmem:[%s356 + $0xc8] sm:$0xff]
        %v375 = vld [vmem:[%s356 + $0xd8] sm:$0xff]
        %v376 = vld [vmem:[%s356 + $0xe0] sm:$0xff]
        %v377 = vld [vmem:[%s356 + $0xf0] sm:$0xff]
        %v378 = vld [vmem:[%s356 + $0xf8] sm:$0xff]
        %v379 = vld [vmem:[%s356 + $0x108] sm:$0xff]
        %v380 = vld [vmem:[%s356 + $0x110] sm:$0xff]
        %v381 = vld [vmem:[%s356 + $0x120] sm:$0xff]
        %v382 = vld [vmem:[%s356 + $0x128] sm:$0xff]
        %v383 = vld [vmem:[%s356 + $0x138] sm:$0xff]
        %v384 = vld [vmem:[%s356 + $0x140] sm:$0xff]
        %v385 = vld [vmem:[%s356 + $0x150] sm:$0xff]
        %v386 = vld [vmem:[%s356 + $0x158] sm:$0xff]
        %v387 = vld [vmem:[%s356 + $0x168] sm:$0xff]
        %v388 = vld [vmem:[%s356 + $0x170] sm:$0xff]
        %v389 = vld [vmem:[%s1] sm:$0xff]
        %v390 = vld [vmem:[%s1 + $0x8] sm:$0xff]
        %v391 = vld [vmem:[%s1 + $0x10] sm:$0xff]
        %v392 = vld [vmem:[%s1 + $0x18] sm:$0xff]
        %v393 = vld [vmem:[%s1 + $0x20] sm:$0xff]
        %v394 = vld [vmem:[%s1 + $0x28] sm:$0xff]
        %v395 = vld [vmem:[%s1 + $0x30] sm:$0xff]
        %v396 = vld [vmem:[%s1 + $0x38] sm:$0xff]
        %v397 = vld [vmem:[%s356 + $0x1] sm:$0xff]
        %v398 = vld [vmem:[%s356 + $0x9] sm:$0xff]
        %v399 = vld [vmem:[%s356 + $0x19] sm:$0xff]
        %v400 = vld [vmem:[%s356 + $0x21] sm:$0xff]
        %v401 = vld [vmem:[%s356 + $0x31] sm:$0xff]
        %v402 = vld [vmem:[%s356 + $0x39] sm:$0xff]
        %v403 = vld [vmem:[%s356 + $0x49] sm:$0xff]
        %v404 = vld [vmem:[%s356 + $0x51] sm:$0xff]
        %v405 = vld [vmem:[%s356 + $0x61] sm:$0xff]
        %v406 = vld [vmem:[%s356 + $0x69] sm:$0xff]
        %v407 = vld [vmem:[%s356 + $0x79] sm:$0xff]
        %v408 = vld [vmem:[%s356 + $0x81] sm:$0xff]
        %v409 = vld [vmem:[%s356 + $0x91] sm:$0xff]
        %v410 = vld [vmem:[%s356 + $0x99] sm:$0xff]
        %v411 = vld [vmem:[%s356 + $0xa9] sm:$0xff]
        %v412 = vld [vmem:[%s356 + $0xb1] sm:$0xff]
        %v413 = vld [vmem:[%s356 + $0xc1] sm:$0xff]
        %v414 = vld [vmem:[%s356 + $0xc9] sm:$0xff]
        %v415 = vld [vmem:[%s356 + $0xd9] sm:$0xff]
        %v416 = vld [vmem:[%s356 + $0xe1] sm:$0xff]
        %v417 = vld [vmem:[%s356 + $0xf1] sm:$0xff]
        %v418 = vld [vmem:[%s356 + $0xf9] sm:$0xff]
        %v419 = vld [vmem:[%s356 + $0x109] sm:$0xff]
        %v420 = vld [vmem:[%s356 + $0x111] sm:$0xff]
        %v421 = vld [vmem:[%s356 + $0x121] sm:$0xff]
        %v422 = vld [vmem:[%s356 + $0x129] sm:$0xff]
        %v423 = vld [vmem:[%s356 + $0x139] sm:$0xff]
        %v424 = vld [vmem:[%s356 + $0x141] sm:$0xff]
        %v425 = vld [vmem:[%s356 + $0x151] sm:$0xff]
        %v426 = vld [vmem:[%s356 + $0x159] sm:$0xff]
        %v427 = vld [vmem:[%s356 + $0x169] sm:$0xff]
        %v428 = vld [vmem:[%s356 + $0x171] sm:$0xff]
        %s429 = scalar_lea.vmem %s1, 64
        %v430 = vld [vmem:[%s429] sm:$0xff]
        %v431 = vld [vmem:[%s429 + $0x8] sm:$0xff]
        %v432 = vld [vmem:[%s429 + $0x10] sm:$0xff]
        %v433 = vld [vmem:[%s429 + $0x18] sm:$0xff]
        %v434 = vld [vmem:[%s429 + $0x20] sm:$0xff]
        %v435 = vld [vmem:[%s429 + $0x28] sm:$0xff]
        %v436 = vld [vmem:[%s429 + $0x30] sm:$0xff]
        %v437 = vld [vmem:[%s429 + $0x38] sm:$0xff]
        %vm438 = vcmask 523264
        %v440 = vsel %vm438, %v397, 0
        %v443 = vsel %vm438, %v398, 0
        %v446 = vsel %vm438, %v399, 0
        %v449 = vsel %vm438, %v400, 0
        %v452 = vsel %vm438, %v401, 0
        %v455 = vsel %vm438, %v402, 0
        %v458 = vsel %vm438, %v403, 0
        %v461 = vsel %vm438, %v404, 0
        %v464 = vsel %vm438, %v405, 0
        %v467 = vsel %vm438, %v406, 0
        %v470 = vsel %vm438, %v407, 0
        %v473 = vsel %vm438, %v408, 0
        %v476 = vsel %vm438, %v409, 0
        %v479 = vsel %vm438, %v410, 0
        %v482 = vsel %vm438, %v411, 0
        %v485 = vsel %vm438, %v412, 0
        %v488 = vsel %vm438, %v413, 0
        %v491 = vsel %vm438, %v414, 0
        %v494 = vsel %vm438, %v415, 0
        %v497 = vsel %vm438, %v416, 0
        %v500 = vsel %vm438, %v417, 0
        %v503 = vsel %vm438, %v418, 0
        %v506 = vsel %vm438, %v419, 0
        %v509 = vsel %vm438, %v420, 0
        %v512 = vsel %vm438, %v421, 0
        %v515 = vsel %vm438, %v422, 0
        %v518 = vsel %vm438, %v423, 0
        %v521 = vsel %vm438, %v424, 0
        %v524 = vsel %vm438, %v425, 0
        %v527 = vsel %vm438, %v426, 0
        %v530 = vsel %vm438, %v427, 0
        %v533 = vsel %vm438, %v428, 0
        %535 = vmatprep.subr.mxu0 0.0
        %536 = vmatpush1.msra.mxu0 %v430
        %537 = vmatprep.subr.mxu0 0.0
        %538 = vmatpush1.msra.mxu0 %v431
        %539 = vmatprep.subr.mxu0 0.0
        %540 = vmatpush1.msra.mxu0 %v432
        %541 = vmatprep.subr.mxu0 0.0
        %542 = vmatpush1.msra.mxu0 %v433
        %543 = vmatprep.subr.mxu0 0.0
        %544 = vmatpush1.msra.mxu0 %v434
        %545 = vmatprep.subr.mxu0 0.0
        %546 = vmatpush1.msra.mxu0 %v435
        %547 = vmatprep.subr.mxu0 0.0
        %548 = vmatpush1.msra.mxu0 %v436
        %549 = vmatprep.subr.mxu0 0.0
        %550 = vmatpush1.msra.mxu0 %v437
        %551 = vmatprep.subr.mxu0 0.0
        %552 = vmatpush1.msra.mxu0 0.0
        %553 = vmatprep.subr.mxu0 0.0
        %554 = vmatpush1.msra.mxu0 0.0
        %555 = vmatprep.subr.mxu0 0.0
        %556 = vmatpush1.msra.mxu0 0.0
        %557 = vmatprep.subr.mxu0 0.0
        %558 = vmatpush1.msra.mxu0 0.0
        %559 = vmatprep.subr.mxu0 0.0
        %560 = vmatpush1.msra.mxu0 0.0
        %561 = vmatprep.subr.mxu0 0.0
        %562 = vmatpush1.msra.mxu0 0.0
        %563 = vmatprep.subr.mxu0 0.0
        %564 = vmatpush1.msra.mxu0 0.0
        %565 = vmatprep.subr.mxu0 0.0
        %566 = vmatpush1.msra.mxu0 0.0
        %567 = vmatprep.subr.mxu0 0.0
        %568 = vmatpush1.msra.mxu0 0.0
        %569 = vmatprep.subr.mxu0 0.0
        %570 = vmatpush1.msra.mxu0 0.0
        %571 = vmatprep.subr.mxu0 0.0
        %572 = vmatpush1.msra.mxu0 0.0
        %573 = vmatprep.subr.mxu0 0.0
        %574 = vmatpush1.msra.mxu0 0.0
        %575 = vmatprep.subr.mxu0 0.0
        %576 = vmatpush1.msra.mxu0 0.0
        %577 = vmatprep.subr.mxu0 0.0
        %578 = vmatpush1.msra.mxu0 0.0
        %579 = vmatprep.subr.mxu0 0.0
        %580 = vmatpush1.msra.mxu0 0.0
        %581 = vmatprep.subr.mxu0 0.0
        %582 = vmatpush1.msra.mxu0 0.0
        %583 = vmatprep.subr.mxu0 0.0
        %584 = vmatpush1.msra.mxu0 0.0
        %585 = vmatprep.subr.mxu0 0.0
        %586 = vmatpush1.msra.mxu0 0.0
        %587 = vmatprep.subr.mxu0 0.0
        %588 = vmatpush1.msra.mxu0 0.0
        %589 = vmatprep.subr.mxu0 0.0
        %590 = vmatpush1.msra.mxu0 0.0
        %591 = vmatprep.subr.mxu0 0.0
        %592 = vmatpush1.msra.mxu0 0.0
        %593 = vmatprep.subr.mxu0 0.0
        %594 = vmatpush1.msra.mxu0 0.0
        %595 = vmatprep.subr.mxu0 0.0
        %596 = vmatpush1.msra.mxu0 0.0
        %597 = vmatprep.subr.mxu0 0.0
        %598 = vmatpush1.msra.mxu0 0.0
        %599 = vmatprep.mubr.f32.mxu0 0.0
        %600 = vmatmul.mubr.f32.gmra.mrb[0].mxu0 %v440
        %v601 = vpop.f32.mrb[0].mxu0
        %v602 = vadd.f32 0.0, %v601
        %v603 = vpop.f32.mrb[0].mxu0
        %604 = vmatprep.mubr.f32.mxu0 0.0
        %605 = vmatmul.mubr.f32.gmra.mrb[0].mxu0 %v443
        %v606 = vpop.f32.mrb[0].mxu0
        %v607 = vadd.f32 0.0, %v606
        %v608 = vpop.f32.mrb[0].mxu0
        %609 = vmatprep.mubr.f32.mxu0 0.0
        %610 = vmatmul.mubr.f32.gmra.mrb[0].mxu0 %v446
        %v611 = vpop.f32.mrb[0].mxu0
        %v612 = vadd.f32 0.0, %v611
        %v613 = vpop.f32.mrb[0].mxu0
        %614 = vmatprep.mubr.f32.mxu0 0.0
        %615 = vmatmul.mubr.f32.gmra.mrb[0].mxu0 %v449
        %v616 = vpop.f32.mrb[0].mxu0
        %v617 = vadd.f32 0.0, %v616
        %v618 = vpop.f32.mrb[0].mxu0
        %619 = vmatprep.mubr.f32.mxu0 0.0
        %620 = vmatmul.mubr.f32.gmra.mrb[0].mxu0 %v452
        %v621 = vpop.f32.mrb[0].mxu0
        %v622 = vadd.f32 0.0, %v621
        %v623 = vpop.f32.mrb[0].mxu0
        %624 = vmatprep.mubr.f32.mxu0 0.0
        %625 = vmatmul.mubr.f32.gmra.mrb[0].mxu0 %v455
        %v626 = vpop.f32.mrb[0].mxu0
        %v627 = vadd.f32 0.0, %v626
        %v628 = vpop.f32.mrb[0].mxu0
        %629 = vmatprep.mubr.f32.mxu0 0.0
        %630 = vmatmul.mubr.f32.gmra.mrb[0].mxu0 %v458
        %v631 = vpop.f32.mrb[0].mxu0
        %v632 = vadd.f32 0.0, %v631
        %v633 = vpop.f32.mrb[0].mxu0
        %634 = vmatprep.mubr.f32.mxu0 0.0
        %635 = vmatmul.mubr.f32.gmra.mrb[0].mxu0 %v461
        %v636 = vpop.f32.mrb[0].mxu0
        %v637 = vadd.f32 0.0, %v636
        %v638 = vpop.f32.mrb[0].mxu0
        %639 = vmatprep.mubr.f32.mxu0 0.0
        %640 = vmatmul.mubr.f32.gmra.mrb[0].mxu0 %v464
        %v641 = vpop.f32.mrb[0].mxu0
        %v642 = vadd.f32 0.0, %v641
        %v643 = vpop.f32.mrb[0].mxu0
        %644 = vmatprep.mubr.f32.mxu0 0.0
        %645 = vmatmul.mubr.f32.gmra.mrb[0].mxu0 %v467
        %v646 = vpop.f32.mrb[0].mxu0
        %v647 = vadd.f32 0.0, %v646
        %v648 = vpop.f32.mrb[0].mxu0
        %649 = vmatprep.mubr.f32.mxu0 0.0
        %650 = vmatmul.mubr.f32.gmra.mrb[0].mxu0 %v470
        %v651 = vpop.f32.mrb[0].mxu0
        %v652 = vadd.f32 0.0, %v651
        %v653 = vpop.f32.mrb[0].mxu0
        %654 = vmatprep.mubr.f32.mxu0 0.0
        %655 = vmatmul.mubr.f32.gmra.mrb[0].mxu0 %v473
        %v656 = vpop.f32.mrb[0].mxu0
        %v657 = vadd.f32 0.0, %v656
        %v658 = vpop.f32.mrb[0].mxu0
        %659 = vmatprep.mubr.f32.mxu0 0.0
        %660 = vmatmul.mubr.f32.gmra.mrb[0].mxu0 %v476
        %v661 = vpop.f32.mrb[0].mxu0
        %v662 = vadd.f32 0.0, %v661
        %v663 = vpop.f32.mrb[0].mxu0
        %664 = vmatprep.mubr.f32.mxu0 0.0
        %665 = vmatmul.mubr.f32.gmra.mrb[0].mxu0 %v479
        %v666 = vpop.f32.mrb[0].mxu0
        %v667 = vadd.f32 0.0, %v666
        %v668 = vpop.f32.mrb[0].mxu0
        %669 = vmatprep.mubr.f32.mxu0 0.0
        %670 = vmatmul.mubr.f32.gmra.mrb[0].mxu0 %v482
        %v671 = vpop.f32.mrb[0].mxu0
        %v672 = vadd.f32 0.0, %v671
        %v673 = vpop.f32.mrb[0].mxu0
        %674 = vmatprep.mubr.f32.mxu0 0.0
        %675 = vmatmul.mubr.f32.gmra.mrb[0].mxu0 %v485
        %v676 = vpop.f32.mrb[0].mxu0
        %v677 = vadd.f32 0.0, %v676
        %v678 = vpop.f32.mrb[0].mxu0
        %679 = vmatprep.mubr.f32.mxu0 0.0
        %680 = vmatmul.mubr.f32.gmra.mrb[0].mxu0 %v488
        %v681 = vpop.f32.mrb[0].mxu0
        %v682 = vadd.f32 0.0, %v681
        %v683 = vpop.f32.mrb[0].mxu0
        %684 = vmatprep.mubr.f32.mxu0 0.0
        %685 = vmatmul.mubr.f32.gmra.mrb[0].mxu0 %v491
        %v686 = vpop.f32.mrb[0].mxu0
        %v687 = vadd.f32 0.0, %v686
        %v688 = vpop.f32.mrb[0].mxu0
        %689 = vmatprep.mubr.f32.mxu0 0.0
        %690 = vmatmul.mubr.f32.gmra.mrb[0].mxu0 %v494
        %v691 = vpop.f32.mrb[0].mxu0
        %v692 = vadd.f32 0.0, %v691
        %v693 = vpop.f32.mrb[0].mxu0
        %694 = vmatprep.mubr.f32.mxu0 0.0
        %695 = vmatmul.mubr.f32.gmra.mrb[0].mxu0 %v497
        %v696 = vpop.f32.mrb[0].mxu0
        %v697 = vadd.f32 0.0, %v696
        %v698 = vpop.f32.mrb[0].mxu0
        %699 = vmatprep.mubr.f32.mxu0 0.0
        %700 = vmatmul.mubr.f32.gmra.mrb[0].mxu0 %v500
        %v701 = vpop.f32.mrb[0].mxu0
        %v702 = vadd.f32 0.0, %v701
        %v703 = vpop.f32.mrb[0].mxu0
        %704 = vmatprep.mubr.f32.mxu0 0.0
        %705 = vmatmul.mubr.f32.gmra.mrb[0].mxu0 %v503
        %v706 = vpop.f32.mrb[0].mxu0
        %v707 = vadd.f32 0.0, %v706
        %v708 = vpop.f32.mrb[0].mxu0
        %709 = vmatprep.mubr.f32.mxu0 0.0
        %710 = vmatmul.mubr.f32.gmra.mrb[0].mxu0 %v506
        %v711 = vpop.f32.mrb[0].mxu0
        %v712 = vadd.f32 0.0, %v711
        %v713 = vpop.f32.mrb[0].mxu0
        %714 = vmatprep.mubr.f32.mxu0 0.0
        %715 = vmatmul.mubr.f32.gmra.mrb[0].mxu0 %v509
        %v716 = vpop.f32.mrb[0].mxu0
        %v717 = vadd.f32 0.0, %v716
        %v718 = vpop.f32.mrb[0].mxu0
        %719 = vmatprep.mubr.f32.mxu0 0.0
        %720 = vmatmul.mubr.f32.gmra.mrb[0].mxu0 %v512
        %v721 = vpop.f32.mrb[0].mxu0
        %v722 = vadd.f32 0.0, %v721
        %v723 = vpop.f32.mrb[0].mxu0
        %724 = vmatprep.mubr.f32.mxu0 0.0
        %725 = vmatmul.mubr.f32.gmra.mrb[0].mxu0 %v515
        %v726 = vpop.f32.mrb[0].mxu0
        %v727 = vadd.f32 0.0, %v726
        %v728 = vpop.f32.mrb[0].mxu0
        %729 = vmatprep.mubr.f32.mxu0 0.0
        %730 = vmatmul.mubr.f32.gmra.mrb[0].mxu0 %v518
        %v731 = vpop.f32.mrb[0].mxu0
        %v732 = vadd.f32 0.0, %v731
        %v733 = vpop.f32.mrb[0].mxu0
        %734 = vmatprep.mubr.f32.mxu0 0.0
        %735 = vmatmul.mubr.f32.gmra.mrb[0].mxu0 %v521
        %v736 = vpop.f32.mrb[0].mxu0
        %v737 = vadd.f32 0.0, %v736
        %v738 = vpop.f32.mrb[0].mxu0
        %739 = vmatprep.mubr.f32.mxu0 0.0
        %740 = vmatmul.mubr.f32.gmra.mrb[0].mxu0 %v524
        %v741 = vpop.f32.mrb[0].mxu0
        %v742 = vadd.f32 0.0, %v741
        %v743 = vpop.f32.mrb[0].mxu0
        %744 = vmatprep.mubr.f32.mxu0 0.0
        %745 = vmatmul.mubr.f32.gmra.mrb[0].mxu0 %v527
        %v746 = vpop.f32.mrb[0].mxu0
        %v747 = vadd.f32 0.0, %v746
        %v748 = vpop.f32.mrb[0].mxu0
        %749 = vmatprep.mubr.f32.mxu0 0.0
        %750 = vmatmul.mubr.f32.gmra.mrb[0].mxu0 %v530
        %v751 = vpop.f32.mrb[0].mxu0
        %v752 = vadd.f32 0.0, %v751
        %v753 = vpop.f32.mrb[0].mxu0
        %754 = vmatprep.mubr.f32.mxu0 0.0
        %755 = vmatmul.mubr.f32.gmra.mrb[0].mxu0 %v533
        %v756 = vpop.f32.mrb[0].mxu0
        %v757 = vadd.f32 0.0, %v756
        %v758 = vpop.f32.mrb[0].mxu0
        %759 = vdwg.mxu0
        %v761 = vsel %vm438, %v357, 0
        %v764 = vsel %vm438, %v358, 0
        %v767 = vsel %vm438, %v359, 0
        %v770 = vsel %vm438, %v360, 0
        %v773 = vsel %vm438, %v361, 0
        %v776 = vsel %vm438, %v362, 0
        %v779 = vsel %vm438, %v363, 0
        %v782 = vsel %vm438, %v364, 0
        %v785 = vsel %vm438, %v365, 0
        %v788 = vsel %vm438, %v366, 0
        %v791 = vsel %vm438, %v367, 0
        %v794 = vsel %vm438, %v368, 0
        %v797 = vsel %vm438, %v369, 0
        %v800 = vsel %vm438, %v370, 0
        %v803 = vsel %vm438, %v371, 0
        %v806 = vsel %vm438, %v372, 0
        %v809 = vsel %vm438, %v373, 0
        %v812 = vsel %vm438, %v374, 0
        %v815 = vsel %vm438, %v375, 0
        %v818 = vsel %vm438, %v376, 0
        %v821 = vsel %vm438, %v377, 0
        %v824 = vsel %vm438, %v378, 0
        %v827 = vsel %vm438, %v379, 0
        %v830 = vsel %vm438, %v380, 0
        %v833 = vsel %vm438, %v381, 0
        %v836 = vsel %vm438, %v382, 0
        %v839 = vsel %vm438, %v383, 0
        %v842 = vsel %vm438, %v384, 0
        %v845 = vsel %vm438, %v385, 0
        %v848 = vsel %vm438, %v386, 0
        %v851 = vsel %vm438, %v387, 0
        %v854 = vsel %vm438, %v388, 0
        %856 = vmatprep.subr.mxu0 0.0
        %857 = vmatpush1.msra.mxu0 %v389
        %858 = vmatprep.subr.mxu0 0.0
        %859 = vmatpush1.msra.mxu0 %v390
        %860 = vmatprep.subr.mxu0 0.0
        %861 = vmatpush1.msra.mxu0 %v391
        %862 = vmatprep.subr.mxu0 0.0
        %863 = vmatpush1.msra.mxu0 %v392
        %864 = vmatprep.subr.mxu0 0.0
        %865 = vmatpush1.msra.mxu0 %v393
        %866 = vmatprep.subr.mxu0 0.0
        %867 = vmatpush1.msra.mxu0 %v394
        %868 = vmatprep.subr.mxu0 0.0
        %869 = vmatpush1.msra.mxu0 %v395
        %870 = vmatprep.subr.mxu0 0.0
        %871 = vmatpush1.msra.mxu0 %v396
        %872 = vmatprep.subr.mxu0 0.0
        %873 = vmatpush1.msra.mxu0 0.0
        %874 = vmatprep.subr.mxu0 0.0
        %875 = vmatpush1.msra.mxu0 0.0
        %876 = vmatprep.subr.mxu0 0.0
        %877 = vmatpush1.msra.mxu0 0.0
        %878 = vmatprep.subr.mxu0 0.0
        %879 = vmatpush1.msra.mxu0 0.0
        %880 = vmatprep.subr.mxu0 0.0
        %881 = vmatpush1.msra.mxu0 0.0
        %882 = vmatprep.subr.mxu0 0.0
        %883 = vmatpush1.msra.mxu0 0.0
        %884 = vmatprep.subr.mxu0 0.0
        %885 = vmatpush1.msra.mxu0 0.0
        %886 = vmatprep.subr.mxu0 0.0
        %887 = vmatpush1.msra.mxu0 0.0
        %888 = vmatprep.subr.mxu0 0.0
        %889 = vmatpush1.msra.mxu0 0.0
        %890 = vmatprep.subr.mxu0 0.0
        %891 = vmatpush1.msra.mxu0 0.0
        %892 = vmatprep.subr.mxu0 0.0
        %893 = vmatpush1.msra.mxu0 0.0
        %894 = vmatprep.subr.mxu0 0.0
        %895 = vmatpush1.msra.mxu0 0.0
        %896 = vmatprep.subr.mxu0 0.0
        %897 = vmatpush1.msra.mxu0 0.0
        %898 = vmatprep.subr.mxu0 0.0
        %899 = vmatpush1.msra.mxu0 0.0
        %900 = vmatprep.subr.mxu0 0.0
        %901 = vmatpush1.msra.mxu0 0.0
        %902 = vmatprep.subr.mxu0 0.0
        %903 = vmatpush1.msra.mxu0 0.0
        %904 = vmatprep.subr.mxu0 0.0
        %905 = vmatpush1.msra.mxu0 0.0
        %906 = vmatprep.subr.mxu0 0.0
        %907 = vmatpush1.msra.mxu0 0.0
        %908 = vmatprep.subr.mxu0 0.0
        %909 = vmatpush1.msra.mxu0 0.0
        %910 = vmatprep.subr.mxu0 0.0
        %911 = vmatpush1.msra.mxu0 0.0
        %912 = vmatprep.subr.mxu0 0.0
        %913 = vmatpush1.msra.mxu0 0.0
        %914 = vmatprep.subr.mxu0 0.0
        %915 = vmatpush1.msra.mxu0 0.0
        %916 = vmatprep.subr.mxu0 0.0
        %917 = vmatpush1.msra.mxu0 0.0
        %918 = vmatprep.subr.mxu0 0.0
        %919 = vmatpush1.msra.mxu0 0.0
        %920 = vmatprep.mubr.f32.mxu0 0.0
        %921 = vmatmul.mubr.f32.gmra.mrb[0].mxu0 %v761
        %v922 = vpop.f32.mrb[0].mxu0
        %v923 = vadd.f32 %v602, %v922
        %v924 = vpop.f32.mrb[0].mxu0
        %925 = vmatprep.mubr.f32.mxu0 0.0
        %926 = vmatmul.mubr.f32.gmra.mrb[0].mxu0 %v764
        %v927 = vpop.f32.mrb[0].mxu0
        %v928 = vadd.f32 %v607, %v927
        %v929 = vpop.f32.mrb[0].mxu0
        %930 = vmatprep.mubr.f32.mxu0 0.0
        %931 = vmatmul.mubr.f32.gmra.mrb[0].mxu0 %v767
        %v932 = vpop.f32.mrb[0].mxu0
        %v933 = vadd.f32 %v612, %v932
        %v934 = vpop.f32.mrb[0].mxu0
        %935 = vmatprep.mubr.f32.mxu0 0.0
        %936 = vmatmul.mubr.f32.gmra.mrb[0].mxu0 %v770
        %v937 = vpop.f32.mrb[0].mxu0
        %v938 = vadd.f32 %v617, %v937
        %v939 = vpop.f32.mrb[0].mxu0
        %940 = vmatprep.mubr.f32.mxu0 0.0
        %941 = vmatmul.mubr.f32.gmra.mrb[0].mxu0 %v773
        %v942 = vpop.f32.mrb[0].mxu0
        %v943 = vadd.f32 %v622, %v942
        %v944 = vpop.f32.mrb[0].mxu0
        %945 = vmatprep.mubr.f32.mxu0 0.0
        %946 = vmatmul.mubr.f32.gmra.mrb[0].mxu0 %v776
        %v947 = vpop.f32.mrb[0].mxu0
        %v948 = vadd.f32 %v627, %v947
        %v949 = vpop.f32.mrb[0].mxu0
        %950 = vmatprep.mubr.f32.mxu0 0.0
        %951 = vmatmul.mubr.f32.gmra.mrb[0].mxu0 %v779
        %v952 = vpop.f32.mrb[0].mxu0
        %v953 = vadd.f32 %v632, %v952
        %v954 = vpop.f32.mrb[0].mxu0
        %955 = vmatprep.mubr.f32.mxu0 0.0
        %956 = vmatmul.mubr.f32.gmra.mrb[0].mxu0 %v782
        %v957 = vpop.f32.mrb[0].mxu0
        %v958 = vadd.f32 %v637, %v957
        %v959 = vpop.f32.mrb[0].mxu0
        %960 = vmatprep.mubr.f32.mxu0 0.0
        %961 = vmatmul.mubr.f32.gmra.mrb[0].mxu0 %v785
        %v962 = vpop.f32.mrb[0].mxu0
        %v963 = vadd.f32 %v642, %v962
        %v964 = vpop.f32.mrb[0].mxu0
        %965 = vmatprep.mubr.f32.mxu0 0.0
        %966 = vmatmul.mubr.f32.gmra.mrb[0].mxu0 %v788
        %v967 = vpop.f32.mrb[0].mxu0
        %v968 = vadd.f32 %v647, %v967
        %v969 = vpop.f32.mrb[0].mxu0
        %970 = vmatprep.mubr.f32.mxu0 0.0
        %971 = vmatmul.mubr.f32.gmra.mrb[0].mxu0 %v791
        %v972 = vpop.f32.mrb[0].mxu0
        %v973 = vadd.f32 %v652, %v972
        %v974 = vpop.f32.mrb[0].mxu0
        %975 = vmatprep.mubr.f32.mxu0 0.0
        %976 = vmatmul.mubr.f32.gmra.mrb[0].mxu0 %v794
        %v977 = vpop.f32.mrb[0].mxu0
        %v978 = vadd.f32 %v657, %v977
        %v979 = vpop.f32.mrb[0].mxu0
        %980 = vmatprep.mubr.f32.mxu0 0.0
        %981 = vmatmul.mubr.f32.gmra.mrb[0].mxu0 %v797
        %v982 = vpop.f32.mrb[0].mxu0
        %v983 = vadd.f32 %v662, %v982
        %v984 = vpop.f32.mrb[0].mxu0
        %985 = vmatprep.mubr.f32.mxu0 0.0
        %986 = vmatmul.mubr.f32.gmra.mrb[0].mxu0 %v800
        %v987 = vpop.f32.mrb[0].mxu0
        %v988 = vadd.f32 %v667, %v987
        %v989 = vpop.f32.mrb[0].mxu0
        %990 = vmatprep.mubr.f32.mxu0 0.0
        %991 = vmatmul.mubr.f32.gmra.mrb[0].mxu0 %v803
        %v992 = vpop.f32.mrb[0].mxu0
        %v993 = vadd.f32 %v672, %v992
        %v994 = vpop.f32.mrb[0].mxu0
        %995 = vmatprep.mubr.f32.mxu0 0.0
        %996 = vmatmul.mubr.f32.gmra.mrb[0].mxu0 %v806
        %v997 = vpop.f32.mrb[0].mxu0
        %v998 = vadd.f32 %v677, %v997
        %v999 = vpop.f32.mrb[0].mxu0
        %1000 = vmatprep.mubr.f32.mxu0 0.0
        %1001 = vmatmul.mubr.f32.gmra.mrb[0].mxu0 %v809
        %v1002 = vpop.f32.mrb[0].mxu0
        %v1003 = vadd.f32 %v682, %v1002
        %v1004 = vpop.f32.mrb[0].mxu0
        %1005 = vmatprep.mubr.f32.mxu0 0.0
        %1006 = vmatmul.mubr.f32.gmra.mrb[0].mxu0 %v812
        %v1007 = vpop.f32.mrb[0].mxu0
        %v1008 = vadd.f32 %v687, %v1007
        %v1009 = vpop.f32.mrb[0].mxu0
        %1010 = vmatprep.mubr.f32.mxu0 0.0
        %1011 = vmatmul.mubr.f32.gmra.mrb[0].mxu0 %v815
        %v1012 = vpop.f32.mrb[0].mxu0
        %v1013 = vadd.f32 %v692, %v1012
        %v1014 = vpop.f32.mrb[0].mxu0
        %1015 = vmatprep.mubr.f32.mxu0 0.0
        %1016 = vmatmul.mubr.f32.gmra.mrb[0].mxu0 %v818
        %v1017 = vpop.f32.mrb[0].mxu0
        %v1018 = vadd.f32 %v697, %v1017
        %v1019 = vpop.f32.mrb[0].mxu0
        %1020 = vmatprep.mubr.f32.mxu0 0.0
        %1021 = vmatmul.mubr.f32.gmra.mrb[0].mxu0 %v821
        %v1022 = vpop.f32.mrb[0].mxu0
        %v1023 = vadd.f32 %v702, %v1022
        %v1024 = vpop.f32.mrb[0].mxu0
        %1025 = vmatprep.mubr.f32.mxu0 0.0
        %1026 = vmatmul.mubr.f32.gmra.mrb[0].mxu0 %v824
        %v1027 = vpop.f32.mrb[0].mxu0
        %v1028 = vadd.f32 %v707, %v1027
        %v1029 = vpop.f32.mrb[0].mxu0
        %1030 = vmatprep.mubr.f32.mxu0 0.0
        %1031 = vmatmul.mubr.f32.gmra.mrb[0].mxu0 %v827
        %v1032 = vpop.f32.mrb[0].mxu0
        %v1033 = vadd.f32 %v712, %v1032
        %v1034 = vpop.f32.mrb[0].mxu0
        %1035 = vmatprep.mubr.f32.mxu0 0.0
        %1036 = vmatmul.mubr.f32.gmra.mrb[0].mxu0 %v830
        %v1037 = vpop.f32.mrb[0].mxu0
        %v1038 = vadd.f32 %v717, %v1037
        %v1039 = vpop.f32.mrb[0].mxu0
        %1040 = vmatprep.mubr.f32.mxu0 0.0
        %1041 = vmatmul.mubr.f32.gmra.mrb[0].mxu0 %v833
        %v1042 = vpop.f32.mrb[0].mxu0
        %v1043 = vadd.f32 %v722, %v1042
        %v1044 = vpop.f32.mrb[0].mxu0
        %1045 = vmatprep.mubr.f32.mxu0 0.0
        %1046 = vmatmul.mubr.f32.gmra.mrb[0].mxu0 %v836
        %v1047 = vpop.f32.mrb[0].mxu0
        %v1048 = vadd.f32 %v727, %v1047
        %v1049 = vpop.f32.mrb[0].mxu0
        %1050 = vmatprep.mubr.f32.mxu0 0.0
        %1051 = vmatmul.mubr.f32.gmra.mrb[0].mxu0 %v839
        %v1052 = vpop.f32.mrb[0].mxu0
        %v1053 = vadd.f32 %v732, %v1052
        %v1054 = vpop.f32.mrb[0].mxu0
        %1055 = vmatprep.mubr.f32.mxu0 0.0
        %1056 = vmatmul.mubr.f32.gmra.mrb[0].mxu0 %v842
        %v1057 = vpop.f32.mrb[0].mxu0
        %v1058 = vadd.f32 %v737, %v1057
        %v1059 = vpop.f32.mrb[0].mxu0
        %1060 = vmatprep.mubr.f32.mxu0 0.0
        %1061 = vmatmul.mubr.f32.gmra.mrb[0].mxu0 %v845
        %v1062 = vpop.f32.mrb[0].mxu0
        %v1063 = vadd.f32 %v742, %v1062
        %v1064 = vpop.f32.mrb[0].mxu0
        %1065 = vmatprep.mubr.f32.mxu0 0.0
        %1066 = vmatmul.mubr.f32.gmra.mrb[0].mxu0 %v848
        %v1067 = vpop.f32.mrb[0].mxu0
        %v1068 = vadd.f32 %v747, %v1067
        %v1069 = vpop.f32.mrb[0].mxu0
        %1070 = vmatprep.mubr.f32.mxu0 0.0
        %1071 = vmatmul.mubr.f32.gmra.mrb[0].mxu0 %v851
        %v1072 = vpop.f32.mrb[0].mxu0
        %v1073 = vadd.f32 %v752, %v1072
        %v1074 = vpop.f32.mrb[0].mxu0
        %1075 = vmatprep.mubr.f32.mxu0 0.0
        %1076 = vmatmul.mubr.f32.gmra.mrb[0].mxu0 %v854
        %v1077 = vpop.f32.mrb[0].mxu0
        %v1078 = vadd.f32 %v757, %v1077
        %v1079 = vpop.f32.mrb[0].mxu0
        %1080 = vdwg.mxu0
        %s1081 = scalar_lea.vmem %s356, 24
        %v1082 = vld [vmem:[%s1081] sm:$0xff]
        %v1083 = vld [vmem:[%s1081 + $0x8] sm:$0xff]
        %v1084 = vld [vmem:[%s1081 + $0x18] sm:$0xff]
        %v1085 = vld [vmem:[%s1081 + $0x20] sm:$0xff]
        %v1086 = vld [vmem:[%s1081 + $0x30] sm:$0xff]
        %v1087 = vld [vmem:[%s1081 + $0x38] sm:$0xff]
        %v1088 = vld [vmem:[%s1081 + $0x48] sm:$0xff]
        %v1089 = vld [vmem:[%s1081 + $0x50] sm:$0xff]
        %v1090 = vld [vmem:[%s1081 + $0x60] sm:$0xff]
        %v1091 = vld [vmem:[%s1081 + $0x68] sm:$0xff]
        %v1092 = vld [vmem:[%s1081 + $0x78] sm:$0xff]
        %v1093 = vld [vmem:[%s1081 + $0x80] sm:$0xff]
        %v1094 = vld [vmem:[%s1081 + $0x90] sm:$0xff]
        %v1095 = vld [vmem:[%s1081 + $0x98] sm:$0xff]
        %v1096 = vld [vmem:[%s1081 + $0xa8] sm:$0xff]
        %v1097 = vld [vmem:[%s1081 + $0xb0] sm:$0xff]
        %v1098 = vld [vmem:[%s1081 + $0xc0] sm:$0xff]
        %v1099 = vld [vmem:[%s1081 + $0xc8] sm:$0xff]
        %v1100 = vld [vmem:[%s1081 + $0xd8] sm:$0xff]
        %v1101 = vld [vmem:[%s1081 + $0xe0] sm:$0xff]
        %v1102 = vld [vmem:[%s1081 + $0xf0] sm:$0xff]
        %v1103 = vld [vmem:[%s1081 + $0xf8] sm:$0xff]
        %v1104 = vld [vmem:[%s1081 + $0x108] sm:$0xff]
        %v1105 = vld [vmem:[%s1081 + $0x110] sm:$0xff]
        %v1106 = vld [vmem:[%s1081 + $0x120] sm:$0xff]
        %v1107 = vld [vmem:[%s1081 + $0x128] sm:$0xff]
        %v1108 = vld [vmem:[%s1081 + $0x138] sm:$0xff]
        %v1109 = vld [vmem:[%s1081 + $0x140] sm:$0xff]
        %v1110 = vld [vmem:[%s1081 + $0x150] sm:$0xff]
        %v1111 = vld [vmem:[%s1081 + $0x158] sm:$0xff]
        %v1112 = vld [vmem:[%s1081 + $0x168] sm:$0xff]
        %v1113 = vld [vmem:[%s1081 + $0x170] sm:$0xff]
        %s1114 = scalar_lea.vmem %s1, 128
        %v1115 = vld [vmem:[%s1114] sm:$0xff]
        %v1116 = vld [vmem:[%s1114 + $0x8] sm:$0xff]
        %v1117 = vld [vmem:[%s1114 + $0x10] sm:$0xff]
        %v1118 = vld [vmem:[%s1114 + $0x18] sm:$0xff]
        %v1119 = vld [vmem:[%s1114 + $0x20] sm:$0xff]
        %v1120 = vld [vmem:[%s1114 + $0x28] sm:$0xff]
        %v1121 = vld [vmem:[%s1114 + $0x30] sm:$0xff]
        %v1122 = vld [vmem:[%s1114 + $0x38] sm:$0xff]
        %v1124 = vsel %vm438, %v1082, 0
        %v1127 = vsel %vm438, %v1083, 0
        %v1130 = vsel %vm438, %v1084, 0
        %v1133 = vsel %vm438, %v1085, 0
        %v1136 = vsel %vm438, %v1086, 0
        %v1139 = vsel %vm438, %v1087, 0
        %v1142 = vsel %vm438, %v1088, 0
        %v1145 = vsel %vm438, %v1089, 0
        %v1148 = vsel %vm438, %v1090, 0
        %v1151 = vsel %vm438, %v1091, 0
        %v1154 = vsel %vm438, %v1092, 0
        %v1157 = vsel %vm438, %v1093, 0
        %v1160 = vsel %vm438, %v1094, 0
        %v1163 = vsel %vm438, %v1095, 0
        %v1166 = vsel %vm438, %v1096, 0
        %v1169 = vsel %vm438, %v1097, 0
        %v1172 = vsel %vm438, %v1098, 0
        %v1175 = vsel %vm438, %v1099, 0
        %v1178 = vsel %vm438, %v1100, 0
        %v1181 = vsel %vm438, %v1101, 0
        %v1184 = vsel %vm438, %v1102, 0
        %v1187 = vsel %vm438, %v1103, 0
        %v1190 = vsel %vm438, %v1104, 0
        %v1193 = vsel %vm438, %v1105, 0
        %v1196 = vsel %vm438, %v1106, 0
        %v1199 = vsel %vm438, %v1107, 0
        %v1202 = vsel %vm438, %v1108, 0
        %v1205 = vsel %vm438, %v1109, 0
        %v1208 = vsel %vm438, %v1110, 0
        %v1211 = vsel %vm438, %v1111, 0
        %v1214 = vsel %vm438, %v1112, 0
        %v1217 = vsel %vm438, %v1113, 0
        %1219 = vmatprep.subr.mxu0 0.0
        %1220 = vmatpush1.msra.mxu0 %v1115
        %1221 = vmatprep.subr.mxu0 0.0
        %1222 = vmatpush1.msra.mxu0 %v1116
        %1223 = vmatprep.subr.mxu0 0.0
        %1224 = vmatpush1.msra.mxu0 %v1117
        %1225 = vmatprep.subr.mxu0 0.0
        %1226 = vmatpush1.msra.mxu0 %v1118
        %1227 = vmatprep.subr.mxu0 0.0
        %1228 = vmatpush1.msra.mxu0 %v1119
        %1229 = vmatprep.subr.mxu0 0.0
        %1230 = vmatpush1.msra.mxu0 %v1120
        %1231 = vmatprep.subr.mxu0 0.0
        %1232 = vmatpush1.msra.mxu0 %v1121
        %1233 = vmatprep.subr.mxu0 0.0
        %1234 = vmatpush1.msra.mxu0 %v1122
        %1235 = vmatprep.subr.mxu0 0.0
        %1236 = vmatpush1.msra.mxu0 0.0
        %1237 = vmatprep.subr.mxu0 0.0
        %1238 = vmatpush1.msra.mxu0 0.0
        %1239 = vmatprep.subr.mxu0 0.0
        %1240 = vmatpush1.msra.mxu0 0.0
        %1241 = vmatprep.subr.mxu0 0.0
        %1242 = vmatpush1.msra.mxu0 0.0
        %1243 = vmatprep.subr.mxu0 0.0
        %1244 = vmatpush1.msra.mxu0 0.0
        %1245 = vmatprep.subr.mxu0 0.0
        %1246 = vmatpush1.msra.mxu0 0.0
        %1247 = vmatprep.subr.mxu0 0.0
        %1248 = vmatpush1.msra.mxu0 0.0
        %1249 = vmatprep.subr.mxu0 0.0
        %1250 = vmatpush1.msra.mxu0 0.0
        %1251 = vmatprep.subr.mxu0 0.0
        %1252 = vmatpush1.msra.mxu0 0.0
        %1253 = vmatprep.subr.mxu0 0.0
        %1254 = vmatpush1.msra.mxu0 0.0
        %1255 = vmatprep.subr.mxu0 0.0
        %1256 = vmatpush1.msra.mxu0 0.0
        %1257 = vmatprep.subr.mxu0 0.0
        %1258 = vmatpush1.msra.mxu0 0.0
        %1259 = vmatprep.subr.mxu0 0.0
        %1260 = vmatpush1.msra.mxu0 0.0
        %1261 = vmatprep.subr.mxu0 0.0
        %1262 = vmatpush1.msra.mxu0 0.0
        %1263 = vmatprep.subr.mxu0 0.0
        %1264 = vmatpush1.msra.mxu0 0.0
        %1265 = vmatprep.subr.mxu0 0.0
        %1266 = vmatpush1.msra.mxu0 0.0
        %1267 = vmatprep.subr.mxu0 0.0
        %1268 = vmatpush1.msra.mxu0 0.0
        %1269 = vmatprep.subr.mxu0 0.0
        %1270 = vmatpush1.msra.mxu0 0.0
        %1271 = vmatprep.subr.mxu0 0.0
        %1272 = vmatpush1.msra.mxu0 0.0
        %1273 = vmatprep.subr.mxu0 0.0
        %1274 = vmatpush1.msra.mxu0 0.0
        %1275 = vmatprep.subr.mxu0 0.0
        %1276 = vmatpush1.msra.mxu0 0.0
        %1277 = vmatprep.subr.mxu0 0.0
        %1278 = vmatpush1.msra.mxu0 0.0
        %1279 = vmatprep.subr.mxu0 0.0
        %1280 = vmatpush1.msra.mxu0 0.0
        %1281 = vmatprep.subr.mxu0 0.0
        %1282 = vmatpush1.msra.mxu0 0.0
        %1283 = vmatprep.mubr.f32.mxu0 0.0
        %1284 = vmatmul.mubr.f32.gmra.mrb[0].mxu0 %v1124
        %v1285 = vpop.f32.mrb[0].mxu0
        %v1286 = vadd.f32 0.0, %v1285
        %v1287 = vpop.f32.mrb[0].mxu0
        %1288 = vmatprep.mubr.f32.mxu0 0.0
        %1289 = vmatmul.mubr.f32.gmra.mrb[0].mxu0 %v1127
        %v1290 = vpop.f32.mrb[0].mxu0
        %v1291 = vadd.f32 0.0, %v1290
        %v1292 = vpop.f32.mrb[0].mxu0
        %1293 = vmatprep.mubr.f32.mxu0 0.0
        %1294 = vmatmul.mubr.f32.gmra.mrb[0].mxu0 %v1130
        %v1295 = vpop.f32.mrb[0].mxu0
        %v1296 = vadd.f32 0.0, %v1295
        %v1297 = vpop.f32.mrb[0].mxu0
        %1298 = vmatprep.mubr.f32.mxu0 0.0
        %1299 = vmatmul.mubr.f32.gmra.mrb[0].mxu0 %v1133
        %v1300 = vpop.f32.mrb[0].mxu0
        %v1301 = vadd.f32 0.0, %v1300
        %v1302 = vpop.f32.mrb[0].mxu0
        %1303 = vmatprep.mubr.f32.mxu0 0.0
        %1304 = vmatmul.mubr.f32.gmra.mrb[0].mxu0 %v1136
        %v1305 = vpop.f32.mrb[0].mxu0
        %v1306 = vadd.f32 0.0, %v1305
        %v1307 = vpop.f32.mrb[0].mxu0
        %1308 = vmatprep.mubr.f32.mxu0 0.0
        %1309 = vmatmul.mubr.f32.gmra.mrb[0].mxu0 %v1139
        %v1310 = vpop.f32.mrb[0].mxu0
        %v1311 = vadd.f32 0.0, %v1310
        %v1312 = vpop.f32.mrb[0].mxu0
        %1313 = vmatprep.mubr.f32.mxu0 0.0
        %1314 = vmatmul.mubr.f32.gmra.mrb[0].mxu0 %v1142
        %v1315 = vpop.f32.mrb[0].mxu0
        %v1316 = vadd.f32 0.0, %v1315
        %v1317 = vpop.f32.mrb[0].mxu0
        %1318 = vmatprep.mubr.f32.mxu0 0.0
        %1319 = vmatmul.mubr.f32.gmra.mrb[0].mxu0 %v1145
        %v1320 = vpop.f32.mrb[0].mxu0
        %v1321 = vadd.f32 0.0, %v1320
        %v1322 = vpop.f32.mrb[0].mxu0
        %1323 = vmatprep.mubr.f32.mxu0 0.0
        %1324 = vmatmul.mubr.f32.gmra.mrb[0].mxu0 %v1148
        %v1325 = vpop.f32.mrb[0].mxu0
        %v1326 = vadd.f32 0.0, %v1325
        %v1327 = vpop.f32.mrb[0].mxu0
        %1328 = vmatprep.mubr.f32.mxu0 0.0
        %1329 = vmatmul.mubr.f32.gmra.mrb[0].mxu0 %v1151
        %v1330 = vpop.f32.mrb[0].mxu0
        %v1331 = vadd.f32 0.0, %v1330
        %v1332 = vpop.f32.mrb[0].mxu0
        %1333 = vmatprep.mubr.f32.mxu0 0.0
        %1334 = vmatmul.mubr.f32.gmra.mrb[0].mxu0 %v1154
        %v1335 = vpop.f32.mrb[0].mxu0
        %v1336 = vadd.f32 0.0, %v1335
        %v1337 = vpop.f32.mrb[0].mxu0
        %1338 = vmatprep.mubr.f32.mxu0 0.0
        %1339 = vmatmul.mubr.f32.gmra.mrb[0].mxu0 %v1157
        %v1340 = vpop.f32.mrb[0].mxu0
        %v1341 = vadd.f32 0.0, %v1340
        %v1342 = vpop.f32.mrb[0].mxu0
        %1343 = vmatprep.mubr.f32.mxu0 0.0
        %1344 = vmatmul.mubr.f32.gmra.mrb[0].mxu0 %v1160
        %v1345 = vpop.f32.mrb[0].mxu0
        %v1346 = vadd.f32 0.0, %v1345
        %v1347 = vpop.f32.mrb[0].mxu0
        %1348 = vmatprep.mubr.f32.mxu0 0.0
        %1349 = vmatmul.mubr.f32.gmra.mrb[0].mxu0 %v1163
        %v1350 = vpop.f32.mrb[0].mxu0
        %v1351 = vadd.f32 0.0, %v1350
        %v1352 = vpop.f32.mrb[0].mxu0
        %1353 = vmatprep.mubr.f32.mxu0 0.0
        %1354 = vmatmul.mubr.f32.gmra.mrb[0].mxu0 %v1166
        %v1355 = vpop.f32.mrb[0].mxu0
        %v1356 = vadd.f32 0.0, %v1355
        %v1357 = vpop.f32.mrb[0].mxu0
        %1358 = vmatprep.mubr.f32.mxu0 0.0
        %1359 = vmatmul.mubr.f32.gmra.mrb[0].mxu0 %v1169
        %v1360 = vpop.f32.mrb[0].mxu0
        %v1361 = vadd.f32 0.0, %v1360
        %v1362 = vpop.f32.mrb[0].mxu0
        %1363 = vmatprep.mubr.f32.mxu0 0.0
        %1364 = vmatmul.mubr.f32.gmra.mrb[0].mxu0 %v1172
        %v1365 = vpop.f32.mrb[0].mxu0
        %v1366 = vadd.f32 0.0, %v1365
        %v1367 = vpop.f32.mrb[0].mxu0
        %1368 = vmatprep.mubr.f32.mxu0 0.0
        %1369 = vmatmul.mubr.f32.gmra.mrb[0].mxu0 %v1175
        %v1370 = vpop.f32.mrb[0].mxu0
        %v1371 = vadd.f32 0.0, %v1370
        %v1372 = vpop.f32.mrb[0].mxu0
        %1373 = vmatprep.mubr.f32.mxu0 0.0
        %1374 = vmatmul.mubr.f32.gmra.mrb[0].mxu0 %v1178
        %v1375 = vpop.f32.mrb[0].mxu0
        %v1376 = vadd.f32 0.0, %v1375
        %v1377 = vpop.f32.mrb[0].mxu0
        %1378 = vmatprep.mubr.f32.mxu0 0.0
        %1379 = vmatmul.mubr.f32.gmra.mrb[0].mxu0 %v1181
        %v1380 = vpop.f32.mrb[0].mxu0
        %v1381 = vadd.f32 0.0, %v1380
        %v1382 = vpop.f32.mrb[0].mxu0
        %1383 = vmatprep.mubr.f32.mxu0 0.0
        %1384 = vmatmul.mubr.f32.gmra.mrb[0].mxu0 %v1184
        %v1385 = vpop.f32.mrb[0].mxu0
        %v1386 = vadd.f32 0.0, %v1385
        %v1387 = vpop.f32.mrb[0].mxu0
        %1388 = vmatprep.mubr.f32.mxu0 0.0
        %1389 = vmatmul.mubr.f32.gmra.mrb[0].mxu0 %v1187
        %v1390 = vpop.f32.mrb[0].mxu0
        %v1391 = vadd.f32 0.0, %v1390
        %v1392 = vpop.f32.mrb[0].mxu0
        %1393 = vmatprep.mubr.f32.mxu0 0.0
        %1394 = vmatmul.mubr.f32.gmra.mrb[0].mxu0 %v1190
        %v1395 = vpop.f32.mrb[0].mxu0
        %v1396 = vadd.f32 0.0, %v1395
        %v1397 = vpop.f32.mrb[0].mxu0
        %1398 = vmatprep.mubr.f32.mxu0 0.0
        %1399 = vmatmul.mubr.f32.gmra.mrb[0].mxu0 %v1193
        %v1400 = vpop.f32.mrb[0].mxu0
        %v1401 = vadd.f32 0.0, %v1400
        %v1402 = vpop.f32.mrb[0].mxu0
        %1403 = vmatprep.mubr.f32.mxu0 0.0
        %1404 = vmatmul.mubr.f32.gmra.mrb[0].mxu0 %v1196
        %v1405 = vpop.f32.mrb[0].mxu0
        %v1406 = vadd.f32 0.0, %v1405
        %v1407 = vpop.f32.mrb[0].mxu0
        %1408 = vmatprep.mubr.f32.mxu0 0.0
        %1409 = vmatmul.mubr.f32.gmra.mrb[0].mxu0 %v1199
        %v1410 = vpop.f32.mrb[0].mxu0
        %v1411 = vadd.f32 0.0, %v1410
        %v1412 = vpop.f32.mrb[0].mxu0
        %1413 = vmatprep.mubr.f32.mxu0 0.0
        %1414 = vmatmul.mubr.f32.gmra.mrb[0].mxu0 %v1202
        %v1415 = vpop.f32.mrb[0].mxu0
        %v1416 = vadd.f32 0.0, %v1415
        %v1417 = vpop.f32.mrb[0].mxu0
        %1418 = vmatprep.mubr.f32.mxu0 0.0
        %1419 = vmatmul.mubr.f32.gmra.mrb[0].mxu0 %v1205
        %v1420 = vpop.f32.mrb[0].mxu0
        %v1421 = vadd.f32 0.0, %v1420
        %v1422 = vpop.f32.mrb[0].mxu0
        %1423 = vmatprep.mubr.f32.mxu0 0.0
        %1424 = vmatmul.mubr.f32.gmra.mrb[0].mxu0 %v1208
        %v1425 = vpop.f32.mrb[0].mxu0
        %v1426 = vadd.f32 0.0, %v1425
        %v1427 = vpop.f32.mrb[0].mxu0
        %1428 = vmatprep.mubr.f32.mxu0 0.0
        %1429 = vmatmul.mubr.f32.gmra.mrb[0].mxu0 %v1211
        %v1430 = vpop.f32.mrb[0].mxu0
        %v1431 = vadd.f32 0.0, %v1430
        %v1432 = vpop.f32.mrb[0].mxu0
        %1433 = vmatprep.mubr.f32.mxu0 0.0
        %1434 = vmatmul.mubr.f32.gmra.mrb[0].mxu0 %v1214
        %v1435 = vpop.f32.mrb[0].mxu0
        %v1436 = vadd.f32 0.0, %v1435
        %v1437 = vpop.f32.mrb[0].mxu0
        %1438 = vmatprep.mubr.f32.mxu0 0.0
        %1439 = vmatmul.mubr.f32.gmra.mrb[0].mxu0 %v1217
        %v1440 = vpop.f32.mrb[0].mxu0
        %v1441 = vadd.f32 0.0, %v1440
        %v1442 = vpop.f32.mrb[0].mxu0
        %1443 = vdwg.mxu0
        %v1444 = vadd.f32 %v923, %v1286
        %v1445 = vadd.f32 %v928, %v1291
        %v1446 = vadd.f32 %v933, %v1296
        %v1447 = vadd.f32 %v938, %v1301
        %v1448 = vadd.f32 %v943, %v1306
        %v1449 = vadd.f32 %v948, %v1311
        %v1450 = vadd.f32 %v953, %v1316
        %v1451 = vadd.f32 %v958, %v1321
        %v1452 = vadd.f32 %v963, %v1326
        %v1453 = vadd.f32 %v968, %v1331
        %v1454 = vadd.f32 %v973, %v1336
        %v1455 = vadd.f32 %v978, %v1341
        %v1456 = vadd.f32 %v983, %v1346
        %v1457 = vadd.f32 %v988, %v1351
        %v1458 = vadd.f32 %v993, %v1356
        %v1459 = vadd.f32 %v998, %v1361
        %v1460 = vadd.f32 %v1003, %v1366
        %v1461 = vadd.f32 %v1008, %v1371
        %v1462 = vadd.f32 %v1013, %v1376
        %v1463 = vadd.f32 %v1018, %v1381
        %v1464 = vadd.f32 %v1023, %v1386
        %v1465 = vadd.f32 %v1028, %v1391
        %v1466 = vadd.f32 %v1033, %v1396
        %v1467 = vadd.f32 %v1038, %v1401
        %v1468 = vadd.f32 %v1043, %v1406
        %v1469 = vadd.f32 %v1048, %v1411
        %v1470 = vadd.f32 %v1053, %v1416
        %v1471 = vadd.f32 %v1058, %v1421
        %v1472 = vadd.f32 %v1063, %v1426
        %v1473 = vadd.f32 %v1068, %v1431
        %v1474 = vadd.f32 %v1073, %v1436
        %v1475 = vadd.f32 %v1078, %v1441
        %v1476 = vld [vmem:[%s1081 + $0x1] sm:$0xff]
        %v1477 = vld [vmem:[%s1081 + $0x9] sm:$0xff]
        %v1478 = vld [vmem:[%s1081 + $0x19] sm:$0xff]
        %v1479 = vld [vmem:[%s1081 + $0x21] sm:$0xff]
        %v1480 = vld [vmem:[%s1081 + $0x31] sm:$0xff]
        %v1481 = vld [vmem:[%s1081 + $0x39] sm:$0xff]
        %v1482 = vld [vmem:[%s1081 + $0x49] sm:$0xff]
        %v1483 = vld [vmem:[%s1081 + $0x51] sm:$0xff]
        %v1484 = vld [vmem:[%s1081 + $0x61] sm:$0xff]
        %v1485 = vld [vmem:[%s1081 + $0x69] sm:$0xff]
        %v1486 = vld [vmem:[%s1081 + $0x79] sm:$0xff]
        %v1487 = vld [vmem:[%s1081 + $0x81] sm:$0xff]
        %v1488 = vld [vmem:[%s1081 + $0x91] sm:$0xff]
        %v1489 = vld [vmem:[%s1081 + $0x99] sm:$0xff]
        %v1490 = vld [vmem:[%s1081 + $0xa9] sm:$0xff]
        %v1491 = vld [vmem:[%s1081 + $0xb1] sm:$0xff]
        %v1492 = vld [vmem:[%s1081 + $0xc1] sm:$0xff]
        %v1493 = vld [vmem:[%s1081 + $0xc9] sm:$0xff]
        %v1494 = vld [vmem:[%s1081 + $0xd9] sm:$0xff]
        %v1495 = vld [vmem:[%s1081 + $0xe1] sm:$0xff]
        %v1496 = vld [vmem:[%s1081 + $0xf1] sm:$0xff]
        %v1497 = vld [vmem:[%s1081 + $0xf9] sm:$0xff]
        %v1498 = vld [vmem:[%s1081 + $0x109] sm:$0xff]
        %v1499 = vld [vmem:[%s1081 + $0x111] sm:$0xff]
        %v1500 = vld [vmem:[%s1081 + $0x121] sm:$0xff]
        %v1501 = vld [vmem:[%s1081 + $0x129] sm:$0xff]
        %v1502 = vld [vmem:[%s1081 + $0x139] sm:$0xff]
        %v1503 = vld [vmem:[%s1081 + $0x141] sm:$0xff]
        %v1504 = vld [vmem:[%s1081 + $0x151] sm:$0xff]
        %v1505 = vld [vmem:[%s1081 + $0x159] sm:$0xff]
        %v1506 = vld [vmem:[%s1081 + $0x169] sm:$0xff]
        %v1507 = vld [vmem:[%s1081 + $0x171] sm:$0xff]
        %s1508 = scalar_lea.vmem %s1, 192
        %v1509 = vld [vmem:[%s1508] sm:$0xff]
        %v1510 = vld [vmem:[%s1508 + $0x8] sm:$0xff]
        %v1511 = vld [vmem:[%s1508 + $0x10] sm:$0xff]
        %v1512 = vld [vmem:[%s1508 + $0x18] sm:$0xff]
        %v1513 = vld [vmem:[%s1508 + $0x20] sm:$0xff]
        %v1514 = vld [vmem:[%s1508 + $0x28] sm:$0xff]
        %v1515 = vld [vmem:[%s1508 + $0x30] sm:$0xff]
        %v1516 = vld [vmem:[%s1508 + $0x38] sm:$0xff]
        %v1518 = vsel %vm438, %v1476, 0
        %v1521 = vsel %vm438, %v1477, 0
        %v1524 = vsel %vm438, %v1478, 0
        %v1527 = vsel %vm438, %v1479, 0
        %v1530 = vsel %vm438, %v1480, 0
        %v1533 = vsel %vm438, %v1481, 0
        %v1536 = vsel %vm438, %v1482, 0
        %v1539 = vsel %vm438, %v1483, 0
        %v1542 = vsel %vm438, %v1484, 0
        %v1545 = vsel %vm438, %v1485, 0
        %v1548 = vsel %vm438, %v1486, 0
        %v1551 = vsel %vm438, %v1487, 0
        %v1554 = vsel %vm438, %v1488, 0
        %v1557 = vsel %vm438, %v1489, 0
        %v1560 = vsel %vm438, %v1490, 0
        %v1563 = vsel %vm438, %v1491, 0
        %v1566 = vsel %vm438, %v1492, 0
        %v1569 = vsel %vm438, %v1493, 0
        %v1572 = vsel %vm438, %v1494, 0
        %v1575 = vsel %vm438, %v1495, 0
        %v1578 = vsel %vm438, %v1496, 0
        %v1581 = vsel %vm438, %v1497, 0
        %v1584 = vsel %vm438, %v1498, 0
        %v1587 = vsel %vm438, %v1499, 0
        %v1590 = vsel %vm438, %v1500, 0
        %v1593 = vsel %vm438, %v1501, 0
        %v1596 = vsel %vm438, %v1502, 0
        %v1599 = vsel %vm438, %v1503, 0
        %v1602 = vsel %vm438, %v1504, 0
        %v1605 = vsel %vm438, %v1505, 0
        %v1608 = vsel %vm438, %v1506, 0
        %v1611 = vsel %vm438, %v1507, 0
        %1613 = vmatprep.subr.mxu0 0.0
        %1614 = vmatpush1.msra.mxu0 %v1509
        %1615 = vmatprep.subr.mxu0 0.0
        %1616 = vmatpush1.msra.mxu0 %v1510
        %1617 = vmatprep.subr.mxu0 0.0
        %1618 = vmatpush1.msra.mxu0 %v1511
        %1619 = vmatprep.subr.mxu0 0.0
        %1620 = vmatpush1.msra.mxu0 %v1512
        %1621 = vmatprep.subr.mxu0 0.0
        %1622 = vmatpush1.msra.mxu0 %v1513
        %1623 = vmatprep.subr.mxu0 0.0
        %1624 = vmatpush1.msra.mxu0 %v1514
        %1625 = vmatprep.subr.mxu0 0.0
        %1626 = vmatpush1.msra.mxu0 %v1515
        %1627 = vmatprep.subr.mxu0 0.0
        %1628 = vmatpush1.msra.mxu0 %v1516
        %1629 = vmatprep.subr.mxu0 0.0
        %1630 = vmatpush1.msra.mxu0 0.0
        %1631 = vmatprep.subr.mxu0 0.0
        %1632 = vmatpush1.msra.mxu0 0.0
        %1633 = vmatprep.subr.mxu0 0.0
        %1634 = vmatpush1.msra.mxu0 0.0
        %1635 = vmatprep.subr.mxu0 0.0
        %1636 = vmatpush1.msra.mxu0 0.0
        %1637 = vmatprep.subr.mxu0 0.0
        %1638 = vmatpush1.msra.mxu0 0.0
        %1639 = vmatprep.subr.mxu0 0.0
        %1640 = vmatpush1.msra.mxu0 0.0
        %1641 = vmatprep.subr.mxu0 0.0
        %1642 = vmatpush1.msra.mxu0 0.0
        %1643 = vmatprep.subr.mxu0 0.0
        %1644 = vmatpush1.msra.mxu0 0.0
        %1645 = vmatprep.subr.mxu0 0.0
        %1646 = vmatpush1.msra.mxu0 0.0
        %1647 = vmatprep.subr.mxu0 0.0
        %1648 = vmatpush1.msra.mxu0 0.0
        %1649 = vmatprep.subr.mxu0 0.0
        %1650 = vmatpush1.msra.mxu0 0.0
        %1651 = vmatprep.subr.mxu0 0.0
        %1652 = vmatpush1.msra.mxu0 0.0
        %1653 = vmatprep.subr.mxu0 0.0
        %1654 = vmatpush1.msra.mxu0 0.0
        %1655 = vmatprep.subr.mxu0 0.0
        %1656 = vmatpush1.msra.mxu0 0.0
        %1657 = vmatprep.subr.mxu0 0.0
        %1658 = vmatpush1.msra.mxu0 0.0
        %1659 = vmatprep.subr.mxu0 0.0
        %1660 = vmatpush1.msra.mxu0 0.0
        %1661 = vmatprep.subr.mxu0 0.0
        %1662 = vmatpush1.msra.mxu0 0.0
        %1663 = vmatprep.subr.mxu0 0.0
        %1664 = vmatpush1.msra.mxu0 0.0
        %1665 = vmatprep.subr.mxu0 0.0
        %1666 = vmatpush1.msra.mxu0 0.0
        %1667 = vmatprep.subr.mxu0 0.0
        %1668 = vmatpush1.msra.mxu0 0.0
        %1669 = vmatprep.subr.mxu0 0.0
        %1670 = vmatpush1.msra.mxu0 0.0
        %1671 = vmatprep.subr.mxu0 0.0
        %1672 = vmatpush1.msra.mxu0 0.0
        %1673 = vmatprep.subr.mxu0 0.0
        %1674 = vmatpush1.msra.mxu0 0.0
        %1675 = vmatprep.subr.mxu0 0.0
        %1676 = vmatpush1.msra.mxu0 0.0
        %1677 = vmatprep.mubr.f32.mxu0 0.0
        %1678 = vmatmul.mubr.f32.gmra.mrb[0].mxu0 %v1518
        %v1679 = vpop.f32.mrb[0].mxu0
        %v1680 = vadd.f32 0.0, %v1679
        %v1681 = vpop.f32.mrb[0].mxu0
        %1682 = vmatprep.mubr.f32.mxu0 0.0
        %1683 = vmatmul.mubr.f32.gmra.mrb[0].mxu0 %v1521
        %v1684 = vpop.f32.mrb[0].mxu0
        %v1685 = vadd.f32 0.0, %v1684
        %v1686 = vpop.f32.mrb[0].mxu0
        %1687 = vmatprep.mubr.f32.mxu0 0.0
        %1688 = vmatmul.mubr.f32.gmra.mrb[0].mxu0 %v1524
        %v1689 = vpop.f32.mrb[0].mxu0
        %v1690 = vadd.f32 0.0, %v1689
        %v1691 = vpop.f32.mrb[0].mxu0
        %1692 = vmatprep.mubr.f32.mxu0 0.0
        %1693 = vmatmul.mubr.f32.gmra.mrb[0].mxu0 %v1527
        %v1694 = vpop.f32.mrb[0].mxu0
        %v1695 = vadd.f32 0.0, %v1694
        %v1696 = vpop.f32.mrb[0].mxu0
        %1697 = vmatprep.mubr.f32.mxu0 0.0
        %1698 = vmatmul.mubr.f32.gmra.mrb[0].mxu0 %v1530
        %v1699 = vpop.f32.mrb[0].mxu0
        %v1700 = vadd.f32 0.0, %v1699
        %v1701 = vpop.f32.mrb[0].mxu0
        %1702 = vmatprep.mubr.f32.mxu0 0.0
        %1703 = vmatmul.mubr.f32.gmra.mrb[0].mxu0 %v1533
        %v1704 = vpop.f32.mrb[0].mxu0
        %v1705 = vadd.f32 0.0, %v1704
        %v1706 = vpop.f32.mrb[0].mxu0
        %1707 = vmatprep.mubr.f32.mxu0 0.0
        %1708 = vmatmul.mubr.f32.gmra.mrb[0].mxu0 %v1536
        %v1709 = vpop.f32.mrb[0].mxu0
        %v1710 = vadd.f32 0.0, %v1709
        %v1711 = vpop.f32.mrb[0].mxu0
        %1712 = vmatprep.mubr.f32.mxu0 0.0
        %1713 = vmatmul.mubr.f32.gmra.mrb[0].mxu0 %v1539
        %v1714 = vpop.f32.mrb[0].mxu0
        %v1715 = vadd.f32 0.0, %v1714
        %v1716 = vpop.f32.mrb[0].mxu0
        %1717 = vmatprep.mubr.f32.mxu0 0.0
        %1718 = vmatmul.mubr.f32.gmra.mrb[0].mxu0 %v1542
        %v1719 = vpop.f32.mrb[0].mxu0
        %v1720 = vadd.f32 0.0, %v1719
        %v1721 = vpop.f32.mrb[0].mxu0
        %1722 = vmatprep.mubr.f32.mxu0 0.0
        %1723 = vmatmul.mubr.f32.gmra.mrb[0].mxu0 %v1545
        %v1724 = vpop.f32.mrb[0].mxu0
        %v1725 = vadd.f32 0.0, %v1724
        %v1726 = vpop.f32.mrb[0].mxu0
        %1727 = vmatprep.mubr.f32.mxu0 0.0
        %1728 = vmatmul.mubr.f32.gmra.mrb[0].mxu0 %v1548
        %v1729 = vpop.f32.mrb[0].mxu0
        %v1730 = vadd.f32 0.0, %v1729
        %v1731 = vpop.f32.mrb[0].mxu0
        %1732 = vmatprep.mubr.f32.mxu0 0.0
        %1733 = vmatmul.mubr.f32.gmra.mrb[0].mxu0 %v1551
        %v1734 = vpop.f32.mrb[0].mxu0
        %v1735 = vadd.f32 0.0, %v1734
        %v1736 = vpop.f32.mrb[0].mxu0
        %1737 = vmatprep.mubr.f32.mxu0 0.0
        %1738 = vmatmul.mubr.f32.gmra.mrb[0].mxu0 %v1554
        %v1739 = vpop.f32.mrb[0].mxu0
        %v1740 = vadd.f32 0.0, %v1739
        %v1741 = vpop.f32.mrb[0].mxu0
        %1742 = vmatprep.mubr.f32.mxu0 0.0
        %1743 = vmatmul.mubr.f32.gmra.mrb[0].mxu0 %v1557
        %v1744 = vpop.f32.mrb[0].mxu0
        %v1745 = vadd.f32 0.0, %v1744
        %v1746 = vpop.f32.mrb[0].mxu0
        %1747 = vmatprep.mubr.f32.mxu0 0.0
        %1748 = vmatmul.mubr.f32.gmra.mrb[0].mxu0 %v1560
        %v1749 = vpop.f32.mrb[0].mxu0
        %v1750 = vadd.f32 0.0, %v1749
        %v1751 = vpop.f32.mrb[0].mxu0
        %1752 = vmatprep.mubr.f32.mxu0 0.0
        %1753 = vmatmul.mubr.f32.gmra.mrb[0].mxu0 %v1563
        %v1754 = vpop.f32.mrb[0].mxu0
        %v1755 = vadd.f32 0.0, %v1754
        %v1756 = vpop.f32.mrb[0].mxu0
        %1757 = vmatprep.mubr.f32.mxu0 0.0
        %1758 = vmatmul.mubr.f32.gmra.mrb[0].mxu0 %v1566
        %v1759 = vpop.f32.mrb[0].mxu0
        %v1760 = vadd.f32 0.0, %v1759
        %v1761 = vpop.f32.mrb[0].mxu0
        %1762 = vmatprep.mubr.f32.mxu0 0.0
        %1763 = vmatmul.mubr.f32.gmra.mrb[0].mxu0 %v1569
        %v1764 = vpop.f32.mrb[0].mxu0
        %v1765 = vadd.f32 0.0, %v1764
        %v1766 = vpop.f32.mrb[0].mxu0
        %1767 = vmatprep.mubr.f32.mxu0 0.0
        %1768 = vmatmul.mubr.f32.gmra.mrb[0].mxu0 %v1572
        %v1769 = vpop.f32.mrb[0].mxu0
        %v1770 = vadd.f32 0.0, %v1769
        %v1771 = vpop.f32.mrb[0].mxu0
        %1772 = vmatprep.mubr.f32.mxu0 0.0
        %1773 = vmatmul.mubr.f32.gmra.mrb[0].mxu0 %v1575
        %v1774 = vpop.f32.mrb[0].mxu0
        %v1775 = vadd.f32 0.0, %v1774
        %v1776 = vpop.f32.mrb[0].mxu0
        %1777 = vmatprep.mubr.f32.mxu0 0.0
        %1778 = vmatmul.mubr.f32.gmra.mrb[0].mxu0 %v1578
        %v1779 = vpop.f32.mrb[0].mxu0
        %v1780 = vadd.f32 0.0, %v1779
        %v1781 = vpop.f32.mrb[0].mxu0
        %1782 = vmatprep.mubr.f32.mxu0 0.0
        %1783 = vmatmul.mubr.f32.gmra.mrb[0].mxu0 %v1581
        %v1784 = vpop.f32.mrb[0].mxu0
        %v1785 = vadd.f32 0.0, %v1784
        %v1786 = vpop.f32.mrb[0].mxu0
        %1787 = vmatprep.mubr.f32.mxu0 0.0
        %1788 = vmatmul.mubr.f32.gmra.mrb[0].mxu0 %v1584
        %v1789 = vpop.f32.mrb[0].mxu0
        %v1790 = vadd.f32 0.0, %v1789
        %v1791 = vpop.f32.mrb[0].mxu0
        %1792 = vmatprep.mubr.f32.mxu0 0.0
        %1793 = vmatmul.mubr.f32.gmra.mrb[0].mxu0 %v1587
        %v1794 = vpop.f32.mrb[0].mxu0
        %v1795 = vadd.f32 0.0, %v1794
        %v1796 = vpop.f32.mrb[0].mxu0
        %1797 = vmatprep.mubr.f32.mxu0 0.0
        %1798 = vmatmul.mubr.f32.gmra.mrb[0].mxu0 %v1590
        %v1799 = vpop.f32.mrb[0].mxu0
        %v1800 = vadd.f32 0.0, %v1799
        %v1801 = vpop.f32.mrb[0].mxu0
        %1802 = vmatprep.mubr.f32.mxu0 0.0
        %1803 = vmatmul.mubr.f32.gmra.mrb[0].mxu0 %v1593
        %v1804 = vpop.f32.mrb[0].mxu0
        %v1805 = vadd.f32 0.0, %v1804
        %v1806 = vpop.f32.mrb[0].mxu0
        %1807 = vmatprep.mubr.f32.mxu0 0.0
        %1808 = vmatmul.mubr.f32.gmra.mrb[0].mxu0 %v1596
        %v1809 = vpop.f32.mrb[0].mxu0
        %v1810 = vadd.f32 0.0, %v1809
        %v1811 = vpop.f32.mrb[0].mxu0
        %1812 = vmatprep.mubr.f32.mxu0 0.0
        %1813 = vmatmul.mubr.f32.gmra.mrb[0].mxu0 %v1599
        %v1814 = vpop.f32.mrb[0].mxu0
        %v1815 = vadd.f32 0.0, %v1814
        %v1816 = vpop.f32.mrb[0].mxu0
        %1817 = vmatprep.mubr.f32.mxu0 0.0
        %1818 = vmatmul.mubr.f32.gmra.mrb[0].mxu0 %v1602
        %v1819 = vpop.f32.mrb[0].mxu0
        %v1820 = vadd.f32 0.0, %v1819
        %v1821 = vpop.f32.mrb[0].mxu0
        %1822 = vmatprep.mubr.f32.mxu0 0.0
        %1823 = vmatmul.mubr.f32.gmra.mrb[0].mxu0 %v1605
        %v1824 = vpop.f32.mrb[0].mxu0
        %v1825 = vadd.f32 0.0, %v1824
        %v1826 = vpop.f32.mrb[0].mxu0
        %1827 = vmatprep.mubr.f32.mxu0 0.0
        %1828 = vmatmul.mubr.f32.gmra.mrb[0].mxu0 %v1608
        %v1829 = vpop.f32.mrb[0].mxu0
        %v1830 = vadd.f32 0.0, %v1829
        %v1831 = vpop.f32.mrb[0].mxu0
        %1832 = vmatprep.mubr.f32.mxu0 0.0
        %1833 = vmatmul.mubr.f32.gmra.mrb[0].mxu0 %v1611
        %v1834 = vpop.f32.mrb[0].mxu0
        %v1835 = vadd.f32 0.0, %v1834
        %v1836 = vpop.f32.mrb[0].mxu0
        %1837 = vdwg.mxu0
        %v1838 = vadd.f32 %v1444, %v1680
        %v1839 = vadd.f32 %v1445, %v1685
        %v1840 = vadd.f32 %v1446, %v1690
        %v1841 = vadd.f32 %v1447, %v1695
        %v1842 = vadd.f32 %v1448, %v1700
        %v1843 = vadd.f32 %v1449, %v1705
        %v1844 = vadd.f32 %v1450, %v1710
        %v1845 = vadd.f32 %v1451, %v1715
        %v1846 = vadd.f32 %v1452, %v1720
        %v1847 = vadd.f32 %v1453, %v1725
        %v1848 = vadd.f32 %v1454, %v1730
        %v1849 = vadd.f32 %v1455, %v1735
        %v1850 = vadd.f32 %v1456, %v1740
        %v1851 = vadd.f32 %v1457, %v1745
        %v1852 = vadd.f32 %v1458, %v1750
        %v1853 = vadd.f32 %v1459, %v1755
        %v1854 = vadd.f32 %v1460, %v1760
        %v1855 = vadd.f32 %v1461, %v1765
        %v1856 = vadd.f32 %v1462, %v1770
        %v1857 = vadd.f32 %v1463, %v1775
        %v1858 = vadd.f32 %v1464, %v1780
        %v1859 = vadd.f32 %v1465, %v1785
        %v1860 = vadd.f32 %v1466, %v1790
        %v1861 = vadd.f32 %v1467, %v1795
        %v1862 = vadd.f32 %v1468, %v1800
        %v1863 = vadd.f32 %v1469, %v1805
        %v1864 = vadd.f32 %v1470, %v1810
        %v1865 = vadd.f32 %v1471, %v1815
        %v1866 = vadd.f32 %v1472, %v1820
        %v1867 = vadd.f32 %v1473, %v1825
        %v1868 = vadd.f32 %v1474, %v1830
        %v1869 = vadd.f32 %v1475, %v1835
        %v1870 = vld [vmem:[%s2] sm:$0x1]
        %v1872 = vlaneseq
        %v1873 = vshrl.u32 %v1872, 7
        %v1874 = vsub.s32 0, %v1873
        %v1875 = vrot.slane %v1870, %v1874
        %v1877 = vadd.f32 %v1838, %v1875
        %v1878 = vadd.f32 %v1839, %v1875
        %v1879 = vadd.f32 %v1840, %v1875
        %v1880 = vadd.f32 %v1841, %v1875
        %v1881 = vadd.f32 %v1842, %v1875
        %v1882 = vadd.f32 %v1843, %v1875
        %v1883 = vadd.f32 %v1844, %v1875
        %v1884 = vadd.f32 %v1845, %v1875
        %v1885 = vadd.f32 %v1846, %v1875
        %v1886 = vadd.f32 %v1847, %v1875
        %v1887 = vadd.f32 %v1848, %v1875
        %v1888 = vadd.f32 %v1849, %v1875
        %v1889 = vadd.f32 %v1850, %v1875
        %v1890 = vadd.f32 %v1851, %v1875
        %v1891 = vadd.f32 %v1852, %v1875
        %v1892 = vadd.f32 %v1853, %v1875
        %v1893 = vadd.f32 %v1854, %v1875
        %v1894 = vadd.f32 %v1855, %v1875
        %v1895 = vadd.f32 %v1856, %v1875
        %v1896 = vadd.f32 %v1857, %v1875
        %v1897 = vadd.f32 %v1858, %v1875
        %v1898 = vadd.f32 %v1859, %v1875
        %v1899 = vadd.f32 %v1860, %v1875
        %v1900 = vadd.f32 %v1861, %v1875
        %v1901 = vadd.f32 %v1862, %v1875
        %v1902 = vadd.f32 %v1863, %v1875
        %v1903 = vadd.f32 %v1864, %v1875
        %v1904 = vadd.f32 %v1865, %v1875
        %v1905 = vadd.f32 %v1866, %v1875
        %v1906 = vadd.f32 %v1867, %v1875
        %v1907 = vadd.f32 %v1868, %v1875
        %v1908 = vadd.f32 %v1869, %v1875
        %v1909 = vld [vmem:[%s3] sm:$0xff]
        %v1910 = vld [vmem:[%s3 + $0x8] sm:$0xff]
        %v1911 = vld [vmem:[%s3 + $0x10] sm:$0xff]
        %v1912 = vld [vmem:[%s3 + $0x18] sm:$0xff]
        %v1913 = vld [vmem:[%s3 + $0x20] sm:$0xff]
        %v1914 = vld [vmem:[%s3 + $0x28] sm:$0xff]
        %v1915 = vld [vmem:[%s3 + $0x30] sm:$0xff]
        %v1916 = vld [vmem:[%s3 + $0x38] sm:$0xff]
        %v1917 = vld [vmem:[%s3 + $0x40] sm:$0xff]
        %v1918 = vld [vmem:[%s3 + $0x48] sm:$0xff]
        %v1919 = vld [vmem:[%s3 + $0x50] sm:$0xff]
        %v1920 = vld [vmem:[%s3 + $0x58] sm:$0xff]
        %v1921 = vld [vmem:[%s3 + $0x60] sm:$0xff]
        %v1922 = vld [vmem:[%s3 + $0x68] sm:$0xff]
        %v1923 = vld [vmem:[%s3 + $0x70] sm:$0xff]
        %v1924 = vld [vmem:[%s3 + $0x78] sm:$0xff]
        %1925 = vmatprep.subr.mxu0 0.0
        %1926 = vmatpush1.msra.mxu0 %v1877
        %1927 = vmatprep.subr.mxu0 0.0
        %1928 = vmatpush1.msra.mxu0 %v1878
        %1929 = vmatprep.subr.mxu0 0.0
        %1930 = vmatpush1.msra.mxu0 %v1879
        %1931 = vmatprep.subr.mxu0 0.0
        %1932 = vmatpush1.msra.mxu0 %v1880
        %1933 = vmatprep.subr.mxu0 0.0
        %1934 = vmatpush1.msra.mxu0 %v1881
        %1935 = vmatprep.subr.mxu0 0.0
        %1936 = vmatpush1.msra.mxu0 %v1882
        %1937 = vmatprep.subr.mxu0 0.0
        %1938 = vmatpush1.msra.mxu0 %v1883
        %1939 = vmatprep.subr.mxu0 0.0
        %1940 = vmatpush1.msra.mxu0 %v1884
        %1941 = vmatprep.subr.mxu0 0.0
        %1942 = vmatpush1.msra.mxu0 %v1885
        %1943 = vmatprep.subr.mxu0 0.0
        %1944 = vmatpush1.msra.mxu0 %v1886
        %1945 = vmatprep.subr.mxu0 0.0
        %1946 = vmatpush1.msra.mxu0 %v1887
        %1947 = vmatprep.subr.mxu0 0.0
        %1948 = vmatpush1.msra.mxu0 %v1888
        %1949 = vmatprep.subr.mxu0 0.0
        %1950 = vmatpush1.msra.mxu0 %v1889
        %1951 = vmatprep.subr.mxu0 0.0
        %1952 = vmatpush1.msra.mxu0 %v1890
        %1953 = vmatprep.subr.mxu0 0.0
        %1954 = vmatpush1.msra.mxu0 %v1891
        %1955 = vmatprep.subr.mxu0 0.0
        %1956 = vmatpush1.msra.mxu0 %v1892
        %1957 = vmatprep.subr.mxu0 0.0
        %1958 = vmatpush1.msra.mxu0 %v1893
        %1959 = vmatprep.subr.mxu0 0.0
        %1960 = vmatpush1.msra.mxu0 %v1894
        %1961 = vmatprep.subr.mxu0 0.0
        %1962 = vmatpush1.msra.mxu0 %v1895
        %1963 = vmatprep.subr.mxu0 0.0
        %1964 = vmatpush1.msra.mxu0 %v1896
        %1965 = vmatprep.subr.mxu0 0.0
        %1966 = vmatpush1.msra.mxu0 %v1897
        %1967 = vmatprep.subr.mxu0 0.0
        %1968 = vmatpush1.msra.mxu0 %v1898
        %1969 = vmatprep.subr.mxu0 0.0
        %1970 = vmatpush1.msra.mxu0 %v1899
        %1971 = vmatprep.subr.mxu0 0.0
        %1972 = vmatpush1.msra.mxu0 %v1900
        %1973 = vmatprep.subr.mxu0 0.0
        %1974 = vmatpush1.msra.mxu0 %v1901
        %1975 = vmatprep.subr.mxu0 0.0
        %1976 = vmatpush1.msra.mxu0 %v1902
        %1977 = vmatprep.subr.mxu0 0.0
        %1978 = vmatpush1.msra.mxu0 %v1903
        %1979 = vmatprep.subr.mxu0 0.0
        %1980 = vmatpush1.msra.mxu0 %v1904
        %1981 = vmatprep.subr.mxu0 0.0
        %1982 = vmatpush1.msra.mxu0 %v1905
        %1983 = vmatprep.subr.mxu0 0.0
        %1984 = vmatpush1.msra.mxu0 %v1906
        %1985 = vmatprep.subr.mxu0 0.0
        %1986 = vmatpush1.msra.mxu0 %v1907
        %1987 = vmatprep.subr.mxu0 0.0
        %1988 = vmatpush1.msra.mxu0 %v1908
        %1989 = vmatprep.mubr.f32.mxu0 %v1910
        %1990 = vmatmul.mubr.f32.gmra.mrb[0].mxu0 %v1909
        %v1991 = vpop.f32.mrb[0].mxu0
        %v1992 = vadd.f32 0.0, %v1991
        %v1993 = vpop.f32.mrb[0].mxu0
        %1994 = vmatprep.mubr.f32.mxu0 %v1912
        %1995 = vmatmul.mubr.f32.gmra.mrb[0].mxu0 %v1911
        %v1996 = vpop.f32.mrb[0].mxu0
        %v1997 = vadd.f32 0.0, %v1996
        %v1998 = vpop.f32.mrb[0].mxu0
        %1999 = vmatprep.mubr.f32.mxu0 %v1914
        %2000 = vmatmul.mubr.f32.gmra.mrb[0].mxu0 %v1913
        %v2001 = vpop.f32.mrb[0].mxu0
        %v2002 = vadd.f32 0.0, %v2001
        %v2003 = vpop.f32.mrb[0].mxu0
        %2004 = vmatprep.mubr.f32.mxu0 %v1916
        %2005 = vmatmul.mubr.f32.gmra.mrb[0].mxu0 %v1915
        %v2006 = vpop.f32.mrb[0].mxu0
        %v2007 = vadd.f32 0.0, %v2006
        %v2008 = vpop.f32.mrb[0].mxu0
        %2009 = vmatprep.mubr.f32.mxu0 %v1918
        %2010 = vmatmul.mubr.f32.gmra.mrb[0].mxu0 %v1917
        %v2011 = vpop.f32.mrb[0].mxu0
        %v2012 = vadd.f32 0.0, %v2011
        %v2013 = vpop.f32.mrb[0].mxu0
        %2014 = vmatprep.mubr.f32.mxu0 %v1920
        %2015 = vmatmul.mubr.f32.gmra.mrb[0].mxu0 %v1919
        %v2016 = vpop.f32.mrb[0].mxu0
        %v2017 = vadd.f32 0.0, %v2016
        %v2018 = vpop.f32.mrb[0].mxu0
        %2019 = vmatprep.mubr.f32.mxu0 %v1922
        %2020 = vmatmul.mubr.f32.gmra.mrb[0].mxu0 %v1921
        %v2021 = vpop.f32.mrb[0].mxu0
        %v2022 = vadd.f32 0.0, %v2021
        %v2023 = vpop.f32.mrb[0].mxu0
        %2024 = vmatprep.mubr.f32.mxu0 %v1924
        %2025 = vmatmul.mubr.f32.gmra.mrb[0].mxu0 %v1923
        %v2026 = vpop.f32.mrb[0].mxu0
        %v2027 = vadd.f32 0.0, %v2026
        %v2028 = vpop.f32.mrb[0].mxu0
        %2029 = vdwg.mxu0
        %s2030 = scalar_lea.vmem %s3, 128
        %v2031 = vld [vmem:[%s2030] sm:$0xff]
        %v2032 = vld [vmem:[%s2030 + $0x8] sm:$0xff]
        %v2033 = vld [vmem:[%s2030 + $0x10] sm:$0xff]
        %v2034 = vld [vmem:[%s2030 + $0x18] sm:$0xff]
        %v2035 = vld [vmem:[%s2030 + $0x20] sm:$0xff]
        %v2036 = vld [vmem:[%s2030 + $0x28] sm:$0xff]
        %v2037 = vld [vmem:[%s2030 + $0x30] sm:$0xff]
        %v2038 = vld [vmem:[%s2030 + $0x38] sm:$0xff]
        %v2039 = vld [vmem:[%s2030 + $0x40] sm:$0xff]
        %v2040 = vld [vmem:[%s2030 + $0x48] sm:$0xff]
        %v2041 = vld [vmem:[%s2030 + $0x50] sm:$0xff]
        %v2042 = vld [vmem:[%s2030 + $0x58] sm:$0xff]
        %v2043 = vld [vmem:[%s2030 + $0x60] sm:$0xff]
        %v2044 = vld [vmem:[%s2030 + $0x68] sm:$0xff]
        %v2045 = vld [vmem:[%s2030 + $0x70] sm:$0xff]
        %v2046 = vld [vmem:[%s2030 + $0x78] sm:$0xff]
        %2047 = vmatprep.subr.mxu0 0.0
        %2048 = vmatpush1.msra.mxu0 %v1877
        %2049 = vmatprep.subr.mxu0 0.0
        %2050 = vmatpush1.msra.mxu0 %v1878
        %2051 = vmatprep.subr.mxu0 0.0
        %2052 = vmatpush1.msra.mxu0 %v1879
        %2053 = vmatprep.subr.mxu0 0.0
        %2054 = vmatpush1.msra.mxu0 %v1880
        %2055 = vmatprep.subr.mxu0 0.0
        %2056 = vmatpush1.msra.mxu0 %v1881
        %2057 = vmatprep.subr.mxu0 0.0
        %2058 = vmatpush1.msra.mxu0 %v1882
        %2059 = vmatprep.subr.mxu0 0.0
        %2060 = vmatpush1.msra.mxu0 %v1883
        %2061 = vmatprep.subr.mxu0 0.0
        %2062 = vmatpush1.msra.mxu0 %v1884
        %2063 = vmatprep.subr.mxu0 0.0
        %2064 = vmatpush1.msra.mxu0 %v1885
        %2065 = vmatprep.subr.mxu0 0.0
        %2066 = vmatpush1.msra.mxu0 %v1886
        %2067 = vmatprep.subr.mxu0 0.0
        %2068 = vmatpush1.msra.mxu0 %v1887
        %2069 = vmatprep.subr.mxu0 0.0
        %2070 = vmatpush1.msra.mxu0 %v1888
        %2071 = vmatprep.subr.mxu0 0.0
        %2072 = vmatpush1.msra.mxu0 %v1889
        %2073 = vmatprep.subr.mxu0 0.0
        %2074 = vmatpush1.msra.mxu0 %v1890
        %2075 = vmatprep.subr.mxu0 0.0
        %2076 = vmatpush1.msra.mxu0 %v1891
        %2077 = vmatprep.subr.mxu0 0.0
        %2078 = vmatpush1.msra.mxu0 %v1892
        %2079 = vmatprep.subr.mxu0 0.0
        %2080 = vmatpush1.msra.mxu0 %v1893
        %2081 = vmatprep.subr.mxu0 0.0
        %2082 = vmatpush1.msra.mxu0 %v1894
        %2083 = vmatprep.subr.mxu0 0.0
        %2084 = vmatpush1.msra.mxu0 %v1895
        %2085 = vmatprep.subr.mxu0 0.0
        %2086 = vmatpush1.msra.mxu0 %v1896
        %2087 = vmatprep.subr.mxu0 0.0
        %2088 = vmatpush1.msra.mxu0 %v1897
        %2089 = vmatprep.subr.mxu0 0.0
        %2090 = vmatpush1.msra.mxu0 %v1898
        %2091 = vmatprep.subr.mxu0 0.0
        %2092 = vmatpush1.msra.mxu0 %v1899
        %2093 = vmatprep.subr.mxu0 0.0
        %2094 = vmatpush1.msra.mxu0 %v1900
        %2095 = vmatprep.subr.mxu0 0.0
        %2096 = vmatpush1.msra.mxu0 %v1901
        %2097 = vmatprep.subr.mxu0 0.0
        %2098 = vmatpush1.msra.mxu0 %v1902
        %2099 = vmatprep.subr.mxu0 0.0
        %2100 = vmatpush1.msra.mxu0 %v1903
        %2101 = vmatprep.subr.mxu0 0.0
        %2102 = vmatpush1.msra.mxu0 %v1904
        %2103 = vmatprep.subr.mxu0 0.0
        %2104 = vmatpush1.msra.mxu0 %v1905
        %2105 = vmatprep.subr.mxu0 0.0
        %2106 = vmatpush1.msra.mxu0 %v1906
        %2107 = vmatprep.subr.mxu0 0.0
        %2108 = vmatpush1.msra.mxu0 %v1907
        %2109 = vmatprep.subr.mxu0 0.0
        %2110 = vmatpush1.msra.mxu0 %v1908
        %2111 = vmatprep.mubr.f32.mxu0 %v2032
        %2112 = vmatmul.mubr.f32.gmra.mrb[0].mxu0 %v2031
        %v2113 = vpop.f32.mrb[0].mxu0
        %v2114 = vadd.f32 0.0, %v2113
        %v2115 = vpop.f32.mrb[0].mxu0
        %2116 = vmatprep.mubr.f32.mxu0 %v2034
        %2117 = vmatmul.mubr.f32.gmra.mrb[0].mxu0 %v2033
        %v2118 = vpop.f32.mrb[0].mxu0
        %v2119 = vadd.f32 0.0, %v2118
        %v2120 = vpop.f32.mrb[0].mxu0
        %2121 = vmatprep.mubr.f32.mxu0 %v2036
        %2122 = vmatmul.mubr.f32.gmra.mrb[0].mxu0 %v2035
        %v2123 = vpop.f32.mrb[0].mxu0
        %v2124 = vadd.f32 0.0, %v2123
        %v2125 = vpop.f32.mrb[0].mxu0
        %2126 = vmatprep.mubr.f32.mxu0 %v2038
        %2127 = vmatmul.mubr.f32.gmra.mrb[0].mxu0 %v2037
        %v2128 = vpop.f32.mrb[0].mxu0
        %v2129 = vadd.f32 0.0, %v2128
        %v2130 = vpop.f32.mrb[0].mxu0
        %2131 = vmatprep.mubr.f32.mxu0 %v2040
        %2132 = vmatmul.mubr.f32.gmra.mrb[0].mxu0 %v2039
        %v2133 = vpop.f32.mrb[0].mxu0
        %v2134 = vadd.f32 0.0, %v2133
        %v2135 = vpop.f32.mrb[0].mxu0
        %2136 = vmatprep.mubr.f32.mxu0 %v2042
        %2137 = vmatmul.mubr.f32.gmra.mrb[0].mxu0 %v2041
        %v2138 = vpop.f32.mrb[0].mxu0
        %v2139 = vadd.f32 0.0, %v2138
        %v2140 = vpop.f32.mrb[0].mxu0
        %2141 = vmatprep.mubr.f32.mxu0 %v2044
        %2142 = vmatmul.mubr.f32.gmra.mrb[0].mxu0 %v2043
        %v2143 = vpop.f32.mrb[0].mxu0
        %v2144 = vadd.f32 0.0, %v2143
        %v2145 = vpop.f32.mrb[0].mxu0
        %2146 = vmatprep.mubr.f32.mxu0 %v2046
        %2147 = vmatmul.mubr.f32.gmra.mrb[0].mxu0 %v2045
        %v2148 = vpop.f32.mrb[0].mxu0
        %v2149 = vadd.f32 0.0, %v2148
        %v2150 = vpop.f32.mrb[0].mxu0
        %2151 = vdwg.mxu0
        %s2152 = scalar_lea.vmem %s3, 256
        %v2153 = vld [vmem:[%s2152] sm:$0xff]
        %v2154 = vld [vmem:[%s2152 + $0x8] sm:$0xff]
        %v2155 = vld [vmem:[%s2152 + $0x10] sm:$0xff]
        %v2156 = vld [vmem:[%s2152 + $0x18] sm:$0xff]
        %v2157 = vld [vmem:[%s2152 + $0x20] sm:$0xff]
        %v2158 = vld [vmem:[%s2152 + $0x28] sm:$0xff]
        %v2159 = vld [vmem:[%s2152 + $0x30] sm:$0xff]
        %v2160 = vld [vmem:[%s2152 + $0x38] sm:$0xff]
        %v2161 = vld [vmem:[%s2152 + $0x40] sm:$0xff]
        %v2162 = vld [vmem:[%s2152 + $0x48] sm:$0xff]
        %v2163 = vld [vmem:[%s2152 + $0x50] sm:$0xff]
        %v2164 = vld [vmem:[%s2152 + $0x58] sm:$0xff]
        %v2165 = vld [vmem:[%s2152 + $0x60] sm:$0xff]
        %v2166 = vld [vmem:[%s2152 + $0x68] sm:$0xff]
        %v2167 = vld [vmem:[%s2152 + $0x70] sm:$0xff]
        %v2168 = vld [vmem:[%s2152 + $0x78] sm:$0xff]
        %2169 = vmatprep.subr.mxu0 0.0
        %2170 = vmatpush1.msra.mxu0 %v1877
        %2171 = vmatprep.subr.mxu0 0.0
        %2172 = vmatpush1.msra.mxu0 %v1878
        %2173 = vmatprep.subr.mxu0 0.0
        %2174 = vmatpush1.msra.mxu0 %v1879
        %2175 = vmatprep.subr.mxu0 0.0
        %2176 = vmatpush1.msra.mxu0 %v1880
        %2177 = vmatprep.subr.mxu0 0.0
        %2178 = vmatpush1.msra.mxu0 %v1881
        %2179 = vmatprep.subr.mxu0 0.0
        %2180 = vmatpush1.msra.mxu0 %v1882
        %2181 = vmatprep.subr.mxu0 0.0
        %2182 = vmatpush1.msra.mxu0 %v1883
        %2183 = vmatprep.subr.mxu0 0.0
        %2184 = vmatpush1.msra.mxu0 %v1884
        %2185 = vmatprep.subr.mxu0 0.0
        %2186 = vmatpush1.msra.mxu0 %v1885
        %2187 = vmatprep.subr.mxu0 0.0
        %2188 = vmatpush1.msra.mxu0 %v1886
        %2189 = vmatprep.subr.mxu0 0.0
        %2190 = vmatpush1.msra.mxu0 %v1887
        %2191 = vmatprep.subr.mxu0 0.0
        %2192 = vmatpush1.msra.mxu0 %v1888
        %2193 = vmatprep.subr.mxu0 0.0
        %2194 = vmatpush1.msra.mxu0 %v1889
        %2195 = vmatprep.subr.mxu0 0.0
        %2196 = vmatpush1.msra.mxu0 %v1890
        %2197 = vmatprep.subr.mxu0 0.0
        %2198 = vmatpush1.msra.mxu0 %v1891
        %2199 = vmatprep.subr.mxu0 0.0
        %2200 = vmatpush1.msra.mxu0 %v1892
        %2201 = vmatprep.subr.mxu0 0.0
        %2202 = vmatpush1.msra.mxu0 %v1893
        %2203 = vmatprep.subr.mxu0 0.0
        %2204 = vmatpush1.msra.mxu0 %v1894
        %2205 = vmatprep.subr.mxu0 0.0
        %2206 = vmatpush1.msra.mxu0 %v1895
        %2207 = vmatprep.subr.mxu0 0.0
        %2208 = vmatpush1.msra.mxu0 %v1896
        %2209 = vmatprep.subr.mxu0 0.0
        %2210 = vmatpush1.msra.mxu0 %v1897
        %2211 = vmatprep.subr.mxu0 0.0
        %2212 = vmatpush1.msra.mxu0 %v1898
        %2213 = vmatprep.subr.mxu0 0.0
        %2214 = vmatpush1.msra.mxu0 %v1899
        %2215 = vmatprep.subr.mxu0 0.0
        %2216 = vmatpush1.msra.mxu0 %v1900
        %2217 = vmatprep.subr.mxu0 0.0
        %2218 = vmatpush1.msra.mxu0 %v1901
        %2219 = vmatprep.subr.mxu0 0.0
        %2220 = vmatpush1.msra.mxu0 %v1902
        %2221 = vmatprep.subr.mxu0 0.0
        %2222 = vmatpush1.msra.mxu0 %v1903
        %2223 = vmatprep.subr.mxu0 0.0
        %2224 = vmatpush1.msra.mxu0 %v1904
        %2225 = vmatprep.subr.mxu0 0.0
        %2226 = vmatpush1.msra.mxu0 %v1905
        %2227 = vmatprep.subr.mxu0 0.0
        %2228 = vmatpush1.msra.mxu0 %v1906
        %2229 = vmatprep.subr.mxu0 0.0
        %2230 = vmatpush1.msra.mxu0 %v1907
        %2231 = vmatprep.subr.mxu0 0.0
        %2232 = vmatpush1.msra.mxu0 %v1908
        %2233 = vmatprep.mubr.f32.mxu0 %v2154
        %2234 = vmatmul.mubr.f32.gmra.mrb[0].mxu0 %v2153
        %v2235 = vpop.f32.mrb[0].mxu0
        %v2236 = vadd.f32 0.0, %v2235
        %v2237 = vpop.f32.mrb[0].mxu0
        %2238 = vmatprep.mubr.f32.mxu0 %v2156
        %2239 = vmatmul.mubr.f32.gmra.mrb[0].mxu0 %v2155
        %v2240 = vpop.f32.mrb[0].mxu0
        %v2241 = vadd.f32 0.0, %v2240
        %v2242 = vpop.f32.mrb[0].mxu0
        %2243 = vmatprep.mubr.f32.mxu0 %v2158
        %2244 = vmatmul.mubr.f32.gmra.mrb[0].mxu0 %v2157
        %v2245 = vpop.f32.mrb[0].mxu0
        %v2246 = vadd.f32 0.0, %v2245
        %v2247 = vpop.f32.mrb[0].mxu0
        %2248 = vmatprep.mubr.f32.mxu0 %v2160
        %2249 = vmatmul.mubr.f32.gmra.mrb[0].mxu0 %v2159
        %v2250 = vpop.f32.mrb[0].mxu0
        %v2251 = vadd.f32 0.0, %v2250
        %v2252 = vpop.f32.mrb[0].mxu0
        %2253 = vmatprep.mubr.f32.mxu0 %v2162
        %2254 = vmatmul.mubr.f32.gmra.mrb[0].mxu0 %v2161
        %v2255 = vpop.f32.mrb[0].mxu0
        %v2256 = vadd.f32 0.0, %v2255
        %v2257 = vpop.f32.mrb[0].mxu0
        %2258 = vmatprep.mubr.f32.mxu0 %v2164
        %2259 = vmatmul.mubr.f32.gmra.mrb[0].mxu0 %v2163
        %v2260 = vpop.f32.mrb[0].mxu0
        %v2261 = vadd.f32 0.0, %v2260
        %v2262 = vpop.f32.mrb[0].mxu0
        %2263 = vmatprep.mubr.f32.mxu0 %v2166
        %2264 = vmatmul.mubr.f32.gmra.mrb[0].mxu0 %v2165
        %v2265 = vpop.f32.mrb[0].mxu0
        %v2266 = vadd.f32 0.0, %v2265
        %v2267 = vpop.f32.mrb[0].mxu0
        %2268 = vmatprep.mubr.f32.mxu0 %v2168
        %2269 = vmatmul.mubr.f32.gmra.mrb[0].mxu0 %v2167
        %v2270 = vpop.f32.mrb[0].mxu0
        %v2271 = vadd.f32 0.0, %v2270
        %v2272 = vpop.f32.mrb[0].mxu0
        %2273 = vdwg.mxu0
        %s2274 = scalar_lea.vmem %s3, 384
        %v2275 = vld [vmem:[%s2274] sm:$0xff]
        %v2276 = vld [vmem:[%s2274 + $0x8] sm:$0xff]
        %v2277 = vld [vmem:[%s2274 + $0x10] sm:$0xff]
        %v2278 = vld [vmem:[%s2274 + $0x18] sm:$0xff]
        %v2279 = vld [vmem:[%s2274 + $0x20] sm:$0xff]
        %v2280 = vld [vmem:[%s2274 + $0x28] sm:$0xff]
        %v2281 = vld [vmem:[%s2274 + $0x30] sm:$0xff]
        %v2282 = vld [vmem:[%s2274 + $0x38] sm:$0xff]
        %v2283 = vld [vmem:[%s2274 + $0x40] sm:$0xff]
        %v2284 = vld [vmem:[%s2274 + $0x48] sm:$0xff]
        %v2285 = vld [vmem:[%s2274 + $0x50] sm:$0xff]
        %v2286 = vld [vmem:[%s2274 + $0x58] sm:$0xff]
        %v2287 = vld [vmem:[%s2274 + $0x60] sm:$0xff]
        %v2288 = vld [vmem:[%s2274 + $0x68] sm:$0xff]
        %v2289 = vld [vmem:[%s2274 + $0x70] sm:$0xff]
        %v2290 = vld [vmem:[%s2274 + $0x78] sm:$0xff]
        %2291 = vmatprep.subr.mxu0 0.0
        %2292 = vmatpush1.msra.mxu0 %v1877
        %2293 = vmatprep.subr.mxu0 0.0
        %2294 = vmatpush1.msra.mxu0 %v1878
        %2295 = vmatprep.subr.mxu0 0.0
        %2296 = vmatpush1.msra.mxu0 %v1879
        %2297 = vmatprep.subr.mxu0 0.0
        %2298 = vmatpush1.msra.mxu0 %v1880
        %2299 = vmatprep.subr.mxu0 0.0
        %2300 = vmatpush1.msra.mxu0 %v1881
        %2301 = vmatprep.subr.mxu0 0.0
        %2302 = vmatpush1.msra.mxu0 %v1882
        %2303 = vmatprep.subr.mxu0 0.0
        %2304 = vmatpush1.msra.mxu0 %v1883
        %2305 = vmatprep.subr.mxu0 0.0
        %2306 = vmatpush1.msra.mxu0 %v1884
        %2307 = vmatprep.subr.mxu0 0.0
        %2308 = vmatpush1.msra.mxu0 %v1885
        %2309 = vmatprep.subr.mxu0 0.0
        %2310 = vmatpush1.msra.mxu0 %v1886
        %2311 = vmatprep.subr.mxu0 0.0
        %2312 = vmatpush1.msra.mxu0 %v1887
        %2313 = vmatprep.subr.mxu0 0.0
        %2314 = vmatpush1.msra.mxu0 %v1888
        %2315 = vmatprep.subr.mxu0 0.0
        %2316 = vmatpush1.msra.mxu0 %v1889
        %2317 = vmatprep.subr.mxu0 0.0
        %2318 = vmatpush1.msra.mxu0 %v1890
        %2319 = vmatprep.subr.mxu0 0.0
        %2320 = vmatpush1.msra.mxu0 %v1891
        %2321 = vmatprep.subr.mxu0 0.0
        %2322 = vmatpush1.msra.mxu0 %v1892
        %2323 = vmatprep.subr.mxu0 0.0
        %2324 = vmatpush1.msra.mxu0 %v1893
        %2325 = vmatprep.subr.mxu0 0.0
        %2326 = vmatpush1.msra.mxu0 %v1894
        %2327 = vmatprep.subr.mxu0 0.0
        %2328 = vmatpush1.msra.mxu0 %v1895
        %2329 = vmatprep.subr.mxu0 0.0
        %2330 = vmatpush1.msra.mxu0 %v1896
        %2331 = vmatprep.subr.mxu0 0.0
        %2332 = vmatpush1.msra.mxu0 %v1897
        %2333 = vmatprep.subr.mxu0 0.0
        %2334 = vmatpush1.msra.mxu0 %v1898
        %2335 = vmatprep.subr.mxu0 0.0
        %2336 = vmatpush1.msra.mxu0 %v1899
        %2337 = vmatprep.subr.mxu0 0.0
        %2338 = vmatpush1.msra.mxu0 %v1900
        %2339 = vmatprep.subr.mxu0 0.0
        %2340 = vmatpush1.msra.mxu0 %v1901
        %2341 = vmatprep.subr.mxu0 0.0
        %2342 = vmatpush1.msra.mxu0 %v1902
        %2343 = vmatprep.subr.mxu0 0.0
        %2344 = vmatpush1.msra.mxu0 %v1903
        %2345 = vmatprep.subr.mxu0 0.0
        %2346 = vmatpush1.msra.mxu0 %v1904
        %2347 = vmatprep.subr.mxu0 0.0
        %2348 = vmatpush1.msra.mxu0 %v1905
        %2349 = vmatprep.subr.mxu0 0.0
        %2350 = vmatpush1.msra.mxu0 %v1906
        %2351 = vmatprep.subr.mxu0 0.0
        %2352 = vmatpush1.msra.mxu0 %v1907
        %2353 = vmatprep.subr.mxu0 0.0
        %2354 = vmatpush1.msra.mxu0 %v1908
        %2355 = vmatprep.mubr.f32.mxu0 %v2276
        %2356 = vmatmul.mubr.f32.gmra.mrb[0].mxu0 %v2275
        %v2357 = vpop.f32.mrb[0].mxu0
        %v2358 = vadd.f32 0.0, %v2357
        %v2359 = vpop.f32.mrb[0].mxu0
        %2360 = vmatprep.mubr.f32.mxu0 %v2278
        %2361 = vmatmul.mubr.f32.gmra.mrb[0].mxu0 %v2277
        %v2362 = vpop.f32.mrb[0].mxu0
        %v2363 = vadd.f32 0.0, %v2362
        %v2364 = vpop.f32.mrb[0].mxu0
        %2365 = vmatprep.mubr.f32.mxu0 %v2280
        %2366 = vmatmul.mubr.f32.gmra.mrb[0].mxu0 %v2279
        %v2367 = vpop.f32.mrb[0].mxu0
        %v2368 = vadd.f32 0.0, %v2367
        %v2369 = vpop.f32.mrb[0].mxu0
        %2370 = vmatprep.mubr.f32.mxu0 %v2282
        %2371 = vmatmul.mubr.f32.gmra.mrb[0].mxu0 %v2281
        %v2372 = vpop.f32.mrb[0].mxu0
        %v2373 = vadd.f32 0.0, %v2372
        %v2374 = vpop.f32.mrb[0].mxu0
        %2375 = vmatprep.mubr.f32.mxu0 %v2284
        %2376 = vmatmul.mubr.f32.gmra.mrb[0].mxu0 %v2283
        %v2377 = vpop.f32.mrb[0].mxu0
        %v2378 = vadd.f32 0.0, %v2377
        %v2379 = vpop.f32.mrb[0].mxu0
        %2380 = vmatprep.mubr.f32.mxu0 %v2286
        %2381 = vmatmul.mubr.f32.gmra.mrb[0].mxu0 %v2285
        %v2382 = vpop.f32.mrb[0].mxu0
        %v2383 = vadd.f32 0.0, %v2382
        %v2384 = vpop.f32.mrb[0].mxu0
        %2385 = vmatprep.mubr.f32.mxu0 %v2288
        %2386 = vmatmul.mubr.f32.gmra.mrb[0].mxu0 %v2287
        %v2387 = vpop.f32.mrb[0].mxu0
        %v2388 = vadd.f32 0.0, %v2387
        %v2389 = vpop.f32.mrb[0].mxu0
        %2390 = vmatprep.mubr.f32.mxu0 %v2290
        %2391 = vmatmul.mubr.f32.gmra.mrb[0].mxu0 %v2289
        %v2392 = vpop.f32.mrb[0].mxu0
        %v2393 = vadd.f32 0.0, %v2392
        %v2394 = vpop.f32.mrb[0].mxu0
        %2395 = vdwg.mxu0
        %v2396 = vmax.f32 %v1992, %v2114
        %v2397 = vmax.f32 %v1997, %v2119
        %v2398 = vmax.f32 %v2002, %v2124
        %v2399 = vmax.f32 %v2007, %v2129
        %v2400 = vmax.f32 %v2012, %v2134
        %v2401 = vmax.f32 %v2017, %v2139
        %v2402 = vmax.f32 %v2022, %v2144
        %v2403 = vmax.f32 %v2027, %v2149
        %v2404 = vmax.f32 %v2236, %v2358
        %v2405 = vmax.f32 %v2241, %v2363
        %v2406 = vmax.f32 %v2246, %v2368
        %v2407 = vmax.f32 %v2251, %v2373
        %v2408 = vmax.f32 %v2256, %v2378
        %v2409 = vmax.f32 %v2261, %v2383
        %v2410 = vmax.f32 %v2266, %v2388
        %v2411 = vmax.f32 %v2271, %v2393
        %v2412 = vmax.f32 %v2396, %v2404
        %v2413 = vmax.f32 %v2397, %v2405
        %v2414 = vmax.f32 %v2398, %v2406
        %v2415 = vmax.f32 %v2399, %v2407
        %v2416 = vmax.f32 %v2400, %v2408
        %v2417 = vmax.f32 %v2401, %v2409
        %v2418 = vmax.f32 %v2402, %v2410
        %v2419 = vmax.f32 %v2403, %v2411
        %v2420 = vld [vmem:[%s4] sm:$0xff]
        %v2421 = vld [vmem:[%s4 + $0x8] sm:$0xff]
        %s2422 = scalar_lea.vmem %s4, 16
        %v2423 = vld [vmem:[%s2422] sm:$0xff]
        %v2424 = vld [vmem:[%s2422 + $0x8] sm:$0xff]
        %v2426 = vrot.slane %v2412, 4
        %vm2427 = vcmask 130048
        %v2428 = vsel %vm2427, %v2426, 0
        %2430 = vmatprep.subr.mxu0 0.0
        %2431 = vmatpush1.msra.mxu0 %v2423
        %2432 = vmatprep.subr.mxu0 0.0
        %2433 = vmatpush1.msra.mxu0 %v2424
        %2434 = vmatprep.subr.mxu0 0.0
        %2435 = vmatpush1.msra.mxu0 0.0
        %2436 = vmatprep.subr.mxu0 0.0
        %2437 = vmatpush1.msra.mxu0 0.0
        %2438 = vmatprep.subr.mxu0 0.0
        %2439 = vmatpush1.msra.mxu0 0.0
        %2440 = vmatprep.subr.mxu0 0.0
        %2441 = vmatpush1.msra.mxu0 0.0
        %2442 = vmatprep.subr.mxu0 0.0
        %2443 = vmatpush1.msra.mxu0 0.0
        %2444 = vmatprep.subr.mxu0 0.0
        %2445 = vmatpush1.msra.mxu0 0.0
        %2446 = vmatprep.subr.mxu0 0.0
        %2447 = vmatpush1.msra.mxu0 0.0
        %2448 = vmatprep.subr.mxu0 0.0
        %2449 = vmatpush1.msra.mxu0 0.0
        %2450 = vmatprep.subr.mxu0 0.0
        %2451 = vmatpush1.msra.mxu0 0.0
        %2452 = vmatprep.subr.mxu0 0.0
        %2453 = vmatpush1.msra.mxu0 0.0
        %2454 = vmatprep.subr.mxu0 0.0
        %2455 = vmatpush1.msra.mxu0 0.0
        %2456 = vmatprep.subr.mxu0 0.0
        %2457 = vmatpush1.msra.mxu0 0.0
        %2458 = vmatprep.subr.mxu0 0.0
        %2459 = vmatpush1.msra.mxu0 0.0
        %2460 = vmatprep.subr.mxu0 0.0
        %2461 = vmatpush1.msra.mxu0 0.0
        %2462 = vmatprep.subr.mxu0 0.0
        %2463 = vmatpush1.msra.mxu0 0.0
        %2464 = vmatprep.subr.mxu0 0.0
        %2465 = vmatpush1.msra.mxu0 0.0
        %2466 = vmatprep.subr.mxu0 0.0
        %2467 = vmatpush1.msra.mxu0 0.0
        %2468 = vmatprep.subr.mxu0 0.0
        %2469 = vmatpush1.msra.mxu0 0.0
        %2470 = vmatprep.subr.mxu0 0.0
        %2471 = vmatpush1.msra.mxu0 0.0
        %2472 = vmatprep.subr.mxu0 0.0
        %2473 = vmatpush1.msra.mxu0 0.0
        %2474 = vmatprep.subr.mxu0 0.0
        %2475 = vmatpush1.msra.mxu0 0.0
        %2476 = vmatprep.subr.mxu0 0.0
        %2477 = vmatpush1.msra.mxu0 0.0
        %2478 = vmatprep.subr.mxu0 0.0
        %2479 = vmatpush1.msra.mxu0 0.0
        %2480 = vmatprep.subr.mxu0 0.0
        %2481 = vmatpush1.msra.mxu0 0.0
        %2482 = vmatprep.subr.mxu0 0.0
        %2483 = vmatpush1.msra.mxu0 0.0
        %2484 = vmatprep.subr.mxu0 0.0
        %2485 = vmatpush1.msra.mxu0 0.0
        %2486 = vmatprep.subr.mxu0 0.0
        %2487 = vmatpush1.msra.mxu0 0.0
        %2488 = vmatprep.subr.mxu0 0.0
        %2489 = vmatpush1.msra.mxu0 0.0
        %2490 = vmatprep.subr.mxu0 0.0
        %2491 = vmatpush1.msra.mxu0 0.0
        %2492 = vmatprep.subr.mxu0 0.0
        %2493 = vmatpush1.msra.mxu0 0.0
        %2494 = vmatprep.mubr.f32.mxu0 0.0
        %2495 = vmatmul.mubr.f32.gmra.mrb[0].mxu0 %v2428
        %v2496 = vpop.f32.mrb[0].mxu0
        %v2497 = vadd.f32 0.0, %v2496
        %v2498 = vpop.f32.mrb[0].mxu0
        %2499 = vdwg.mxu0
        %v2500 = vsel %vm2427, %v2412, 0
        %2502 = vmatprep.subr.mxu0 0.0
        %2503 = vmatpush1.msra.mxu0 %v2420
        %2504 = vmatprep.subr.mxu0 0.0
        %2505 = vmatpush1.msra.mxu0 %v2421
        %2506 = vmatprep.subr.mxu0 0.0
        %2507 = vmatpush1.msra.mxu0 0.0
        %2508 = vmatprep.subr.mxu0 0.0
        %2509 = vmatpush1.msra.mxu0 0.0
        %2510 = vmatprep.subr.mxu0 0.0
        %2511 = vmatpush1.msra.mxu0 0.0
        %2512 = vmatprep.subr.mxu0 0.0
        %2513 = vmatpush1.msra.mxu0 0.0
        %2514 = vmatprep.subr.mxu0 0.0
        %2515 = vmatpush1.msra.mxu0 0.0
        %2516 = vmatprep.subr.mxu0 0.0
        %2517 = vmatpush1.msra.mxu0 0.0
        %2518 = vmatprep.subr.mxu0 0.0
        %2519 = vmatpush1.msra.mxu0 0.0
        %2520 = vmatprep.subr.mxu0 0.0
        %2521 = vmatpush1.msra.mxu0 0.0
        %2522 = vmatprep.subr.mxu0 0.0
        %2523 = vmatpush1.msra.mxu0 0.0
        %2524 = vmatprep.subr.mxu0 0.0
        %2525 = vmatpush1.msra.mxu0 0.0
        %2526 = vmatprep.subr.mxu0 0.0
        %2527 = vmatpush1.msra.mxu0 0.0
        %2528 = vmatprep.subr.mxu0 0.0
        %2529 = vmatpush1.msra.mxu0 0.0
        %2530 = vmatprep.subr.mxu0 0.0
        %2531 = vmatpush1.msra.mxu0 0.0
        %2532 = vmatprep.subr.mxu0 0.0
        %2533 = vmatpush1.msra.mxu0 0.0
        %2534 = vmatprep.subr.mxu0 0.0
        %2535 = vmatpush1.msra.mxu0 0.0
        %2536 = vmatprep.subr.mxu0 0.0
        %2537 = vmatpush1.msra.mxu0 0.0
        %2538 = vmatprep.subr.mxu0 0.0
        %2539 = vmatpush1.msra.mxu0 0.0
        %2540 = vmatprep.subr.mxu0 0.0
        %2541 = vmatpush1.msra.mxu0 0.0
        %2542 = vmatprep.subr.mxu0 0.0
        %2543 = vmatpush1.msra.mxu0 0.0
        %2544 = vmatprep.subr.mxu0 0.0
        %2545 = vmatpush1.msra.mxu0 0.0
        %2546 = vmatprep.subr.mxu0 0.0
        %2547 = vmatpush1.msra.mxu0 0.0
        %2548 = vmatprep.subr.mxu0 0.0
        %2549 = vmatpush1.msra.mxu0 0.0
        %2550 = vmatprep.subr.mxu0 0.0
        %2551 = vmatpush1.msra.mxu0 0.0
        %2552 = vmatprep.subr.mxu0 0.0
        %2553 = vmatpush1.msra.mxu0 0.0
        %2554 = vmatprep.subr.mxu0 0.0
        %2555 = vmatpush1.msra.mxu0 0.0
        %2556 = vmatprep.subr.mxu0 0.0
        %2557 = vmatpush1.msra.mxu0 0.0
        %2558 = vmatprep.subr.mxu0 0.0
        %2559 = vmatpush1.msra.mxu0 0.0
        %2560 = vmatprep.subr.mxu0 0.0
        %2561 = vmatpush1.msra.mxu0 0.0
        %2562 = vmatprep.subr.mxu0 0.0
        %2563 = vmatpush1.msra.mxu0 0.0
        %2564 = vmatprep.subr.mxu0 0.0
        %2565 = vmatpush1.msra.mxu0 0.0
        %2566 = vmatprep.mubr.f32.mxu0 0.0
        %2567 = vmatmul.mubr.f32.gmra.mrb[0].mxu0 %v2500
        %v2568 = vpop.f32.mrb[0].mxu0
        %v2569 = vadd.f32 %v2497, %v2568
        %v2570 = vpop.f32.mrb[0].mxu0
        %2571 = vdwg.mxu0
        %s2572 = scalar_lea.vmem %s4, 32
        %v2573 = vld [vmem:[%s2572] sm:$0xff]
        %v2574 = vld [vmem:[%s2572 + $0x8] sm:$0xff]
        %v2576 = vsel %vm2427, %v2413, 0
        %2578 = vmatprep.subr.mxu0 0.0
        %2579 = vmatpush1.msra.mxu0 %v2573
        %2580 = vmatprep.subr.mxu0 0.0
        %2581 = vmatpush1.msra.mxu0 %v2574
        %2582 = vmatprep.subr.mxu0 0.0
        %2583 = vmatpush1.msra.mxu0 0.0
        %2584 = vmatprep.subr.mxu0 0.0
        %2585 = vmatpush1.msra.mxu0 0.0
        %2586 = vmatprep.subr.mxu0 0.0
        %2587 = vmatpush1.msra.mxu0 0.0
        %2588 = vmatprep.subr.mxu0 0.0
        %2589 = vmatpush1.msra.mxu0 0.0
        %2590 = vmatprep.subr.mxu0 0.0
        %2591 = vmatpush1.msra.mxu0 0.0
        %2592 = vmatprep.subr.mxu0 0.0
        %2593 = vmatpush1.msra.mxu0 0.0
        %2594 = vmatprep.subr.mxu0 0.0
        %2595 = vmatpush1.msra.mxu0 0.0
        %2596 = vmatprep.subr.mxu0 0.0
        %2597 = vmatpush1.msra.mxu0 0.0
        %2598 = vmatprep.subr.mxu0 0.0
        %2599 = vmatpush1.msra.mxu0 0.0
        %2600 = vmatprep.subr.mxu0 0.0
        %2601 = vmatpush1.msra.mxu0 0.0
        %2602 = vmatprep.subr.mxu0 0.0
        %2603 = vmatpush1.msra.mxu0 0.0
        %2604 = vmatprep.subr.mxu0 0.0
        %2605 = vmatpush1.msra.mxu0 0.0
        %2606 = vmatprep.subr.mxu0 0.0
        %2607 = vmatpush1.msra.mxu0 0.0
        %2608 = vmatprep.subr.mxu0 0.0
        %2609 = vmatpush1.msra.mxu0 0.0
        %2610 = vmatprep.subr.mxu0 0.0
        %2611 = vmatpush1.msra.mxu0 0.0
        %2612 = vmatprep.subr.mxu0 0.0
        %2613 = vmatpush1.msra.mxu0 0.0
        %2614 = vmatprep.subr.mxu0 0.0
        %2615 = vmatpush1.msra.mxu0 0.0
        %2616 = vmatprep.subr.mxu0 0.0
        %2617 = vmatpush1.msra.mxu0 0.0
        %2618 = vmatprep.subr.mxu0 0.0
        %2619 = vmatpush1.msra.mxu0 0.0
        %2620 = vmatprep.subr.mxu0 0.0
        %2621 = vmatpush1.msra.mxu0 0.0
        %2622 = vmatprep.subr.mxu0 0.0
        %2623 = vmatpush1.msra.mxu0 0.0
        %2624 = vmatprep.subr.mxu0 0.0
        %2625 = vmatpush1.msra.mxu0 0.0
        %2626 = vmatprep.subr.mxu0 0.0
        %2627 = vmatpush1.msra.mxu0 0.0
        %2628 = vmatprep.subr.mxu0 0.0
        %2629 = vmatpush1.msra.mxu0 0.0
        %2630 = vmatprep.subr.mxu0 0.0
        %2631 = vmatpush1.msra.mxu0 0.0
        %2632 = vmatprep.subr.mxu0 0.0
        %2633 = vmatpush1.msra.mxu0 0.0
        %2634 = vmatprep.subr.mxu0 0.0
        %2635 = vmatpush1.msra.mxu0 0.0
        %2636 = vmatprep.subr.mxu0 0.0
        %2637 = vmatpush1.msra.mxu0 0.0
        %2638 = vmatprep.subr.mxu0 0.0
        %2639 = vmatpush1.msra.mxu0 0.0
        %2640 = vmatprep.subr.mxu0 0.0
        %2641 = vmatpush1.msra.mxu0 0.0
        %2642 = vmatprep.mubr.f32.mxu0 0.0
        %2643 = vmatmul.mubr.f32.gmra.mrb[0].mxu0 %v2576
        %v2644 = vpop.f32.mrb[0].mxu0
        %v2645 = vadd.f32 0.0, %v2644
        %v2646 = vpop.f32.mrb[0].mxu0
        %2647 = vdwg.mxu0
        %v2648 = vadd.f32 %v2569, %v2645
        %s2649 = scalar_lea.vmem %s4, 48
        %v2650 = vld [vmem:[%s2649] sm:$0xff]
        %v2651 = vld [vmem:[%s2649 + $0x8] sm:$0xff]
        %v2652 = vrot.slane %v2413, 4
        %v2653 = vsel %vm2427, %v2652, 0
        %2655 = vmatprep.subr.mxu0 0.0
        %2656 = vmatpush1.msra.mxu0 %v2650
        %2657 = vmatprep.subr.mxu0 0.0
        %2658 = vmatpush1.msra.mxu0 %v2651
        %2659 = vmatprep.subr.mxu0 0.0
        %2660 = vmatpush1.msra.mxu0 0.0
        %2661 = vmatprep.subr.mxu0 0.0
        %2662 = vmatpush1.msra.mxu0 0.0
        %2663 = vmatprep.subr.mxu0 0.0
        %2664 = vmatpush1.msra.mxu0 0.0
        %2665 = vmatprep.subr.mxu0 0.0
        %2666 = vmatpush1.msra.mxu0 0.0
        %2667 = vmatprep.subr.mxu0 0.0
        %2668 = vmatpush1.msra.mxu0 0.0
        %2669 = vmatprep.subr.mxu0 0.0
        %2670 = vmatpush1.msra.mxu0 0.0
        %2671 = vmatprep.subr.mxu0 0.0
        %2672 = vmatpush1.msra.mxu0 0.0
        %2673 = vmatprep.subr.mxu0 0.0
        %2674 = vmatpush1.msra.mxu0 0.0
        %2675 = vmatprep.subr.mxu0 0.0
        %2676 = vmatpush1.msra.mxu0 0.0
        %2677 = vmatprep.subr.mxu0 0.0
        %2678 = vmatpush1.msra.mxu0 0.0
        %2679 = vmatprep.subr.mxu0 0.0
        %2680 = vmatpush1.msra.mxu0 0.0
        %2681 = vmatprep.subr.mxu0 0.0
        %2682 = vmatpush1.msra.mxu0 0.0
        %2683 = vmatprep.subr.mxu0 0.0
        %2684 = vmatpush1.msra.mxu0 0.0
        %2685 = vmatprep.subr.mxu0 0.0
        %2686 = vmatpush1.msra.mxu0 0.0
        %2687 = vmatprep.subr.mxu0 0.0
        %2688 = vmatpush1.msra.mxu0 0.0
        %2689 = vmatprep.subr.mxu0 0.0
        %2690 = vmatpush1.msra.mxu0 0.0
        %2691 = vmatprep.subr.mxu0 0.0
        %2692 = vmatpush1.msra.mxu0 0.0
        %2693 = vmatprep.subr.mxu0 0.0
        %2694 = vmatpush1.msra.mxu0 0.0
        %2695 = vmatprep.subr.mxu0 0.0
        %2696 = vmatpush1.msra.mxu0 0.0
        %2697 = vmatprep.subr.mxu0 0.0
        %2698 = vmatpush1.msra.mxu0 0.0
        %2699 = vmatprep.subr.mxu0 0.0
        %2700 = vmatpush1.msra.mxu0 0.0
        %2701 = vmatprep.subr.mxu0 0.0
        %2702 = vmatpush1.msra.mxu0 0.0
        %2703 = vmatprep.subr.mxu0 0.0
        %2704 = vmatpush1.msra.mxu0 0.0
        %2705 = vmatprep.subr.mxu0 0.0
        %2706 = vmatpush1.msra.mxu0 0.0
        %2707 = vmatprep.subr.mxu0 0.0
        %2708 = vmatpush1.msra.mxu0 0.0
        %2709 = vmatprep.subr.mxu0 0.0
        %2710 = vmatpush1.msra.mxu0 0.0
        %2711 = vmatprep.subr.mxu0 0.0
        %2712 = vmatpush1.msra.mxu0 0.0
        %2713 = vmatprep.subr.mxu0 0.0
        %2714 = vmatpush1.msra.mxu0 0.0
        %2715 = vmatprep.subr.mxu0 0.0
        %2716 = vmatpush1.msra.mxu0 0.0
        %2717 = vmatprep.subr.mxu0 0.0
        %2718 = vmatpush1.msra.mxu0 0.0
        %2719 = vmatprep.mubr.f32.mxu0 0.0
        %2720 = vmatmul.mubr.f32.gmra.mrb[0].mxu0 %v2653
        %v2721 = vpop.f32.mrb[0].mxu0
        %v2722 = vadd.f32 0.0, %v2721
        %v2723 = vpop.f32.mrb[0].mxu0
        %2724 = vdwg.mxu0
        %v2725 = vadd.f32 %v2648, %v2722
        %s2726 = scalar_lea.vmem %s4, 64
        %v2727 = vld [vmem:[%s2726] sm:$0xff]
        %v2728 = vld [vmem:[%s2726 + $0x8] sm:$0xff]
        %v2730 = vsel %vm2427, %v2414, 0
        %2732 = vmatprep.subr.mxu0 0.0
        %2733 = vmatpush1.msra.mxu0 %v2727
        %2734 = vmatprep.subr.mxu0 0.0
        %2735 = vmatpush1.msra.mxu0 %v2728
        %2736 = vmatprep.subr.mxu0 0.0
        %2737 = vmatpush1.msra.mxu0 0.0
        %2738 = vmatprep.subr.mxu0 0.0
        %2739 = vmatpush1.msra.mxu0 0.0
        %2740 = vmatprep.subr.mxu0 0.0
        %2741 = vmatpush1.msra.mxu0 0.0
        %2742 = vmatprep.subr.mxu0 0.0
        %2743 = vmatpush1.msra.mxu0 0.0
        %2744 = vmatprep.subr.mxu0 0.0
        %2745 = vmatpush1.msra.mxu0 0.0
        %2746 = vmatprep.subr.mxu0 0.0
        %2747 = vmatpush1.msra.mxu0 0.0
        %2748 = vmatprep.subr.mxu0 0.0
        %2749 = vmatpush1.msra.mxu0 0.0
        %2750 = vmatprep.subr.mxu0 0.0
        %2751 = vmatpush1.msra.mxu0 0.0
        %2752 = vmatprep.subr.mxu0 0.0
        %2753 = vmatpush1.msra.mxu0 0.0
        %2754 = vmatprep.subr.mxu0 0.0
        %2755 = vmatpush1.msra.mxu0 0.0
        %2756 = vmatprep.subr.mxu0 0.0
        %2757 = vmatpush1.msra.mxu0 0.0
        %2758 = vmatprep.subr.mxu0 0.0
        %2759 = vmatpush1.msra.mxu0 0.0
        %2760 = vmatprep.subr.mxu0 0.0
        %2761 = vmatpush1.msra.mxu0 0.0
        %2762 = vmatprep.subr.mxu0 0.0
        %2763 = vmatpush1.msra.mxu0 0.0
        %2764 = vmatprep.subr.mxu0 0.0
        %2765 = vmatpush1.msra.mxu0 0.0
        %2766 = vmatprep.subr.mxu0 0.0
        %2767 = vmatpush1.msra.mxu0 0.0
        %2768 = vmatprep.subr.mxu0 0.0
        %2769 = vmatpush1.msra.mxu0 0.0
        %2770 = vmatprep.subr.mxu0 0.0
        %2771 = vmatpush1.msra.mxu0 0.0
        %2772 = vmatprep.subr.mxu0 0.0
        %2773 = vmatpush1.msra.mxu0 0.0
        %2774 = vmatprep.subr.mxu0 0.0
        %2775 = vmatpush1.msra.mxu0 0.0
        %2776 = vmatprep.subr.mxu0 0.0
        %2777 = vmatpush1.msra.mxu0 0.0
        %2778 = vmatprep.subr.mxu0 0.0
        %2779 = vmatpush1.msra.mxu0 0.0
        %2780 = vmatprep.subr.mxu0 0.0
        %2781 = vmatpush1.msra.mxu0 0.0
        %2782 = vmatprep.subr.mxu0 0.0
        %2783 = vmatpush1.msra.mxu0 0.0
        %2784 = vmatprep.subr.mxu0 0.0
        %2785 = vmatpush1.msra.mxu0 0.0
        %2786 = vmatprep.subr.mxu0 0.0
        %2787 = vmatpush1.msra.mxu0 0.0
        %2788 = vmatprep.subr.mxu0 0.0
        %2789 = vmatpush1.msra.mxu0 0.0
        %2790 = vmatprep.subr.mxu0 0.0
        %2791 = vmatpush1.msra.mxu0 0.0
        %2792 = vmatprep.subr.mxu0 0.0
        %2793 = vmatpush1.msra.mxu0 0.0
        %2794 = vmatprep.subr.mxu0 0.0
        %2795 = vmatpush1.msra.mxu0 0.0
        %2796 = vmatprep.mubr.f32.mxu0 0.0
        %2797 = vmatmul.mubr.f32.gmra.mrb[0].mxu0 %v2730
        %v2798 = vpop.f32.mrb[0].mxu0
        %v2799 = vadd.f32 0.0, %v2798
        %v2800 = vpop.f32.mrb[0].mxu0
        %2801 = vdwg.mxu0
        %v2802 = vadd.f32 %v2725, %v2799
        %s2803 = scalar_lea.vmem %s4, 80
        %v2804 = vld [vmem:[%s2803] sm:$0xff]
        %v2805 = vld [vmem:[%s2803 + $0x8] sm:$0xff]
        %v2806 = vrot.slane %v2414, 4
        %v2807 = vsel %vm2427, %v2806, 0
        %2809 = vmatprep.subr.mxu0 0.0
        %2810 = vmatpush1.msra.mxu0 %v2804
        %2811 = vmatprep.subr.mxu0 0.0
        %2812 = vmatpush1.msra.mxu0 %v2805
        %2813 = vmatprep.subr.mxu0 0.0
        %2814 = vmatpush1.msra.mxu0 0.0
        %2815 = vmatprep.subr.mxu0 0.0
        %2816 = vmatpush1.msra.mxu0 0.0
        %2817 = vmatprep.subr.mxu0 0.0
        %2818 = vmatpush1.msra.mxu0 0.0
        %2819 = vmatprep.subr.mxu0 0.0
        %2820 = vmatpush1.msra.mxu0 0.0
        %2821 = vmatprep.subr.mxu0 0.0
        %2822 = vmatpush1.msra.mxu0 0.0
        %2823 = vmatprep.subr.mxu0 0.0
        %2824 = vmatpush1.msra.mxu0 0.0
        %2825 = vmatprep.subr.mxu0 0.0
        %2826 = vmatpush1.msra.mxu0 0.0
        %2827 = vmatprep.subr.mxu0 0.0
        %2828 = vmatpush1.msra.mxu0 0.0
        %2829 = vmatprep.subr.mxu0 0.0
        %2830 = vmatpush1.msra.mxu0 0.0
        %2831 = vmatprep.subr.mxu0 0.0
        %2832 = vmatpush1.msra.mxu0 0.0
        %2833 = vmatprep.subr.mxu0 0.0
        %2834 = vmatpush1.msra.mxu0 0.0
        %2835 = vmatprep.subr.mxu0 0.0
        %2836 = vmatpush1.msra.mxu0 0.0
        %2837 = vmatprep.subr.mxu0 0.0
        %2838 = vmatpush1.msra.mxu0 0.0
        %2839 = vmatprep.subr.mxu0 0.0
        %2840 = vmatpush1.msra.mxu0 0.0
        %2841 = vmatprep.subr.mxu0 0.0
        %2842 = vmatpush1.msra.mxu0 0.0
        %2843 = vmatprep.subr.mxu0 0.0
        %2844 = vmatpush1.msra.mxu0 0.0
        %2845 = vmatprep.subr.mxu0 0.0
        %2846 = vmatpush1.msra.mxu0 0.0
        %2847 = vmatprep.subr.mxu0 0.0
        %2848 = vmatpush1.msra.mxu0 0.0
        %2849 = vmatprep.subr.mxu0 0.0
        %2850 = vmatpush1.msra.mxu0 0.0
        %2851 = vmatprep.subr.mxu0 0.0
        %2852 = vmatpush1.msra.mxu0 0.0
        %2853 = vmatprep.subr.mxu0 0.0
        %2854 = vmatpush1.msra.mxu0 0.0
        %2855 = vmatprep.subr.mxu0 0.0
        %2856 = vmatpush1.msra.mxu0 0.0
        %2857 = vmatprep.subr.mxu0 0.0
        %2858 = vmatpush1.msra.mxu0 0.0
        %2859 = vmatprep.subr.mxu0 0.0
        %2860 = vmatpush1.msra.mxu0 0.0
        %2861 = vmatprep.subr.mxu0 0.0
        %2862 = vmatpush1.msra.mxu0 0.0
        %2863 = vmatprep.subr.mxu0 0.0
        %2864 = vmatpush1.msra.mxu0 0.0
        %2865 = vmatprep.subr.mxu0 0.0
        %2866 = vmatpush1.msra.mxu0 0.0
        %2867 = vmatprep.subr.mxu0 0.0
        %2868 = vmatpush1.msra.mxu0 0.0
        %2869 = vmatprep.subr.mxu0 0.0
        %2870 = vmatpush1.msra.mxu0 0.0
        %2871 = vmatprep.subr.mxu0 0.0
        %2872 = vmatpush1.msra.mxu0 0.0
        %2873 = vmatprep.mubr.f32.mxu0 0.0
        %2874 = vmatmul.mubr.f32.gmra.mrb[0].mxu0 %v2807
        %v2875 = vpop.f32.mrb[0].mxu0
        %v2876 = vadd.f32 0.0, %v2875
        %v2877 = vpop.f32.mrb[0].mxu0
        %2878 = vdwg.mxu0
        %v2879 = vadd.f32 %v2802, %v2876
        %s2880 = scalar_lea.vmem %s4, 96
        %v2881 = vld [vmem:[%s2880] sm:$0xff]
        %v2882 = vld [vmem:[%s2880 + $0x8] sm:$0xff]
        %v2884 = vsel %vm2427, %v2415, 0
        %2886 = vmatprep.subr.mxu0 0.0
        %2887 = vmatpush1.msra.mxu0 %v2881
        %2888 = vmatprep.subr.mxu0 0.0
        %2889 = vmatpush1.msra.mxu0 %v2882
        %2890 = vmatprep.subr.mxu0 0.0
        %2891 = vmatpush1.msra.mxu0 0.0
        %2892 = vmatprep.subr.mxu0 0.0
        %2893 = vmatpush1.msra.mxu0 0.0
        %2894 = vmatprep.subr.mxu0 0.0
        %2895 = vmatpush1.msra.mxu0 0.0
        %2896 = vmatprep.subr.mxu0 0.0
        %2897 = vmatpush1.msra.mxu0 0.0
        %2898 = vmatprep.subr.mxu0 0.0
        %2899 = vmatpush1.msra.mxu0 0.0
        %2900 = vmatprep.subr.mxu0 0.0
        %2901 = vmatpush1.msra.mxu0 0.0
        %2902 = vmatprep.subr.mxu0 0.0
        %2903 = vmatpush1.msra.mxu0 0.0
        %2904 = vmatprep.subr.mxu0 0.0
        %2905 = vmatpush1.msra.mxu0 0.0
        %2906 = vmatprep.subr.mxu0 0.0
        %2907 = vmatpush1.msra.mxu0 0.0
        %2908 = vmatprep.subr.mxu0 0.0
        %2909 = vmatpush1.msra.mxu0 0.0
        %2910 = vmatprep.subr.mxu0 0.0
        %2911 = vmatpush1.msra.mxu0 0.0
        %2912 = vmatprep.subr.mxu0 0.0
        %2913 = vmatpush1.msra.mxu0 0.0
        %2914 = vmatprep.subr.mxu0 0.0
        %2915 = vmatpush1.msra.mxu0 0.0
        %2916 = vmatprep.subr.mxu0 0.0
        %2917 = vmatpush1.msra.mxu0 0.0
        %2918 = vmatprep.subr.mxu0 0.0
        %2919 = vmatpush1.msra.mxu0 0.0
        %2920 = vmatprep.subr.mxu0 0.0
        %2921 = vmatpush1.msra.mxu0 0.0
        %2922 = vmatprep.subr.mxu0 0.0
        %2923 = vmatpush1.msra.mxu0 0.0
        %2924 = vmatprep.subr.mxu0 0.0
        %2925 = vmatpush1.msra.mxu0 0.0
        %2926 = vmatprep.subr.mxu0 0.0
        %2927 = vmatpush1.msra.mxu0 0.0
        %2928 = vmatprep.subr.mxu0 0.0
        %2929 = vmatpush1.msra.mxu0 0.0
        %2930 = vmatprep.subr.mxu0 0.0
        %2931 = vmatpush1.msra.mxu0 0.0
        %2932 = vmatprep.subr.mxu0 0.0
        %2933 = vmatpush1.msra.mxu0 0.0
        %2934 = vmatprep.subr.mxu0 0.0
        %2935 = vmatpush1.msra.mxu0 0.0
        %2936 = vmatprep.subr.mxu0 0.0
        %2937 = vmatpush1.msra.mxu0 0.0
        %2938 = vmatprep.subr.mxu0 0.0
        %2939 = vmatpush1.msra.mxu0 0.0
        %2940 = vmatprep.subr.mxu0 0.0
        %2941 = vmatpush1.msra.mxu0 0.0
        %2942 = vmatprep.subr.mxu0 0.0
        %2943 = vmatpush1.msra.mxu0 0.0
        %2944 = vmatprep.subr.mxu0 0.0
        %2945 = vmatpush1.msra.mxu0 0.0
        %2946 = vmatprep.subr.mxu0 0.0
        %2947 = vmatpush1.msra.mxu0 0.0
        %2948 = vmatprep.subr.mxu0 0.0
        %2949 = vmatpush1.msra.mxu0 0.0
        %2950 = vmatprep.mubr.f32.mxu0 0.0
        %2951 = vmatmul.mubr.f32.gmra.mrb[0].mxu0 %v2884
        %v2952 = vpop.f32.mrb[0].mxu0
        %v2953 = vadd.f32 0.0, %v2952
        %v2954 = vpop.f32.mrb[0].mxu0
        %2955 = vdwg.mxu0
        %v2956 = vadd.f32 %v2879, %v2953
        %s2957 = scalar_lea.vmem %s4, 112
        %v2958 = vld [vmem:[%s2957] sm:$0xff]
        %v2959 = vld [vmem:[%s2957 + $0x8] sm:$0xff]
        %v2960 = vrot.slane %v2415, 4
        %v2961 = vsel %vm2427, %v2960, 0
        %2963 = vmatprep.subr.mxu0 0.0
        %2964 = vmatpush1.msra.mxu0 %v2958
        %2965 = vmatprep.subr.mxu0 0.0
        %2966 = vmatpush1.msra.mxu0 %v2959
        %2967 = vmatprep.subr.mxu0 0.0
        %2968 = vmatpush1.msra.mxu0 0.0
        %2969 = vmatprep.subr.mxu0 0.0
        %2970 = vmatpush1.msra.mxu0 0.0
        %2971 = vmatprep.subr.mxu0 0.0
        %2972 = vmatpush1.msra.mxu0 0.0
        %2973 = vmatprep.subr.mxu0 0.0
        %2974 = vmatpush1.msra.mxu0 0.0
        %2975 = vmatprep.subr.mxu0 0.0
        %2976 = vmatpush1.msra.mxu0 0.0
        %2977 = vmatprep.subr.mxu0 0.0
        %2978 = vmatpush1.msra.mxu0 0.0
        %2979 = vmatprep.subr.mxu0 0.0
        %2980 = vmatpush1.msra.mxu0 0.0
        %2981 = vmatprep.subr.mxu0 0.0
        %2982 = vmatpush1.msra.mxu0 0.0
        %2983 = vmatprep.subr.mxu0 0.0
        %2984 = vmatpush1.msra.mxu0 0.0
        %2985 = vmatprep.subr.mxu0 0.0
        %2986 = vmatpush1.msra.mxu0 0.0
        %2987 = vmatprep.subr.mxu0 0.0
        %2988 = vmatpush1.msra.mxu0 0.0
        %2989 = vmatprep.subr.mxu0 0.0
        %2990 = vmatpush1.msra.mxu0 0.0
        %2991 = vmatprep.subr.mxu0 0.0
        %2992 = vmatpush1.msra.mxu0 0.0
        %2993 = vmatprep.subr.mxu0 0.0
        %2994 = vmatpush1.msra.mxu0 0.0
        %2995 = vmatprep.subr.mxu0 0.0
        %2996 = vmatpush1.msra.mxu0 0.0
        %2997 = vmatprep.subr.mxu0 0.0
        %2998 = vmatpush1.msra.mxu0 0.0
        %2999 = vmatprep.subr.mxu0 0.0
        %3000 = vmatpush1.msra.mxu0 0.0
        %3001 = vmatprep.subr.mxu0 0.0
        %3002 = vmatpush1.msra.mxu0 0.0
        %3003 = vmatprep.subr.mxu0 0.0
        %3004 = vmatpush1.msra.mxu0 0.0
        %3005 = vmatprep.subr.mxu0 0.0
        %3006 = vmatpush1.msra.mxu0 0.0
        %3007 = vmatprep.subr.mxu0 0.0
        %3008 = vmatpush1.msra.mxu0 0.0
        %3009 = vmatprep.subr.mxu0 0.0
        %3010 = vmatpush1.msra.mxu0 0.0
        %3011 = vmatprep.subr.mxu0 0.0
        %3012 = vmatpush1.msra.mxu0 0.0
        %3013 = vmatprep.subr.mxu0 0.0
        %3014 = vmatpush1.msra.mxu0 0.0
        %3015 = vmatprep.subr.mxu0 0.0
        %3016 = vmatpush1.msra.mxu0 0.0
        %3017 = vmatprep.subr.mxu0 0.0
        %3018 = vmatpush1.msra.mxu0 0.0
        %3019 = vmatprep.subr.mxu0 0.0
        %3020 = vmatpush1.msra.mxu0 0.0
        %3021 = vmatprep.subr.mxu0 0.0
        %3022 = vmatpush1.msra.mxu0 0.0
        %3023 = vmatprep.subr.mxu0 0.0
        %3024 = vmatpush1.msra.mxu0 0.0
        %3025 = vmatprep.subr.mxu0 0.0
        %3026 = vmatpush1.msra.mxu0 0.0
        %3027 = vmatprep.mubr.f32.mxu0 0.0
        %3028 = vmatmul.mubr.f32.gmra.mrb[0].mxu0 %v2961
        %v3029 = vpop.f32.mrb[0].mxu0
        %v3030 = vadd.f32 0.0, %v3029
        %v3031 = vpop.f32.mrb[0].mxu0
        %3032 = vdwg.mxu0
        %v3033 = vadd.f32 %v2956, %v3030
        %s3034 = scalar_lea.vmem %s4, 128
        %v3035 = vld [vmem:[%s3034] sm:$0xff]
        %v3036 = vld [vmem:[%s3034 + $0x8] sm:$0xff]
        %v3038 = vsel %vm2427, %v2416, 0
        %3040 = vmatprep.subr.mxu0 0.0
        %3041 = vmatpush1.msra.mxu0 %v3035
        %3042 = vmatprep.subr.mxu0 0.0
        %3043 = vmatpush1.msra.mxu0 %v3036
        %3044 = vmatprep.subr.mxu0 0.0
        %3045 = vmatpush1.msra.mxu0 0.0
        %3046 = vmatprep.subr.mxu0 0.0
        %3047 = vmatpush1.msra.mxu0 0.0
        %3048 = vmatprep.subr.mxu0 0.0
        %3049 = vmatpush1.msra.mxu0 0.0
        %3050 = vmatprep.subr.mxu0 0.0
        %3051 = vmatpush1.msra.mxu0 0.0
        %3052 = vmatprep.subr.mxu0 0.0
        %3053 = vmatpush1.msra.mxu0 0.0
        %3054 = vmatprep.subr.mxu0 0.0
        %3055 = vmatpush1.msra.mxu0 0.0
        %3056 = vmatprep.subr.mxu0 0.0
        %3057 = vmatpush1.msra.mxu0 0.0
        %3058 = vmatprep.subr.mxu0 0.0
        %3059 = vmatpush1.msra.mxu0 0.0
        %3060 = vmatprep.subr.mxu0 0.0
        %3061 = vmatpush1.msra.mxu0 0.0
        %3062 = vmatprep.subr.mxu0 0.0
        %3063 = vmatpush1.msra.mxu0 0.0
        %3064 = vmatprep.subr.mxu0 0.0
        %3065 = vmatpush1.msra.mxu0 0.0
        %3066 = vmatprep.subr.mxu0 0.0
        %3067 = vmatpush1.msra.mxu0 0.0
        %3068 = vmatprep.subr.mxu0 0.0
        %3069 = vmatpush1.msra.mxu0 0.0
        %3070 = vmatprep.subr.mxu0 0.0
        %3071 = vmatpush1.msra.mxu0 0.0
        %3072 = vmatprep.subr.mxu0 0.0
        %3073 = vmatpush1.msra.mxu0 0.0
        %3074 = vmatprep.subr.mxu0 0.0
        %3075 = vmatpush1.msra.mxu0 0.0
        %3076 = vmatprep.subr.mxu0 0.0
        %3077 = vmatpush1.msra.mxu0 0.0
        %3078 = vmatprep.subr.mxu0 0.0
        %3079 = vmatpush1.msra.mxu0 0.0
        %3080 = vmatprep.subr.mxu0 0.0
        %3081 = vmatpush1.msra.mxu0 0.0
        %3082 = vmatprep.subr.mxu0 0.0
        %3083 = vmatpush1.msra.mxu0 0.0
        %3084 = vmatprep.subr.mxu0 0.0
        %3085 = vmatpush1.msra.mxu0 0.0
        %3086 = vmatprep.subr.mxu0 0.0
        %3087 = vmatpush1.msra.mxu0 0.0
        %3088 = vmatprep.subr.mxu0 0.0
        %3089 = vmatpush1.msra.mxu0 0.0
        %3090 = vmatprep.subr.mxu0 0.0
        %3091 = vmatpush1.msra.mxu0 0.0
        %3092 = vmatprep.subr.mxu0 0.0
        %3093 = vmatpush1.msra.mxu0 0.0
        %3094 = vmatprep.subr.mxu0 0.0
        %3095 = vmatpush1.msra.mxu0 0.0
        %3096 = vmatprep.subr.mxu0 0.0
        %3097 = vmatpush1.msra.mxu0 0.0
        %3098 = vmatprep.subr.mxu0 0.0
        %3099 = vmatpush1.msra.mxu0 0.0
        %3100 = vmatprep.subr.mxu0 0.0
        %3101 = vmatpush1.msra.mxu0 0.0
        %3102 = vmatprep.subr.mxu0 0.0
        %3103 = vmatpush1.msra.mxu0 0.0
        %3104 = vmatprep.mubr.f32.mxu0 0.0
        %3105 = vmatmul.mubr.f32.gmra.mrb[0].mxu0 %v3038
        %v3106 = vpop.f32.mrb[0].mxu0
        %v3107 = vadd.f32 0.0, %v3106
        %v3108 = vpop.f32.mrb[0].mxu0
        %3109 = vdwg.mxu0
        %v3110 = vadd.f32 %v3033, %v3107
        %s3111 = scalar_lea.vmem %s4, 144
        %v3112 = vld [vmem:[%s3111] sm:$0xff]
        %v3113 = vld [vmem:[%s3111 + $0x8] sm:$0xff]
        %v3114 = vrot.slane %v2416, 4
        %v3115 = vsel %vm2427, %v3114, 0
        %3117 = vmatprep.subr.mxu0 0.0
        %3118 = vmatpush1.msra.mxu0 %v3112
        %3119 = vmatprep.subr.mxu0 0.0
        %3120 = vmatpush1.msra.mxu0 %v3113
        %3121 = vmatprep.subr.mxu0 0.0
        %3122 = vmatpush1.msra.mxu0 0.0
        %3123 = vmatprep.subr.mxu0 0.0
        %3124 = vmatpush1.msra.mxu0 0.0
        %3125 = vmatprep.subr.mxu0 0.0
        %3126 = vmatpush1.msra.mxu0 0.0
        %3127 = vmatprep.subr.mxu0 0.0
        %3128 = vmatpush1.msra.mxu0 0.0
        %3129 = vmatprep.subr.mxu0 0.0
        %3130 = vmatpush1.msra.mxu0 0.0
        %3131 = vmatprep.subr.mxu0 0.0
        %3132 = vmatpush1.msra.mxu0 0.0
        %3133 = vmatprep.subr.mxu0 0.0
        %3134 = vmatpush1.msra.mxu0 0.0
        %3135 = vmatprep.subr.mxu0 0.0
        %3136 = vmatpush1.msra.mxu0 0.0
        %3137 = vmatprep.subr.mxu0 0.0
        %3138 = vmatpush1.msra.mxu0 0.0
        %3139 = vmatprep.subr.mxu0 0.0
        %3140 = vmatpush1.msra.mxu0 0.0
        %3141 = vmatprep.subr.mxu0 0.0
        %3142 = vmatpush1.msra.mxu0 0.0
        %3143 = vmatprep.subr.mxu0 0.0
        %3144 = vmatpush1.msra.mxu0 0.0
        %3145 = vmatprep.subr.mxu0 0.0
        %3146 = vmatpush1.msra.mxu0 0.0
        %3147 = vmatprep.subr.mxu0 0.0
        %3148 = vmatpush1.msra.mxu0 0.0
        %3149 = vmatprep.subr.mxu0 0.0
        %3150 = vmatpush1.msra.mxu0 0.0
        %3151 = vmatprep.subr.mxu0 0.0
        %3152 = vmatpush1.msra.mxu0 0.0
        %3153 = vmatprep.subr.mxu0 0.0
        %3154 = vmatpush1.msra.mxu0 0.0
        %3155 = vmatprep.subr.mxu0 0.0
        %3156 = vmatpush1.msra.mxu0 0.0
        %3157 = vmatprep.subr.mxu0 0.0
        %3158 = vmatpush1.msra.mxu0 0.0
        %3159 = vmatprep.subr.mxu0 0.0
        %3160 = vmatpush1.msra.mxu0 0.0
        %3161 = vmatprep.subr.mxu0 0.0
        %3162 = vmatpush1.msra.mxu0 0.0
        %3163 = vmatprep.subr.mxu0 0.0
        %3164 = vmatpush1.msra.mxu0 0.0
        %3165 = vmatprep.subr.mxu0 0.0
        %3166 = vmatpush1.msra.mxu0 0.0
        %3167 = vmatprep.subr.mxu0 0.0
        %3168 = vmatpush1.msra.mxu0 0.0
        %3169 = vmatprep.subr.mxu0 0.0
        %3170 = vmatpush1.msra.mxu0 0.0
        %3171 = vmatprep.subr.mxu0 0.0
        %3172 = vmatpush1.msra.mxu0 0.0
        %3173 = vmatprep.subr.mxu0 0.0
        %3174 = vmatpush1.msra.mxu0 0.0
        %3175 = vmatprep.subr.mxu0 0.0
        %3176 = vmatpush1.msra.mxu0 0.0
        %3177 = vmatprep.subr.mxu0 0.0
        %3178 = vmatpush1.msra.mxu0 0.0
        %3179 = vmatprep.subr.mxu0 0.0
        %3180 = vmatpush1.msra.mxu0 0.0
        %3181 = vmatprep.mubr.f32.mxu0 0.0
        %3182 = vmatmul.mubr.f32.gmra.mrb[0].mxu0 %v3115
        %v3183 = vpop.f32.mrb[0].mxu0
        %v3184 = vadd.f32 0.0, %v3183
        %v3185 = vpop.f32.mrb[0].mxu0
        %3186 = vdwg.mxu0
        %v3187 = vadd.f32 %v3110, %v3184
        %s3188 = scalar_lea.vmem %s4, 160
        %v3189 = vld [vmem:[%s3188] sm:$0xff]
        %v3190 = vld [vmem:[%s3188 + $0x8] sm:$0xff]
        %v3192 = vsel %vm2427, %v2417, 0
        %3194 = vmatprep.subr.mxu0 0.0
        %3195 = vmatpush1.msra.mxu0 %v3189
        %3196 = vmatprep.subr.mxu0 0.0
        %3197 = vmatpush1.msra.mxu0 %v3190
        %3198 = vmatprep.subr.mxu0 0.0
        %3199 = vmatpush1.msra.mxu0 0.0
        %3200 = vmatprep.subr.mxu0 0.0
        %3201 = vmatpush1.msra.mxu0 0.0
        %3202 = vmatprep.subr.mxu0 0.0
        %3203 = vmatpush1.msra.mxu0 0.0
        %3204 = vmatprep.subr.mxu0 0.0
        %3205 = vmatpush1.msra.mxu0 0.0
        %3206 = vmatprep.subr.mxu0 0.0
        %3207 = vmatpush1.msra.mxu0 0.0
        %3208 = vmatprep.subr.mxu0 0.0
        %3209 = vmatpush1.msra.mxu0 0.0
        %3210 = vmatprep.subr.mxu0 0.0
        %3211 = vmatpush1.msra.mxu0 0.0
        %3212 = vmatprep.subr.mxu0 0.0
        %3213 = vmatpush1.msra.mxu0 0.0
        %3214 = vmatprep.subr.mxu0 0.0
        %3215 = vmatpush1.msra.mxu0 0.0
        %3216 = vmatprep.subr.mxu0 0.0
        %3217 = vmatpush1.msra.mxu0 0.0
        %3218 = vmatprep.subr.mxu0 0.0
        %3219 = vmatpush1.msra.mxu0 0.0
        %3220 = vmatprep.subr.mxu0 0.0
        %3221 = vmatpush1.msra.mxu0 0.0
        %3222 = vmatprep.subr.mxu0 0.0
        %3223 = vmatpush1.msra.mxu0 0.0
        %3224 = vmatprep.subr.mxu0 0.0
        %3225 = vmatpush1.msra.mxu0 0.0
        %3226 = vmatprep.subr.mxu0 0.0
        %3227 = vmatpush1.msra.mxu0 0.0
        %3228 = vmatprep.subr.mxu0 0.0
        %3229 = vmatpush1.msra.mxu0 0.0
        %3230 = vmatprep.subr.mxu0 0.0
        %3231 = vmatpush1.msra.mxu0 0.0
        %3232 = vmatprep.subr.mxu0 0.0
        %3233 = vmatpush1.msra.mxu0 0.0
        %3234 = vmatprep.subr.mxu0 0.0
        %3235 = vmatpush1.msra.mxu0 0.0
        %3236 = vmatprep.subr.mxu0 0.0
        %3237 = vmatpush1.msra.mxu0 0.0
        %3238 = vmatprep.subr.mxu0 0.0
        %3239 = vmatpush1.msra.mxu0 0.0
        %3240 = vmatprep.subr.mxu0 0.0
        %3241 = vmatpush1.msra.mxu0 0.0
        %3242 = vmatprep.subr.mxu0 0.0
        %3243 = vmatpush1.msra.mxu0 0.0
        %3244 = vmatprep.subr.mxu0 0.0
        %3245 = vmatpush1.msra.mxu0 0.0
        %3246 = vmatprep.subr.mxu0 0.0
        %3247 = vmatpush1.msra.mxu0 0.0
        %3248 = vmatprep.subr.mxu0 0.0
        %3249 = vmatpush1.msra.mxu0 0.0
        %3250 = vmatprep.subr.mxu0 0.0
        %3251 = vmatpush1.msra.mxu0 0.0
        %3252 = vmatprep.subr.mxu0 0.0
        %3253 = vmatpush1.msra.mxu0 0.0
        %3254 = vmatprep.subr.mxu0 0.0
        %3255 = vmatpush1.msra.mxu0 0.0
        %3256 = vmatprep.subr.mxu0 0.0
        %3257 = vmatpush1.msra.mxu0 0.0
        %3258 = vmatprep.mubr.f32.mxu0 0.0
        %3259 = vmatmul.mubr.f32.gmra.mrb[0].mxu0 %v3192
        %v3260 = vpop.f32.mrb[0].mxu0
        %v3261 = vadd.f32 0.0, %v3260
        %v3262 = vpop.f32.mrb[0].mxu0
        %3263 = vdwg.mxu0
        %v3264 = vadd.f32 %v3187, %v3261
        %s3265 = scalar_lea.vmem %s4, 176
        %v3266 = vld [vmem:[%s3265] sm:$0xff]
        %v3267 = vld [vmem:[%s3265 + $0x8] sm:$0xff]
        %v3268 = vrot.slane %v2417, 4
        %v3269 = vsel %vm2427, %v3268, 0
        %3271 = vmatprep.subr.mxu0 0.0
        %3272 = vmatpush1.msra.mxu0 %v3266
        %3273 = vmatprep.subr.mxu0 0.0
        %3274 = vmatpush1.msra.mxu0 %v3267
        %3275 = vmatprep.subr.mxu0 0.0
        %3276 = vmatpush1.msra.mxu0 0.0
        %3277 = vmatprep.subr.mxu0 0.0
        %3278 = vmatpush1.msra.mxu0 0.0
        %3279 = vmatprep.subr.mxu0 0.0
        %3280 = vmatpush1.msra.mxu0 0.0
        %3281 = vmatprep.subr.mxu0 0.0
        %3282 = vmatpush1.msra.mxu0 0.0
        %3283 = vmatprep.subr.mxu0 0.0
        %3284 = vmatpush1.msra.mxu0 0.0
        %3285 = vmatprep.subr.mxu0 0.0
        %3286 = vmatpush1.msra.mxu0 0.0
        %3287 = vmatprep.subr.mxu0 0.0
        %3288 = vmatpush1.msra.mxu0 0.0
        %3289 = vmatprep.subr.mxu0 0.0
        %3290 = vmatpush1.msra.mxu0 0.0
        %3291 = vmatprep.subr.mxu0 0.0
        %3292 = vmatpush1.msra.mxu0 0.0
        %3293 = vmatprep.subr.mxu0 0.0
        %3294 = vmatpush1.msra.mxu0 0.0
        %3295 = vmatprep.subr.mxu0 0.0
        %3296 = vmatpush1.msra.mxu0 0.0
        %3297 = vmatprep.subr.mxu0 0.0
        %3298 = vmatpush1.msra.mxu0 0.0
        %3299 = vmatprep.subr.mxu0 0.0
        %3300 = vmatpush1.msra.mxu0 0.0
        %3301 = vmatprep.subr.mxu0 0.0
        %3302 = vmatpush1.msra.mxu0 0.0
        %3303 = vmatprep.subr.mxu0 0.0
        %3304 = vmatpush1.msra.mxu0 0.0
        %3305 = vmatprep.subr.mxu0 0.0
        %3306 = vmatpush1.msra.mxu0 0.0
        %3307 = vmatprep.subr.mxu0 0.0
        %3308 = vmatpush1.msra.mxu0 0.0
        %3309 = vmatprep.subr.mxu0 0.0
        %3310 = vmatpush1.msra.mxu0 0.0
        %3311 = vmatprep.subr.mxu0 0.0
        %3312 = vmatpush1.msra.mxu0 0.0
        %3313 = vmatprep.subr.mxu0 0.0
        %3314 = vmatpush1.msra.mxu0 0.0
        %3315 = vmatprep.subr.mxu0 0.0
        %3316 = vmatpush1.msra.mxu0 0.0
        %3317 = vmatprep.subr.mxu0 0.0
        %3318 = vmatpush1.msra.mxu0 0.0
        %3319 = vmatprep.subr.mxu0 0.0
        %3320 = vmatpush1.msra.mxu0 0.0
        %3321 = vmatprep.subr.mxu0 0.0
        %3322 = vmatpush1.msra.mxu0 0.0
        %3323 = vmatprep.subr.mxu0 0.0
        %3324 = vmatpush1.msra.mxu0 0.0
        %3325 = vmatprep.subr.mxu0 0.0
        %3326 = vmatpush1.msra.mxu0 0.0
        %3327 = vmatprep.subr.mxu0 0.0
        %3328 = vmatpush1.msra.mxu0 0.0
        %3329 = vmatprep.subr.mxu0 0.0
        %3330 = vmatpush1.msra.mxu0 0.0
        %3331 = vmatprep.subr.mxu0 0.0
        %3332 = vmatpush1.msra.mxu0 0.0
        %3333 = vmatprep.subr.mxu0 0.0
        %3334 = vmatpush1.msra.mxu0 0.0
        %3335 = vmatprep.mubr.f32.mxu0 0.0
        %3336 = vmatmul.mubr.f32.gmra.mrb[0].mxu0 %v3269
        %v3337 = vpop.f32.mrb[0].mxu0
        %v3338 = vadd.f32 0.0, %v3337
        %v3339 = vpop.f32.mrb[0].mxu0
        %3340 = vdwg.mxu0
        %v3341 = vadd.f32 %v3264, %v3338
        %s3342 = scalar_lea.vmem %s4, 192
        %v3343 = vld [vmem:[%s3342] sm:$0xff]
        %v3344 = vld [vmem:[%s3342 + $0x8] sm:$0xff]
        %v3346 = vsel %vm2427, %v2418, 0
        %3348 = vmatprep.subr.mxu0 0.0
        %3349 = vmatpush1.msra.mxu0 %v3343
        %3350 = vmatprep.subr.mxu0 0.0
        %3351 = vmatpush1.msra.mxu0 %v3344
        %3352 = vmatprep.subr.mxu0 0.0
        %3353 = vmatpush1.msra.mxu0 0.0
        %3354 = vmatprep.subr.mxu0 0.0
        %3355 = vmatpush1.msra.mxu0 0.0
        %3356 = vmatprep.subr.mxu0 0.0
        %3357 = vmatpush1.msra.mxu0 0.0
        %3358 = vmatprep.subr.mxu0 0.0
        %3359 = vmatpush1.msra.mxu0 0.0
        %3360 = vmatprep.subr.mxu0 0.0
        %3361 = vmatpush1.msra.mxu0 0.0
        %3362 = vmatprep.subr.mxu0 0.0
        %3363 = vmatpush1.msra.mxu0 0.0
        %3364 = vmatprep.subr.mxu0 0.0
        %3365 = vmatpush1.msra.mxu0 0.0
        %3366 = vmatprep.subr.mxu0 0.0
        %3367 = vmatpush1.msra.mxu0 0.0
        %3368 = vmatprep.subr.mxu0 0.0
        %3369 = vmatpush1.msra.mxu0 0.0
        %3370 = vmatprep.subr.mxu0 0.0
        %3371 = vmatpush1.msra.mxu0 0.0
        %3372 = vmatprep.subr.mxu0 0.0
        %3373 = vmatpush1.msra.mxu0 0.0
        %3374 = vmatprep.subr.mxu0 0.0
        %3375 = vmatpush1.msra.mxu0 0.0
        %3376 = vmatprep.subr.mxu0 0.0
        %3377 = vmatpush1.msra.mxu0 0.0
        %3378 = vmatprep.subr.mxu0 0.0
        %3379 = vmatpush1.msra.mxu0 0.0
        %3380 = vmatprep.subr.mxu0 0.0
        %3381 = vmatpush1.msra.mxu0 0.0
        %3382 = vmatprep.subr.mxu0 0.0
        %3383 = vmatpush1.msra.mxu0 0.0
        %3384 = vmatprep.subr.mxu0 0.0
        %3385 = vmatpush1.msra.mxu0 0.0
        %3386 = vmatprep.subr.mxu0 0.0
        %3387 = vmatpush1.msra.mxu0 0.0
        %3388 = vmatprep.subr.mxu0 0.0
        %3389 = vmatpush1.msra.mxu0 0.0
        %3390 = vmatprep.subr.mxu0 0.0
        %3391 = vmatpush1.msra.mxu0 0.0
        %3392 = vmatprep.subr.mxu0 0.0
        %3393 = vmatpush1.msra.mxu0 0.0
        %3394 = vmatprep.subr.mxu0 0.0
        %3395 = vmatpush1.msra.mxu0 0.0
        %3396 = vmatprep.subr.mxu0 0.0
        %3397 = vmatpush1.msra.mxu0 0.0
        %3398 = vmatprep.subr.mxu0 0.0
        %3399 = vmatpush1.msra.mxu0 0.0
        %3400 = vmatprep.subr.mxu0 0.0
        %3401 = vmatpush1.msra.mxu0 0.0
        %3402 = vmatprep.subr.mxu0 0.0
        %3403 = vmatpush1.msra.mxu0 0.0
        %3404 = vmatprep.subr.mxu0 0.0
        %3405 = vmatpush1.msra.mxu0 0.0
        %3406 = vmatprep.subr.mxu0 0.0
        %3407 = vmatpush1.msra.mxu0 0.0
        %3408 = vmatprep.subr.mxu0 0.0
        %3409 = vmatpush1.msra.mxu0 0.0
        %3410 = vmatprep.subr.mxu0 0.0
        %3411 = vmatpush1.msra.mxu0 0.0
        %3412 = vmatprep.mubr.f32.mxu0 0.0
        %3413 = vmatmul.mubr.f32.gmra.mrb[0].mxu0 %v3346
        %v3414 = vpop.f32.mrb[0].mxu0
        %v3415 = vadd.f32 0.0, %v3414
        %v3416 = vpop.f32.mrb[0].mxu0
        %3417 = vdwg.mxu0
        %v3418 = vadd.f32 %v3341, %v3415
        %s3419 = scalar_lea.vmem %s4, 208
        %v3420 = vld [vmem:[%s3419] sm:$0xff]
        %v3421 = vld [vmem:[%s3419 + $0x8] sm:$0xff]
        %v3422 = vrot.slane %v2418, 4
        %v3423 = vsel %vm2427, %v3422, 0
        %3425 = vmatprep.subr.mxu0 0.0
        %3426 = vmatpush1.msra.mxu0 %v3420
        %3427 = vmatprep.subr.mxu0 0.0
        %3428 = vmatpush1.msra.mxu0 %v3421
        %3429 = vmatprep.subr.mxu0 0.0
        %3430 = vmatpush1.msra.mxu0 0.0
        %3431 = vmatprep.subr.mxu0 0.0
        %3432 = vmatpush1.msra.mxu0 0.0
        %3433 = vmatprep.subr.mxu0 0.0
        %3434 = vmatpush1.msra.mxu0 0.0
        %3435 = vmatprep.subr.mxu0 0.0
        %3436 = vmatpush1.msra.mxu0 0.0
        %3437 = vmatprep.subr.mxu0 0.0
        %3438 = vmatpush1.msra.mxu0 0.0
        %3439 = vmatprep.subr.mxu0 0.0
        %3440 = vmatpush1.msra.mxu0 0.0
        %3441 = vmatprep.subr.mxu0 0.0
        %3442 = vmatpush1.msra.mxu0 0.0
        %3443 = vmatprep.subr.mxu0 0.0
        %3444 = vmatpush1.msra.mxu0 0.0
        %3445 = vmatprep.subr.mxu0 0.0
        %3446 = vmatpush1.msra.mxu0 0.0
        %3447 = vmatprep.subr.mxu0 0.0
        %3448 = vmatpush1.msra.mxu0 0.0
        %3449 = vmatprep.subr.mxu0 0.0
        %3450 = vmatpush1.msra.mxu0 0.0
        %3451 = vmatprep.subr.mxu0 0.0
        %3452 = vmatpush1.msra.mxu0 0.0
        %3453 = vmatprep.subr.mxu0 0.0
        %3454 = vmatpush1.msra.mxu0 0.0
        %3455 = vmatprep.subr.mxu0 0.0
        %3456 = vmatpush1.msra.mxu0 0.0
        %3457 = vmatprep.subr.mxu0 0.0
        %3458 = vmatpush1.msra.mxu0 0.0
        %3459 = vmatprep.subr.mxu0 0.0
        %3460 = vmatpush1.msra.mxu0 0.0
        %3461 = vmatprep.subr.mxu0 0.0
        %3462 = vmatpush1.msra.mxu0 0.0
        %3463 = vmatprep.subr.mxu0 0.0
        %3464 = vmatpush1.msra.mxu0 0.0
        %3465 = vmatprep.subr.mxu0 0.0
        %3466 = vmatpush1.msra.mxu0 0.0
        %3467 = vmatprep.subr.mxu0 0.0
        %3468 = vmatpush1.msra.mxu0 0.0
        %3469 = vmatprep.subr.mxu0 0.0
        %3470 = vmatpush1.msra.mxu0 0.0
        %3471 = vmatprep.subr.mxu0 0.0
        %3472 = vmatpush1.msra.mxu0 0.0
        %3473 = vmatprep.subr.mxu0 0.0
        %3474 = vmatpush1.msra.mxu0 0.0
        %3475 = vmatprep.subr.mxu0 0.0
        %3476 = vmatpush1.msra.mxu0 0.0
        %3477 = vmatprep.subr.mxu0 0.0
        %3478 = vmatpush1.msra.mxu0 0.0
        %3479 = vmatprep.subr.mxu0 0.0
        %3480 = vmatpush1.msra.mxu0 0.0
        %3481 = vmatprep.subr.mxu0 0.0
        %3482 = vmatpush1.msra.mxu0 0.0
        %3483 = vmatprep.subr.mxu0 0.0
        %3484 = vmatpush1.msra.mxu0 0.0
        %3485 = vmatprep.subr.mxu0 0.0
        %3486 = vmatpush1.msra.mxu0 0.0
        %3487 = vmatprep.subr.mxu0 0.0
        %3488 = vmatpush1.msra.mxu0 0.0
        %3489 = vmatprep.mubr.f32.mxu0 0.0
        %3490 = vmatmul.mubr.f32.gmra.mrb[0].mxu0 %v3423
        %v3491 = vpop.f32.mrb[0].mxu0
        %v3492 = vadd.f32 0.0, %v3491
        %v3493 = vpop.f32.mrb[0].mxu0
        %3494 = vdwg.mxu0
        %v3495 = vadd.f32 %v3418, %v3492
        %s3496 = scalar_lea.vmem %s4, 224
        %v3497 = vld [vmem:[%s3496] sm:$0xff]
        %v3498 = vld [vmem:[%s3496 + $0x8] sm:$0xff]
        %v3500 = vsel %vm2427, %v2419, 0
        %3502 = vmatprep.subr.mxu0 0.0
        %3503 = vmatpush1.msra.mxu0 %v3497
        %3504 = vmatprep.subr.mxu0 0.0
        %3505 = vmatpush1.msra.mxu0 %v3498
        %3506 = vmatprep.subr.mxu0 0.0
        %3507 = vmatpush1.msra.mxu0 0.0
        %3508 = vmatprep.subr.mxu0 0.0
        %3509 = vmatpush1.msra.mxu0 0.0
        %3510 = vmatprep.subr.mxu0 0.0
        %3511 = vmatpush1.msra.mxu0 0.0
        %3512 = vmatprep.subr.mxu0 0.0
        %3513 = vmatpush1.msra.mxu0 0.0
        %3514 = vmatprep.subr.mxu0 0.0
        %3515 = vmatpush1.msra.mxu0 0.0
        %3516 = vmatprep.subr.mxu0 0.0
        %3517 = vmatpush1.msra.mxu0 0.0
        %3518 = vmatprep.subr.mxu0 0.0
        %3519 = vmatpush1.msra.mxu0 0.0
        %3520 = vmatprep.subr.mxu0 0.0
        %3521 = vmatpush1.msra.mxu0 0.0
        %3522 = vmatprep.subr.mxu0 0.0
        %3523 = vmatpush1.msra.mxu0 0.0
        %3524 = vmatprep.subr.mxu0 0.0
        %3525 = vmatpush1.msra.mxu0 0.0
        %3526 = vmatprep.subr.mxu0 0.0
        %3527 = vmatpush1.msra.mxu0 0.0
        %3528 = vmatprep.subr.mxu0 0.0
        %3529 = vmatpush1.msra.mxu0 0.0
        %3530 = vmatprep.subr.mxu0 0.0
        %3531 = vmatpush1.msra.mxu0 0.0
        %3532 = vmatprep.subr.mxu0 0.0
        %3533 = vmatpush1.msra.mxu0 0.0
        %3534 = vmatprep.subr.mxu0 0.0
        %3535 = vmatpush1.msra.mxu0 0.0
        %3536 = vmatprep.subr.mxu0 0.0
        %3537 = vmatpush1.msra.mxu0 0.0
        %3538 = vmatprep.subr.mxu0 0.0
        %3539 = vmatpush1.msra.mxu0 0.0
        %3540 = vmatprep.subr.mxu0 0.0
        %3541 = vmatpush1.msra.mxu0 0.0
        %3542 = vmatprep.subr.mxu0 0.0
        %3543 = vmatpush1.msra.mxu0 0.0
        %3544 = vmatprep.subr.mxu0 0.0
        %3545 = vmatpush1.msra.mxu0 0.0
        %3546 = vmatprep.subr.mxu0 0.0
        %3547 = vmatpush1.msra.mxu0 0.0
        %3548 = vmatprep.subr.mxu0 0.0
        %3549 = vmatpush1.msra.mxu0 0.0
        %3550 = vmatprep.subr.mxu0 0.0
        %3551 = vmatpush1.msra.mxu0 0.0
        %3552 = vmatprep.subr.mxu0 0.0
        %3553 = vmatpush1.msra.mxu0 0.0
        %3554 = vmatprep.subr.mxu0 0.0
        %3555 = vmatpush1.msra.mxu0 0.0
        %3556 = vmatprep.subr.mxu0 0.0
        %3557 = vmatpush1.msra.mxu0 0.0
        %3558 = vmatprep.subr.mxu0 0.0
        %3559 = vmatpush1.msra.mxu0 0.0
        %3560 = vmatprep.subr.mxu0 0.0
        %3561 = vmatpush1.msra.mxu0 0.0
        %3562 = vmatprep.subr.mxu0 0.0
        %3563 = vmatpush1.msra.mxu0 0.0
        %3564 = vmatprep.subr.mxu0 0.0
        %3565 = vmatpush1.msra.mxu0 0.0
        %3566 = vmatprep.mubr.f32.mxu0 0.0
        %3567 = vmatmul.mubr.f32.gmra.mrb[0].mxu0 %v3500
        %v3568 = vpop.f32.mrb[0].mxu0
        %v3569 = vadd.f32 0.0, %v3568
        %v3570 = vpop.f32.mrb[0].mxu0
        %3571 = vdwg.mxu0
        %v3572 = vadd.f32 %v3495, %v3569
        %s3573 = scalar_lea.vmem %s4, 240
        %v3574 = vld [vmem:[%s3573] sm:$0xff]
        %v3575 = vld [vmem:[%s3573 + $0x8] sm:$0xff]
        %v3576 = vrot.slane %v2419, 4
        %v3577 = vsel %vm2427, %v3576, 0
        %3579 = vmatprep.subr.mxu0 0.0
        %3580 = vmatpush1.msra.mxu0 %v3574
        %3581 = vmatprep.subr.mxu0 0.0
        %3582 = vmatpush1.msra.mxu0 %v3575
        %3583 = vmatprep.subr.mxu0 0.0
        %3584 = vmatpush1.msra.mxu0 0.0
        %3585 = vmatprep.subr.mxu0 0.0
        %3586 = vmatpush1.msra.mxu0 0.0
        %3587 = vmatprep.subr.mxu0 0.0
        %3588 = vmatpush1.msra.mxu0 0.0
        %3589 = vmatprep.subr.mxu0 0.0
        %3590 = vmatpush1.msra.mxu0 0.0
        %3591 = vmatprep.subr.mxu0 0.0
        %3592 = vmatpush1.msra.mxu0 0.0
        %3593 = vmatprep.subr.mxu0 0.0
        %3594 = vmatpush1.msra.mxu0 0.0
        %3595 = vmatprep.subr.mxu0 0.0
        %3596 = vmatpush1.msra.mxu0 0.0
        %3597 = vmatprep.subr.mxu0 0.0
        %3598 = vmatpush1.msra.mxu0 0.0
        %3599 = vmatprep.subr.mxu0 0.0
        %3600 = vmatpush1.msra.mxu0 0.0
        %3601 = vmatprep.subr.mxu0 0.0
        %3602 = vmatpush1.msra.mxu0 0.0
        %3603 = vmatprep.subr.mxu0 0.0
        %3604 = vmatpush1.msra.mxu0 0.0
        %3605 = vmatprep.subr.mxu0 0.0
        %3606 = vmatpush1.msra.mxu0 0.0
        %3607 = vmatprep.subr.mxu0 0.0
        %3608 = vmatpush1.msra.mxu0 0.0
        %3609 = vmatprep.subr.mxu0 0.0
        %3610 = vmatpush1.msra.mxu0 0.0
        %3611 = vmatprep.subr.mxu0 0.0
        %3612 = vmatpush1.msra.mxu0 0.0
        %3613 = vmatprep.subr.mxu0 0.0
        %3614 = vmatpush1.msra.mxu0 0.0
        %3615 = vmatprep.subr.mxu0 0.0
        %3616 = vmatpush1.msra.mxu0 0.0
        %3617 = vmatprep.subr.mxu0 0.0
        %3618 = vmatpush1.msra.mxu0 0.0
        %3619 = vmatprep.subr.mxu0 0.0
        %3620 = vmatpush1.msra.mxu0 0.0
        %3621 = vmatprep.subr.mxu0 0.0
        %3622 = vmatpush1.msra.mxu0 0.0
        %3623 = vmatprep.subr.mxu0 0.0
        %3624 = vmatpush1.msra.mxu0 0.0
        %3625 = vmatprep.subr.mxu0 0.0
        %3626 = vmatpush1.msra.mxu0 0.0
        %3627 = vmatprep.subr.mxu0 0.0
        %3628 = vmatpush1.msra.mxu0 0.0
        %3629 = vmatprep.subr.mxu0 0.0
        %3630 = vmatpush1.msra.mxu0 0.0
        %3631 = vmatprep.subr.mxu0 0.0
        %3632 = vmatpush1.msra.mxu0 0.0
        %3633 = vmatprep.subr.mxu0 0.0
        %3634 = vmatpush1.msra.mxu0 0.0
        %3635 = vmatprep.subr.mxu0 0.0
        %3636 = vmatpush1.msra.mxu0 0.0
        %3637 = vmatprep.subr.mxu0 0.0
        %3638 = vmatpush1.msra.mxu0 0.0
        %3639 = vmatprep.subr.mxu0 0.0
        %3640 = vmatpush1.msra.mxu0 0.0
        %3641 = vmatprep.subr.mxu0 0.0
        %3642 = vmatpush1.msra.mxu0 0.0
        %3643 = vmatprep.mubr.f32.mxu0 0.0
        %3644 = vmatmul.mubr.f32.gmra.mrb[0].mxu0 %v3577
        %v3645 = vpop.f32.mrb[0].mxu0
        %v3646 = vadd.f32 0.0, %v3645
        %v3647 = vpop.f32.mrb[0].mxu0
        %3648 = vdwg.mxu0
        %v3649 = vadd.f32 %v3572, %v3646
        %v3650 = vld [vmem:[%s5] sm:$0x1]
        %v3652 = vlaneseq
        %v3653 = vshrl.u32 %v3652, 7
        %v3654 = vsub.s32 0, %v3653
        %v3655 = vrot.slane %v3650, %v3654
        %v3657 = vadd.f32 %v3649, %v3655
        %v3659 = vrot.slane %v3657, 1
        %v3661 = vmax.f32 %v3657, %v3659
        %v3663 = vrot.slane %v3661, 2
        %v3665 = vmax.f32 %v3661, %v3663
        %v3666 = vld [vmem:[%s6] sm:$0xff]
        %v3667 = vld [vmem:[%s6 + $0x8] sm:$0xff]
        %v3668 = vld [vmem:[%s6 + $0x10] sm:$0xff]
        %v3669 = vld [vmem:[%s6 + $0x18] sm:$0xff]
        %v3670 = vld [vmem:[%s6 + $0x20] sm:$0xff]
        %v3671 = vld [vmem:[%s6 + $0x28] sm:$0xff]
        %v3672 = vld [vmem:[%s6 + $0x30] sm:$0xff]
        %v3673 = vld [vmem:[%s6 + $0x38] sm:$0xff]
        %v3674 = vld [vmem:[%s7] sm:$0x3]
        %v3676 = vlaneseq
        %v3677 = vshrl.u32 %v3676, 7
        %v3678 = vsub.s32 0, %v3677
        %v3679 = vrot.slane %v3674, %v3678
        %v3680 = vlaneseq
        %v3681 = vshrl.u32 %v3680, 7
        %v3682 = vsub.s32 1, %v3681
        %v3683 = vrot.slane %v3674, %v3682
        %vm3686 = vcmask 261120
        %v3688 = vsel %vm3686, %v3665, 0
        %3690 = vmatprep.subr.mxu0 %v3667
        %3691 = vmatpush1.msra.mxu0 %v3666
        %3692 = vmatprep.subr.mxu0 %v3669
        %3693 = vmatpush1.msra.mxu0 %v3668
        %3694 = vmatprep.subr.mxu0 %v3671
        %3695 = vmatpush1.msra.mxu0 %v3670
        %3696 = vmatprep.subr.mxu0 %v3673
        %3697 = vmatpush1.msra.mxu0 %v3672
        %3698 = vmatprep.subr.mxu0 0.0
        %3699 = vmatpush1.msra.mxu0 0.0
        %3700 = vmatprep.subr.mxu0 0.0
        %3701 = vmatpush1.msra.mxu0 0.0
        %3702 = vmatprep.subr.mxu0 0.0
        %3703 = vmatpush1.msra.mxu0 0.0
        %3704 = vmatprep.subr.mxu0 0.0
        %3705 = vmatpush1.msra.mxu0 0.0
        %3706 = vmatprep.subr.mxu0 0.0
        %3707 = vmatpush1.msra.mxu0 0.0
        %3708 = vmatprep.subr.mxu0 0.0
        %3709 = vmatpush1.msra.mxu0 0.0
        %3710 = vmatprep.subr.mxu0 0.0
        %3711 = vmatpush1.msra.mxu0 0.0
        %3712 = vmatprep.subr.mxu0 0.0
        %3713 = vmatpush1.msra.mxu0 0.0
        %3714 = vmatprep.subr.mxu0 0.0
        %3715 = vmatpush1.msra.mxu0 0.0
        %3716 = vmatprep.subr.mxu0 0.0
        %3717 = vmatpush1.msra.mxu0 0.0
        %3718 = vmatprep.subr.mxu0 0.0
        %3719 = vmatpush1.msra.mxu0 0.0
        %3720 = vmatprep.subr.mxu0 0.0
        %3721 = vmatpush1.msra.mxu0 0.0
        %3722 = vmatprep.subr.mxu0 0.0
        %3723 = vmatpush1.msra.mxu0 0.0
        %3724 = vmatprep.subr.mxu0 0.0
        %3725 = vmatpush1.msra.mxu0 0.0
        %3726 = vmatprep.subr.mxu0 0.0
        %3727 = vmatpush1.msra.mxu0 0.0
        %3728 = vmatprep.subr.mxu0 0.0
        %3729 = vmatpush1.msra.mxu0 0.0
        %3730 = vmatprep.subr.mxu0 0.0
        %3731 = vmatpush1.msra.mxu0 0.0
        %3732 = vmatprep.subr.mxu0 0.0
        %3733 = vmatpush1.msra.mxu0 0.0
        %3734 = vmatprep.subr.mxu0 0.0
        %3735 = vmatpush1.msra.mxu0 0.0
        %3736 = vmatprep.subr.mxu0 0.0
        %3737 = vmatpush1.msra.mxu0 0.0
        %3738 = vmatprep.subr.mxu0 0.0
        %3739 = vmatpush1.msra.mxu0 0.0
        %3740 = vmatprep.subr.mxu0 0.0
        %3741 = vmatpush1.msra.mxu0 0.0
        %3742 = vmatprep.subr.mxu0 0.0
        %3743 = vmatpush1.msra.mxu0 0.0
        %3744 = vmatprep.subr.mxu0 0.0
        %3745 = vmatpush1.msra.mxu0 0.0
        %3746 = vmatprep.subr.mxu0 0.0
        %3747 = vmatpush1.msra.mxu0 0.0
        %3748 = vmatprep.subr.mxu0 0.0
        %3749 = vmatpush1.msra.mxu0 0.0
        %3750 = vmatprep.subr.mxu0 0.0
        %3751 = vmatpush1.msra.mxu0 0.0
        %3752 = vmatprep.subr.mxu0 0.0
        %3753 = vmatpush1.msra.mxu0 0.0
        %3754 = vmatprep.mubr.f32.mxu0 0.0
        %3755 = vmatmul.mubr.f32.gmra.mrb[0].mxu0 %v3688
        %v3756 = vpop.f32.mrb[0].mxu0
        %v3757 = vadd.f32 %v3679, %v3756
        %v3758 = vpop.f32.mrb[0].mxu0
        %v3759 = vadd.f32 %v3683, %v3758
        %3760 = vdwg.mxu0
        %v3761 = vmax.f32 %v3757, 0.0
        %v3762 = vmax.f32 %v3759, 0.0
        %v3763 = vld [vmem:[%s8] sm:$0xff]
        %v3764 = vld [vmem:[%s8 + $0x8] sm:$0xff]
        %v3765 = vld [vmem:[%s8 + $0x10] sm:$0xff]
        %v3766 = vld [vmem:[%s8 + $0x18] sm:$0xff]
        %v3767 = vld [vmem:[%s8 + $0x20] sm:$0xff]
        %v3768 = vld [vmem:[%s8 + $0x28] sm:$0xff]
        %v3769 = vld [vmem:[%s8 + $0x30] sm:$0xff]
        %v3770 = vld [vmem:[%s8 + $0x38] sm:$0xff]
        %v3771 = vld [vmem:[%s8 + $0x40] sm:$0xff]
        %v3772 = vld [vmem:[%s8 + $0x48] sm:$0xff]
        %v3773 = vld [vmem:[%s8 + $0x50] sm:$0xff]
        %v3774 = vld [vmem:[%s8 + $0x58] sm:$0xff]
        %v3775 = vld [vmem:[%s8 + $0x60] sm:$0xff]
        %v3776 = vld [vmem:[%s8 + $0x68] sm:$0xff]
        %v3777 = vld [vmem:[%s8 + $0x70] sm:$0xff]
        %v3778 = vld [vmem:[%s8 + $0x78] sm:$0xff]
        %v3779 = vld [vmem:[%s8 + $0x80] sm:$0xff]
        %v3780 = vld [vmem:[%s8 + $0x88] sm:$0xff]
        %v3781 = vld [vmem:[%s8 + $0x90] sm:$0xff]
        %v3782 = vld [vmem:[%s8 + $0x98] sm:$0xff]
        %v3783 = vld [vmem:[%s8 + $0xa0] sm:$0xff]
        %v3784 = vld [vmem:[%s8 + $0xa8] sm:$0xff]
        %v3785 = vld [vmem:[%s8 + $0xb0] sm:$0xff]
        %v3786 = vld [vmem:[%s8 + $0xb8] sm:$0xff]
        %v3787 = vld [vmem:[%s8 + $0xc0] sm:$0xff]
        %v3788 = vld [vmem:[%s8 + $0xc8] sm:$0xff]
        %v3789 = vld [vmem:[%s8 + $0xd0] sm:$0xff]
        %v3790 = vld [vmem:[%s8 + $0xd8] sm:$0xff]
        %v3791 = vld [vmem:[%s8 + $0xe0] sm:$0xff]
        %v3792 = vld [vmem:[%s8 + $0xe8] sm:$0xff]
        %v3793 = vld [vmem:[%s8 + $0xf0] sm:$0xff]
        %v3794 = vld [vmem:[%s8 + $0xf8] sm:$0xff]
        %v3795 = vld [vmem:[%s9] sm:$0x1]
        %3796 = vmatprep.subr.mxu0 0.0
        %3797 = vmatpush1.msra.mxu0 %v3763
        %3798 = vmatprep.subr.mxu0 0.0
        %3799 = vmatpush1.msra.mxu0 %v3764
        %3800 = vmatprep.subr.mxu0 0.0
        %3801 = vmatpush1.msra.mxu0 %v3765
        %3802 = vmatprep.subr.mxu0 0.0
        %3803 = vmatpush1.msra.mxu0 %v3766
        %3804 = vmatprep.subr.mxu0 0.0
        %3805 = vmatpush1.msra.mxu0 %v3767
        %3806 = vmatprep.subr.mxu0 0.0
        %3807 = vmatpush1.msra.mxu0 %v3768
        %3808 = vmatprep.subr.mxu0 0.0
        %3809 = vmatpush1.msra.mxu0 %v3769
        %3810 = vmatprep.subr.mxu0 0.0
        %3811 = vmatpush1.msra.mxu0 %v3770
        %3812 = vmatprep.subr.mxu0 0.0
        %3813 = vmatpush1.msra.mxu0 %v3771
        %3814 = vmatprep.subr.mxu0 0.0
        %3815 = vmatpush1.msra.mxu0 %v3772
        %3816 = vmatprep.subr.mxu0 0.0
        %3817 = vmatpush1.msra.mxu0 %v3773
        %3818 = vmatprep.subr.mxu0 0.0
        %3819 = vmatpush1.msra.mxu0 %v3774
        %3820 = vmatprep.subr.mxu0 0.0
        %3821 = vmatpush1.msra.mxu0 %v3775
        %3822 = vmatprep.subr.mxu0 0.0
        %3823 = vmatpush1.msra.mxu0 %v3776
        %3824 = vmatprep.subr.mxu0 0.0
        %3825 = vmatpush1.msra.mxu0 %v3777
        %3826 = vmatprep.subr.mxu0 0.0
        %3827 = vmatpush1.msra.mxu0 %v3778
        %3828 = vmatprep.subr.mxu0 0.0
        %3829 = vmatpush1.msra.mxu0 %v3779
        %3830 = vmatprep.subr.mxu0 0.0
        %3831 = vmatpush1.msra.mxu0 %v3780
        %3832 = vmatprep.subr.mxu0 0.0
        %3833 = vmatpush1.msra.mxu0 %v3781
        %3834 = vmatprep.subr.mxu0 0.0
        %3835 = vmatpush1.msra.mxu0 %v3782
        %3836 = vmatprep.subr.mxu0 0.0
        %3837 = vmatpush1.msra.mxu0 %v3783
        %3838 = vmatprep.subr.mxu0 0.0
        %3839 = vmatpush1.msra.mxu0 %v3784
        %3840 = vmatprep.subr.mxu0 0.0
        %3841 = vmatpush1.msra.mxu0 %v3785
        %3842 = vmatprep.subr.mxu0 0.0
        %3843 = vmatpush1.msra.mxu0 %v3786
        %3844 = vmatprep.subr.mxu0 0.0
        %3845 = vmatpush1.msra.mxu0 %v3787
        %3846 = vmatprep.subr.mxu0 0.0
        %3847 = vmatpush1.msra.mxu0 %v3788
        %3848 = vmatprep.subr.mxu0 0.0
        %3849 = vmatpush1.msra.mxu0 %v3789
        %3850 = vmatprep.subr.mxu0 0.0
        %3851 = vmatpush1.msra.mxu0 %v3790
        %3852 = vmatprep.subr.mxu0 0.0
        %3853 = vmatpush1.msra.mxu0 %v3791
        %3854 = vmatprep.subr.mxu0 0.0
        %3855 = vmatpush1.msra.mxu0 %v3792
        %3856 = vmatprep.subr.mxu0 0.0
        %3857 = vmatpush1.msra.mxu0 %v3793
        %3858 = vmatprep.subr.mxu0 0.0
        %3859 = vmatpush1.msra.mxu0 %v3794
        %3860 = vmatprep.mubr.f32.mxu0 %v3762
        %3861 = vmatmul.mubr.f32.gmra.mrb[0].mxu0 %v3761
        %v3862 = vpop.f32.mrb[0].mxu0
        %v3863 = vadd.f32 %v3795, %v3862
        %v3864 = vpop.f32.mrb[0].mxu0
        %3865 = vdwg.mxu0
        %vm3866 = vcmask 40960
        %v3867 = vsel %vm3866, %v3863, 0.0
        %3868 = vadd.xlane.f32.xlu0 %v3867
        %v3869 = vpop.xlane.xlu0 %3868
        %v3870 = vmul.f32 %v3869, 0.16666667
        %3872 = vset.pattern.permute.xlu0 6
        %3873 = vperm.xlu0 %3872, %v3863
        %v3874 = vpop.permute.xlu0 %3873
        %v3876 = vadd.f32 %v3874, %v3863
        %v3877 = vsub.f32 %v3876, %v3870
        %3878 = vst.msk [vmem:[%s351] sm:$0x1] %vm3866, %v3877
        %s3879 = sand.u32 %s247, 1
        %s3880 = scalar_lea.sflag [#allocation3], %s3879
        %s3881 = sand.u32 %s247, 1
        %s3882 = scalar_lea.vmem [#allocation2], %s3881
        // Predicated region
        $region61: #{dueling_net_forward.1} parent=59 // pred_check
          %p3883 = pneg %p257
        $region62: #{dueling_net_forward.1} parent=59 // pred_check_branch
          %3885 = sbr.rel (%p3883) target = $region64
        $region63: #{dueling_net_forward.1} parent=59 // pred_region
          %s3887 = ssub.s32 16, 16
          %3888 = vsyncadd %s3880, %s3887
          %s3889 = smul.addr %s24, 16
          %s3890 = scalar_lea.hbm %s10, %s3889
          %s3892 = sshll.u32 %s3882, 4
          %s3893 = int_to_ptr.vmem [resolvable:$true] %s3892
          %3895 = dma.vmem_to_hbm [thread:$0]  %s3893, 16, %s3890, %s3880
        $region64: #{dueling_net_forward.1} parent=59 // pred_fallthru
          _
      $region60: #{dueling_net_forward.1} parent=5 // pred_fallthru
        _
      %p3896 = scmp.le.s32.totalorder 2, %s19
      // Predicated region
      $region65: #{dueling_net_forward.1} parent=5 // pred_check
        %p3897 = pneg %p3896
      $region66: #{dueling_net_forward.1} parent=5 // pred_check_branch
        %3899 = sbr.rel (%p3897) target = $region68
      $region67: #{dueling_net_forward.1} parent=5 // pred_region
        %s3900 = ssub.s32 %s19, 2
        // Predicated region
        $region69: #{dueling_net_forward.1} parent=67 // pred_check
          %p3901 = pneg %p263
        $region70: #{dueling_net_forward.1} parent=67 // pred_check_branch
          %3903 = sbr.rel (%p3901) target = $region72
        $region71: #{dueling_net_forward.1} parent=67 // pred_region
          %s3904 = sand.u32 %s248, 1
          %s3905 = scalar_lea.sflag [#allocation3], %s3904
          %s3906 = sand.u32 %s248, 1
          %s3907 = scalar_lea.vmem [#allocation2], %s3906
          %3908 = dma.done %s3905, 16
        $region72: #{dueling_net_forward.1} parent=67 // pred_fallthru
          _
      $region68: #{dueling_net_forward.1} parent=5 // pred_fallthru
        _
    $region6: #{dueling_net_forward.1} parent=1 // loop_footer
      %s23 = sadd.s32 1, %s19
    $region7: #{dueling_net_forward.1} parent=1 // loop_footer_branch
      %18 = sbr.rel target = $region3
    $region8: #{dueling_net_forward.1} parent=1 // loop_exit
      _
    %3909 = vsyncpa [#allocation3], 1
    %s3910 = scalar_lea.sflag [#allocation3], 1
    %3911 = vsyncpa %s3910, 1

</llo_original>
